<compile_context>
chip_gen: v7x
topology: tpu7x:2x2x1
jax: 0.10.0
libtpu: 0.0.40
codegen_flags: <defaults>
</compile_context>

<pallas_src>
import jax
import jax.numpy as jnp
from jax.experimental import pallas as pl
from jax.experimental.pallas import tpu as pltpu


N_OUT = 3     # twoc = 0  ->  fc: 512 -> 3
CHI = 128     # module default


# ----------------------------------------------------------------------------
# Fused Pallas kernel:
#   conv1(3x3,p=1)+lrelu+BN1+pool -> conv2(2x2,p=1)+lrelu+BN2+pool
#   -> conv3(2x2,p=1)+lrelu+BN3+pool -> fc (lane-padded to 128 cols)
# ----------------------------------------------------------------------------
def _fused_forward_kernel(p1_ref, w1_ref, b1_ref, g1_ref, be1_ref,
                          w2_ref, b2_ref, g2_ref, be2_ref,
                          w3_ref, b3_ref, g3_ref, be3_ref,
                          wf_ref, bf_ref, o_ref):
    B = o_ref.shape[0]
    EPS = 1e-5
    SLOPE = 0.01  # F.leaky_relu default
    f32 = jnp.float32
    bf16 = jnp.bfloat16

    def leaky(y):
        return jnp.where(y > 0, y, SLOPE * y)

    def bn_scale_shift(y, count, gamma, beta):
        # training-mode BatchNorm2d: biased variance over all (b, h, w) elements
        s = jnp.sum(y, axis=0, keepdims=True)
        ss = jnp.sum(y * y, axis=0, keepdims=True)
        mean = s / count
        var = jnp.maximum(ss / count - mean * mean, 0.0)
        scale = gamma * jax.lax.rsqrt(var + EPS)
        shift = beta - mean * scale
        return scale, shift

    def pad_grid(slab, n, c):
        # slab: (n*n*B, c), rows in (h, w, b) order  ->  padded (n+2)x(n+2) grid slab
        zb = jnp.zeros(((n + 2) * B, c), f32)   # full zero row (top / bottom)
        zg = jnp.zeros((2 * B, c), f32)         # right pad of row h + left pad of row h+1
        zs = jnp.zeros((B, c), f32)             # single pad cell
        pieces = [zb, zs]
        for h in range(n):
            pieces.append(slab[h * n * B:(h + 1) * n * B])
            pieces.append(zg if h < n - 1 else zs)
        pieces.append(zb)
        return jnp.concatenate(pieces, axis=0)  # ((n+2)*(n+2)*B, c)

    def im2col_2x2(padded, h_out, w_out, w_pad):
        # padded: padded grid slab, rows (h, w, b).  Output rows ordered (ho, wo, b);
        # tap (i, j) of output (ho, wo) reads padded cell (ho+i, wo+j).
        taps = []
        for i in range(2):
            for j in range(2):
                rows = [padded[((ho + i) * w_pad + j) * B:
                               ((ho + i) * w_pad + j) * B + w_out * B]
                        for ho in range(h_out)]
                taps.append(jnp.concatenate(rows, axis=0) if len(rows) > 1 else rows[0])
        return jnp.concatenate(taps, axis=1)    # (h_out*w_out*B, 4*c)

    def maxpool2x2(y, h_in, w_in):
        # y: (h_in*w_in*B, c), rows (h, w, b); MaxPool2d(2,2) floor mode.
        h_out, w_out = h_in // 2, w_in // 2
        tiles = []
        for ph in range(h_out):
            for pw in range(w_out):
                t = None
                for dh in range(2):
                    for dw in range(2):
                        r = ((2 * ph + dh) * w_in + (2 * pw + dw)) * B
                        blk = y[r:r + B]
                        t = blk if t is None else jnp.maximum(t, blk)
                tiles.append(t)
        return jnp.concatenate(tiles, axis=0) if len(tiles) > 1 else tiles[0]

    # ---------------- conv1 (3x3, pad=1) + leaky_relu + BN1 --------------------
    # p1 rows ordered (dh, dw, ph, pw, b); covers all B*8*8 output positions once.
    y1 = leaky(jnp.dot(p1_ref[...], w1_ref[...],
                       preferred_element_type=f32) + b1_ref[...])      # (64B, 128)
    sc1, sh1 = bn_scale_shift(y1, float(64 * B), g1_ref[...], be1_ref[...])
    y1 = y1 * sc1 + sh1

    # pool1: max over the 4 (dh, dw) groups -> (16B, 128) slab, 4x4 grid, (h, w, b)
    g = 16 * B
    pool1 = jnp.maximum(jnp.maximum(y1[0:g], y1[g:2 * g]),
                        jnp.maximum(y1[2 * g:3 * g], y1[3 * g:4 * g]))

    # ---------------- conv2 (2x2, pad=1) + leaky_relu + BN2 --------------------
    c1 = pool1.shape[1]                                  # 128
    P1 = pad_grid(pool1, 4, c1)                          # (36B, 128)
    im2 = im2col_2x2(P1, 5, 5, 6)                        # (25B, 512)
    y2 = leaky(jnp.dot(im2.astype(bf16), w2_ref[...],
                       preferred_element_type=f32) + b2_ref[...])      # (25B, 256)
    sc2, sh2 = bn_scale_shift(y2, float(25 * B), g2_ref[...], be2_ref[...])
    y2 = y2 * sc2 + sh2

    # pool2: 5x5 -> 2x2 (floor mode drops row/col 4)
    pool2 = maxpool2x2(y2, 5, 5)                         # (4B, 256)

    # ---------------- conv3 (2x2, pad=1) + leaky_relu + BN3 --------------------
    c2 = pool2.shape[1]                                  # 256
    P2 = pad_grid(pool2, 2, c2)                          # (16B, 256)
    im3 = im2col_2x2(P2, 3, 3, 4)                        # (9B, 1024)
    y3 = leaky(jnp.dot(im3.astype(bf16), w3_ref[...],
                       preferred_element_type=f32) + b3_ref[...])      # (9B, 512)
    sc3, sh3 = bn_scale_shift(y3, float(9 * B), g3_ref[...], be3_ref[...])
    y3 = y3 * sc3 + sh3

    # pool3: 3x3 -> 1x1 (floor mode drops row/col 2)  ->  flattened features
    feat = maxpool2x2(y3, 3, 3)                          # (B, 512)

    # ---------------- fc (512 -> 3), lane-dense padded output ------------------
    o_ref[...] = (jnp.dot(feat.astype(bf16), wf_ref[...],
                          preferred_element_type=f32) + bf_ref[...])   # (B, 128)


# ----------------------------------------------------------------------------
# Wrapper-side prep (conv1 im2col on raw input, one-time weight re-layout)
# ----------------------------------------------------------------------------
def _conv1_patches(x):
    """x: (B, 1, 8, 8) NCHW -> (B*64, 9) im2col, rows ordered (dh, dw, ph, pw, b)."""
    B = x.shape[0]
    xp = jnp.pad(x[:, 0], ((0, 0), (1, 1), (1, 1)))             # (B, 10, 10)
    cols = [xp[:, i:i + 8, j:j + 8] for i in range(3) for j in range(3)]
    p = jnp.stack(cols, axis=-1)                                 # (B, 8, 8, 9), tap = i*3+j
    p = p.reshape(B, 4, 2, 4, 2, 9)                              # (b, ph, dh, pw, dw, t)
    p = jnp.transpose(p, (2, 4, 1, 3, 0, 5))                     # (dh, dw, ph, pw, b, t)
    return p.reshape(B * 64, 9)


def prepare_params(params):
    """One-time conversion of PyTorch-layout params into kernel-ready matrices."""
    def conv_mat(w, dtype):  # (Cout, Cin, kh, kw) -> (kh*kw*Cin, Cout), tap-major rows
        co, ci, kh, kw = w.shape
        return jnp.transpose(w, (2, 3, 1, 0)).reshape(kh * kw * ci, co).astype(dtype)

    def row(v):
        return v.reshape(1, -1).astype(jnp.float32)

    # fc weight: lane-padded to 128 output columns (lane-dense store), stored bf16.
    wf = jnp.zeros((params["fc0_w"].shape[1], 128), jnp.float32)
    wf = wf.at[:, :N_OUT].set(params["fc0_w"].T)
    bf = jnp.zeros((1, 128), jnp.float32).at[0, :N_OUT].set(params["fc0_b"])

    return {
        "w1": conv_mat(params["conv1_w"], jnp.float32),          # tiny, keep f32
        "b1": row(params["conv1_b"]),
        "g1": row(params["conv1_bn_g"]), "be1": row(params["conv1_bn_b"]),
        "w2": conv_mat(params["conv2_w"], jnp.bfloat16),         # 512x256 bf16
        "b2": row(params["conv2_b"]),
        "g2": row(params["conv2_bn_g"]), "be2": row(params["conv2_bn_b"]),
        "w3": conv_mat(params["conv3_w"], jnp.bfloat16),         # 1024x512 bf16
        "b3": row(params["conv3_b"]),
        "g3": row(params["conv3_bn_g"]), "be3": row(params["conv3_bn_b"]),
        "wf": wf.astype(jnp.bfloat16), "bf": bf,
    }


def cnn_basic_forward(x, pp):
    """x: (B, 1, 8, 8) float32 NCHW -> (B, 3) logits (single fused Pallas kernel)."""
    B = x.shape[0]
    patches = _conv1_patches(x)

    args = [patches,
            pp["w1"], pp["b1"], pp["g1"], pp["be1"],
            pp["w2"], pp["b2"], pp["g2"], pp["be2"],
            pp["w3"], pp["b3"], pp["g3"], pp["be3"],
            pp["wf"], pp["bf"]]

    vmem = pl.BlockSpec(memory_space=pltpu.MemorySpace.VMEM)   # whole array, resident

    out_pad = pl.pallas_call(
        _fused_forward_kernel,
        out_shape=jax.ShapeDtypeStruct((B, 128), jnp.float32),
        in_specs=[vmem] * len(args),
        out_specs=vmem,
    )(*args)
    return out_pad[:, :N_OUT]


# ----------------------------------------------------------------------------
# Parameter init (PyTorch layouts) and driver
# ----------------------------------------------------------------------------
def init_params(key, chi=CHI):
    ks = jax.random.split(key, 12)
    scale = 0.1
    return {
        "conv1_w": scale * jax.random.normal(ks[0], (chi, 1, 3, 3), jnp.float32),
        "conv1_b": scale * jax.random.normal(ks[1], (chi,), jnp.float32),
        "conv1_bn_g": 1.0 + 0.01 * jax.random.normal(ks[2], (chi,), jnp.float32),
        "conv1_bn_b": 0.01 * jax.random.normal(ks[3], (chi,), jnp.float32),
        "conv2_w": scale * jax.random.normal(ks[4], (2 * chi, chi, 2, 2), jnp.float32),
        "conv2_b": scale * jax.random.normal(ks[5], (2 * chi,), jnp.float32),
        "conv2_bn_g": 1.0 + 0.01 * jax.random.normal(ks[6], (2 * chi,), jnp.float32),
        "conv2_bn_b": 0.01 * jax.random.normal(ks[7], (2 * chi,), jnp.float32),
        "conv3_w": scale * jax.random.normal(ks[8], (4 * chi, 2 * chi, 2, 2), jnp.float32),
        "conv3_b": scale * jax.random.normal(ks[9], (4 * chi,), jnp.float32),
        "conv3_bn_g": 1.0 + 0.01 * jax.random.normal(ks[10], (4 * chi,), jnp.float32),
        "conv3_bn_b": 0.01 * jax.random.normal(ks[11], (4 * chi,), jnp.float32),
        "fc0_w": scale * jax.random.normal(jax.random.fold_in(key, 100),
                                           (N_OUT, 4 * chi), jnp.float32),
        "fc0_b": scale * jax.random.normal(jax.random.fold_in(key, 101),
                                           (N_OUT,), jnp.float32),
    }


if __name__ == "__main__":
    key = jax.random.PRNGKey(0)
    k_x, k_p = jax.random.split(key)

    # Input pictures: batch=2, 1 channel, 8x8 pixels (NCHW, as in PyTorch)
    x = jax.random.normal(k_x, (2, 1, 8, 8), jnp.float32)
    params = init_params(k_p, chi=CHI)
    prepped = prepare_params(params)          # one-time weight re-layout (bf16 big mats)

    fwd = jax.jit(cnn_basic_forward)
    out = jax.block_until_ready(fwd(x, prepped))

    assert out.shape == (2, 3), out.shape
    assert bool(jnp.all(jnp.isfinite(out)))
    print("KERNEL_OK")
</pallas_src>

<mosaic_0001>
module attributes {stable_mosaic.version = 11 : i64} {
  func.func @_fused_forward_kernel(%arg0: memref<128x9xf32, #tpu.memory_space<vmem>>, %arg1: memref<9x128xf32, #tpu.memory_space<vmem>>, %arg2: memref<1x128xf32, #tpu.memory_space<vmem>>, %arg3: memref<1x128xf32, #tpu.memory_space<vmem>>, %arg4: memref<1x128xf32, #tpu.memory_space<vmem>>, %arg5: memref<512x256xbf16, #tpu.memory_space<vmem>>, %arg6: memref<1x256xf32, #tpu.memory_space<vmem>>, %arg7: memref<1x256xf32, #tpu.memory_space<vmem>>, %arg8: memref<1x256xf32, #tpu.memory_space<vmem>>, %arg9: memref<1024x512xbf16, #tpu.memory_space<vmem>>, %arg10: memref<1x512xf32, #tpu.memory_space<vmem>>, %arg11: memref<1x512xf32, #tpu.memory_space<vmem>>, %arg12: memref<1x512xf32, #tpu.memory_space<vmem>>, %arg13: memref<512x128xbf16, #tpu.memory_space<vmem>>, %arg14: memref<1x128xf32, #tpu.memory_space<vmem>>, %arg15: memref<2x128xf32, #tpu.memory_space<vmem>>) attributes {dimension_semantics = [], scalar_prefetch = 0 : i64, scratch_operands = 0 : i64, tpu.core_type = #tpu.core_type<tc>} {
    %c0 = arith.constant 0 : index
    %c0_0 = arith.constant 0 : index
    %0 = vector.load %arg0[%c0, %c0_0] : memref<128x9xf32, #tpu.memory_space<vmem>>, vector<128x9xf32>
    %c0_1 = arith.constant 0 : index
    %c0_2 = arith.constant 0 : index
    %1 = vector.load %arg1[%c0_1, %c0_2] : memref<9x128xf32, #tpu.memory_space<vmem>>, vector<9x128xf32>
    %cst = arith.constant dense<0.000000e+00> : vector<128x128xf32>
    %2 = tpu.matmul %0, %1, %cst {dimension_numbers = #tpu.dot_dimension_numbers<[1], [0], [0], [1], [0, 0, 1, 1], [], []>} : vector<128x9xf32>, vector<9x128xf32>, vector<128x128xf32> -> vector<128x128xf32>
    %c0_3 = arith.constant 0 : index
    %c0_4 = arith.constant 0 : index
    %3 = vector.load %arg2[%c0_3, %c0_4] : memref<1x128xf32, #tpu.memory_space<vmem>>, vector<1x128xf32>
    %4 = vector.broadcast %3 : vector<1x128xf32> to vector<128x128xf32>
    %5 = arith.addf %2, %4 : vector<128x128xf32>
    %cst_5 = arith.constant 0.000000e+00 : f32
    %6 = vector.broadcast %cst_5 : f32 to vector<128x128xf32>
    %7 = arith.cmpf ogt, %5, %6 : vector<128x128xf32>
    %cst_6 = arith.constant 0.00999999977 : f32
    %8 = vector.broadcast %cst_6 : f32 to vector<128x128xf32>
    %9 = arith.mulf %8, %5 : vector<128x128xf32>
    %10 = arith.select %7, %5, %9 : vector<128x128xi1>, vector<128x128xf32>
    %c0_7 = arith.constant 0 : index
    %c0_8 = arith.constant 0 : index
    %11 = vector.load %arg3[%c0_7, %c0_8] : memref<1x128xf32, #tpu.memory_space<vmem>>, vector<1x128xf32>
    %c0_9 = arith.constant 0 : index
    %c0_10 = arith.constant 0 : index
    %12 = vector.load %arg4[%c0_9, %c0_10] : memref<1x128xf32, #tpu.memory_space<vmem>>, vector<1x128xf32>
    %cst_11 = arith.constant dense<0.000000e+00> : vector<128xf32>
    %13 = vector.multi_reduction <add>, %10, %cst_11 [0] : vector<128x128xf32> to vector<128xf32>
    %14 = vector.shape_cast %13 : vector<128xf32> to vector<1x128xf32>
    %15 = arith.mulf %10, %10 : vector<128x128xf32>
    %cst_12 = arith.constant dense<0.000000e+00> : vector<128xf32>
    %16 = vector.multi_reduction <add>, %15, %cst_12 [0] : vector<128x128xf32> to vector<128xf32>
    %17 = vector.shape_cast %16 : vector<128xf32> to vector<1x128xf32>
    %cst_13 = arith.constant 1.280000e+02 : f32
    %18 = vector.broadcast %cst_13 : f32 to vector<1x128xf32>
    %19 = arith.divf %14, %18 : vector<1x128xf32>
    %cst_14 = arith.constant 1.280000e+02 : f32
    %20 = vector.broadcast %cst_14 : f32 to vector<1x128xf32>
    %21 = arith.divf %17, %20 : vector<1x128xf32>
    %22 = arith.mulf %19, %19 : vector<1x128xf32>
    %23 = arith.subf %21, %22 : vector<1x128xf32>
    %cst_15 = arith.constant 0.000000e+00 : f32
    %24 = vector.broadcast %cst_15 : f32 to vector<1x128xf32>
    %25 = arith.maximumf %23, %24 : vector<1x128xf32>
    %cst_16 = arith.constant 9.99999974E-6 : f32
    %26 = vector.broadcast %cst_16 : f32 to vector<1x128xf32>
    %27 = arith.addf %25, %26 : vector<1x128xf32>
    %28 = math.rsqrt %27 : vector<1x128xf32>
    %29 = arith.mulf %11, %28 : vector<1x128xf32>
    %30 = arith.mulf %19, %29 : vector<1x128xf32>
    %31 = arith.subf %12, %30 : vector<1x128xf32>
    %32 = vector.broadcast %29 : vector<1x128xf32> to vector<128x128xf32>
    %33 = arith.mulf %10, %32 : vector<128x128xf32>
    %34 = vector.broadcast %31 : vector<1x128xf32> to vector<128x128xf32>
    %35 = arith.addf %33, %34 : vector<128x128xf32>
    %36 = vector.extract_strided_slice %35 {offsets = [0, 0], sizes = [32, 128], strides = [1, 1]} : vector<128x128xf32> to vector<32x128xf32>
    %37 = vector.extract_strided_slice %35 {offsets = [32, 0], sizes = [32, 128], strides = [1, 1]} : vector<128x128xf32> to vector<32x128xf32>
    %38 = arith.maximumf %36, %37 : vector<32x128xf32>
    %39 = vector.extract_strided_slice %35 {offsets = [64, 0], sizes = [32, 128], strides = [1, 1]} : vector<128x128xf32> to vector<32x128xf32>
    %40 = vector.extract_strided_slice %35 {offsets = [96, 0], sizes = [32, 128], strides = [1, 1]} : vector<128x128xf32> to vector<32x128xf32>
    %41 = arith.maximumf %39, %40 : vector<32x128xf32>
    %42 = arith.maximumf %38, %41 : vector<32x128xf32>
    %cst_17 = arith.constant 0.000000e+00 : f32
    %43 = vector.broadcast %cst_17 : f32 to vector<12x128xf32>
    %cst_18 = arith.constant 0.000000e+00 : f32
    %44 = vector.broadcast %cst_18 : f32 to vector<4x128xf32>
    %cst_19 = arith.constant 0.000000e+00 : f32
    %45 = vector.broadcast %cst_19 : f32 to vector<2x128xf32>
    %46 = vector.extract_strided_slice %42 {offsets = [0, 0], sizes = [8, 128], strides = [1, 1]} : vector<32x128xf32> to vector<8x128xf32>
    %47 = vector.extract_strided_slice %42 {offsets = [8, 0], sizes = [8, 128], strides = [1, 1]} : vector<32x128xf32> to vector<8x128xf32>
    %48 = vector.extract_strided_slice %42 {offsets = [16, 0], sizes = [8, 128], strides = [1, 1]} : vector<32x128xf32> to vector<8x128xf32>
    %49 = vector.extract_strided_slice %42 {offsets = [24, 0], sizes = [8, 128], strides = [1, 1]} : vector<32x128xf32> to vector<8x128xf32>
    %50 = tpu.concatenate %43, %45, %46, %44, %47, %44, %48, %44, %49, %45, %43 in 0 : vector<12x128xf32>, vector<2x128xf32>, vector<8x128xf32>, vector<4x128xf32>, vector<8x128xf32>, vector<4x128xf32>, vector<8x128xf32>, vector<4x128xf32>, vector<8x128xf32>, vector<2x128xf32>, vector<12x128xf32> -> vector<72x128xf32>
    %51 = vector.extract_strided_slice %50 {offsets = [0, 0], sizes = [10, 128], strides = [1, 1]} : vector<72x128xf32> to vector<10x128xf32>
    %52 = vector.extract_strided_slice %50 {offsets = [12, 0], sizes = [10, 128], strides = [1, 1]} : vector<72x128xf32> to vector<10x128xf32>
    %53 = vector.extract_strided_slice %50 {offsets = [24, 0], sizes = [10, 128], strides = [1, 1]} : vector<72x128xf32> to vector<10x128xf32>
    %54 = vector.extract_strided_slice %50 {offsets = [36, 0], sizes = [10, 128], strides = [1, 1]} : vector<72x128xf32> to vector<10x128xf32>
    %55 = vector.extract_strided_slice %50 {offsets = [48, 0], sizes = [10, 128], strides = [1, 1]} : vector<72x128xf32> to vector<10x128xf32>
    %56 = tpu.concatenate %51, %52, %53, %54, %55 in 0 : vector<10x128xf32>, vector<10x128xf32>, vector<10x128xf32>, vector<10x128xf32>, vector<10x128xf32> -> vector<50x128xf32>
    %57 = vector.extract_strided_slice %50 {offsets = [2, 0], sizes = [10, 128], strides = [1, 1]} : vector<72x128xf32> to vector<10x128xf32>
    %58 = vector.extract_strided_slice %50 {offsets = [14, 0], sizes = [10, 128], strides = [1, 1]} : vector<72x128xf32> to vector<10x128xf32>
    %59 = vector.extract_strided_slice %50 {offsets = [26, 0], sizes = [10, 128], strides = [1, 1]} : vector<72x128xf32> to vector<10x128xf32>
    %60 = vector.extract_strided_slice %50 {offsets = [38, 0], sizes = [10, 128], strides = [1, 1]} : vector<72x128xf32> to vector<10x128xf32>
    %61 = vector.extract_strided_slice %50 {offsets = [50, 0], sizes = [10, 128], strides = [1, 1]} : vector<72x128xf32> to vector<10x128xf32>
    %62 = tpu.concatenate %57, %58, %59, %60, %61 in 0 : vector<10x128xf32>, vector<10x128xf32>, vector<10x128xf32>, vector<10x128xf32>, vector<10x128xf32> -> vector<50x128xf32>
    %63 = vector.extract_strided_slice %50 {offsets = [12, 0], sizes = [10, 128], strides = [1, 1]} : vector<72x128xf32> to vector<10x128xf32>
    %64 = vector.extract_strided_slice %50 {offsets = [24, 0], sizes = [10, 128], strides = [1, 1]} : vector<72x128xf32> to vector<10x128xf32>
    %65 = vector.extract_strided_slice %50 {offsets = [36, 0], sizes = [10, 128], strides = [1, 1]} : vector<72x128xf32> to vector<10x128xf32>
    %66 = vector.extract_strided_slice %50 {offsets = [48, 0], sizes = [10, 128], strides = [1, 1]} : vector<72x128xf32> to vector<10x128xf32>
    %67 = vector.extract_strided_slice %50 {offsets = [60, 0], sizes = [10, 128], strides = [1, 1]} : vector<72x128xf32> to vector<10x128xf32>
    %68 = tpu.concatenate %63, %64, %65, %66, %67 in 0 : vector<10x128xf32>, vector<10x128xf32>, vector<10x128xf32>, vector<10x128xf32>, vector<10x128xf32> -> vector<50x128xf32>
    %69 = vector.extract_strided_slice %50 {offsets = [14, 0], sizes = [10, 128], strides = [1, 1]} : vector<72x128xf32> to vector<10x128xf32>
    %70 = vector.extract_strided_slice %50 {offsets = [26, 0], sizes = [10, 128], strides = [1, 1]} : vector<72x128xf32> to vector<10x128xf32>
    %71 = vector.extract_strided_slice %50 {offsets = [38, 0], sizes = [10, 128], strides = [1, 1]} : vector<72x128xf32> to vector<10x128xf32>
    %72 = vector.extract_strided_slice %50 {offsets = [50, 0], sizes = [10, 128], strides = [1, 1]} : vector<72x128xf32> to vector<10x128xf32>
    %73 = vector.extract_strided_slice %50 {offsets = [62, 0], sizes = [10, 128], strides = [1, 1]} : vector<72x128xf32> to vector<10x128xf32>
    %74 = tpu.concatenate %69, %70, %71, %72, %73 in 0 : vector<10x128xf32>, vector<10x128xf32>, vector<10x128xf32>, vector<10x128xf32>, vector<10x128xf32> -> vector<50x128xf32>
    %75 = tpu.concatenate %56, %62, %68, %74 in 1 : vector<50x128xf32>, vector<50x128xf32>, vector<50x128xf32>, vector<50x128xf32> -> vector<50x512xf32>
    %76 = arith.truncf %75 : vector<50x512xf32> to vector<50x512xbf16>
    %c0_20 = arith.constant 0 : index
    %c0_21 = arith.constant 0 : index
    %77 = vector.load %arg5[%c0_20, %c0_21] : memref<512x256xbf16, #tpu.memory_space<vmem>>, vector<512x256xbf16>
    %cst_22 = arith.constant dense<0.000000e+00> : vector<50x256xf32>
    %78 = tpu.matmul %76, %77, %cst_22 {dimension_numbers = #tpu.dot_dimension_numbers<[1], [0], [0], [1], [0, 0, 1, 1], [], []>} : vector<50x512xbf16>, vector<512x256xbf16>, vector<50x256xf32> -> vector<50x256xf32>
    %c0_23 = arith.constant 0 : index
    %c0_24 = arith.constant 0 : index
    %79 = vector.load %arg6[%c0_23, %c0_24] : memref<1x256xf32, #tpu.memory_space<vmem>>, vector<1x256xf32>
    %80 = vector.broadcast %79 : vector<1x256xf32> to vector<50x256xf32>
    %81 = arith.addf %78, %80 : vector<50x256xf32>
    %cst_25 = arith.constant 0.000000e+00 : f32
    %82 = vector.broadcast %cst_25 : f32 to vector<50x256xf32>
    %83 = arith.cmpf ogt, %81, %82 : vector<50x256xf32>
    %cst_26 = arith.constant 0.00999999977 : f32
    %84 = vector.broadcast %cst_26 : f32 to vector<50x256xf32>
    %85 = arith.mulf %84, %81 : vector<50x256xf32>
    %86 = arith.select %83, %81, %85 : vector<50x256xi1>, vector<50x256xf32>
    %c0_27 = arith.constant 0 : index
    %c0_28 = arith.constant 0 : index
    %87 = vector.load %arg7[%c0_27, %c0_28] : memref<1x256xf32, #tpu.memory_space<vmem>>, vector<1x256xf32>
    %c0_29 = arith.constant 0 : index
    %c0_30 = arith.constant 0 : index
    %88 = vector.load %arg8[%c0_29, %c0_30] : memref<1x256xf32, #tpu.memory_space<vmem>>, vector<1x256xf32>
    %cst_31 = arith.constant dense<0.000000e+00> : vector<256xf32>
    %89 = vector.multi_reduction <add>, %86, %cst_31 [0] : vector<50x256xf32> to vector<256xf32>
    %90 = vector.shape_cast %89 : vector<256xf32> to vector<1x256xf32>
    %91 = arith.mulf %86, %86 : vector<50x256xf32>
    %cst_32 = arith.constant dense<0.000000e+00> : vector<256xf32>
    %92 = vector.multi_reduction <add>, %91, %cst_32 [0] : vector<50x256xf32> to vector<256xf32>
    %93 = vector.shape_cast %92 : vector<256xf32> to vector<1x256xf32>
    %cst_33 = arith.constant 5.000000e+01 : f32
    %94 = vector.broadcast %cst_33 : f32 to vector<1x256xf32>
    %95 = arith.divf %90, %94 : vector<1x256xf32>
    %cst_34 = arith.constant 5.000000e+01 : f32
    %96 = vector.broadcast %cst_34 : f32 to vector<1x256xf32>
    %97 = arith.divf %93, %96 : vector<1x256xf32>
    %98 = arith.mulf %95, %95 : vector<1x256xf32>
    %99 = arith.subf %97, %98 : vector<1x256xf32>
    %cst_35 = arith.constant 0.000000e+00 : f32
    %100 = vector.broadcast %cst_35 : f32 to vector<1x256xf32>
    %101 = arith.maximumf %99, %100 : vector<1x256xf32>
    %cst_36 = arith.constant 9.99999974E-6 : f32
    %102 = vector.broadcast %cst_36 : f32 to vector<1x256xf32>
    %103 = arith.addf %101, %102 : vector<1x256xf32>
    %104 = math.rsqrt %103 : vector<1x256xf32>
    %105 = arith.mulf %87, %104 : vector<1x256xf32>
    %106 = arith.mulf %95, %105 : vector<1x256xf32>
    %107 = arith.subf %88, %106 : vector<1x256xf32>
    %108 = vector.broadcast %105 : vector<1x256xf32> to vector<50x256xf32>
    %109 = arith.mulf %86, %108 : vector<50x256xf32>
    %110 = vector.broadcast %107 : vector<1x256xf32> to vector<50x256xf32>
    %111 = arith.addf %109, %110 : vector<50x256xf32>
    %112 = vector.extract_strided_slice %111 {offsets = [0, 0], sizes = [2, 256], strides = [1, 1]} : vector<50x256xf32> to vector<2x256xf32>
    %113 = vector.extract_strided_slice %111 {offsets = [2, 0], sizes = [2, 256], strides = [1, 1]} : vector<50x256xf32> to vector<2x256xf32>
    %114 = arith.maximumf %112, %113 : vector<2x256xf32>
    %115 = vector.extract_strided_slice %111 {offsets = [10, 0], sizes = [2, 256], strides = [1, 1]} : vector<50x256xf32> to vector<2x256xf32>
    %116 = arith.maximumf %114, %115 : vector<2x256xf32>
    %117 = vector.extract_strided_slice %111 {offsets = [12, 0], sizes = [2, 256], strides = [1, 1]} : vector<50x256xf32> to vector<2x256xf32>
    %118 = arith.maximumf %116, %117 : vector<2x256xf32>
    %119 = vector.extract_strided_slice %111 {offsets = [4, 0], sizes = [2, 256], strides = [1, 1]} : vector<50x256xf32> to vector<2x256xf32>
    %120 = vector.extract_strided_slice %111 {offsets = [6, 0], sizes = [2, 256], strides = [1, 1]} : vector<50x256xf32> to vector<2x256xf32>
    %121 = arith.maximumf %119, %120 : vector<2x256xf32>
    %122 = vector.extract_strided_slice %111 {offsets = [14, 0], sizes = [2, 256], strides = [1, 1]} : vector<50x256xf32> to vector<2x256xf32>
    %123 = arith.maximumf %121, %122 : vector<2x256xf32>
    %124 = vector.extract_strided_slice %111 {offsets = [16, 0], sizes = [2, 256], strides = [1, 1]} : vector<50x256xf32> to vector<2x256xf32>
    %125 = arith.maximumf %123, %124 : vector<2x256xf32>
    %126 = vector.extract_strided_slice %111 {offsets = [20, 0], sizes = [2, 256], strides = [1, 1]} : vector<50x256xf32> to vector<2x256xf32>
    %127 = vector.extract_strided_slice %111 {offsets = [22, 0], sizes = [2, 256], strides = [1, 1]} : vector<50x256xf32> to vector<2x256xf32>
    %128 = arith.maximumf %126, %127 : vector<2x256xf32>
    %129 = vector.extract_strided_slice %111 {offsets = [30, 0], sizes = [2, 256], strides = [1, 1]} : vector<50x256xf32> to vector<2x256xf32>
    %130 = arith.maximumf %128, %129 : vector<2x256xf32>
    %131 = vector.extract_strided_slice %111 {offsets = [32, 0], sizes = [2, 256], strides = [1, 1]} : vector<50x256xf32> to vector<2x256xf32>
    %132 = arith.maximumf %130, %131 : vector<2x256xf32>
    %133 = vector.extract_strided_slice %111 {offsets = [24, 0], sizes = [2, 256], strides = [1, 1]} : vector<50x256xf32> to vector<2x256xf32>
    %134 = vector.extract_strided_slice %111 {offsets = [26, 0], sizes = [2, 256], strides = [1, 1]} : vector<50x256xf32> to vector<2x256xf32>
    %135 = arith.maximumf %133, %134 : vector<2x256xf32>
    %136 = vector.extract_strided_slice %111 {offsets = [34, 0], sizes = [2, 256], strides = [1, 1]} : vector<50x256xf32> to vector<2x256xf32>
    %137 = arith.maximumf %135, %136 : vector<2x256xf32>
    %138 = vector.extract_strided_slice %111 {offsets = [36, 0], sizes = [2, 256], strides = [1, 1]} : vector<50x256xf32> to vector<2x256xf32>
    %139 = arith.maximumf %137, %138 : vector<2x256xf32>
    %140 = tpu.concatenate %118, %125, %132, %139 in 0 : vector<2x256xf32>, vector<2x256xf32>, vector<2x256xf32>, vector<2x256xf32> -> vector<8x256xf32>
    %cst_37 = arith.constant 0.000000e+00 : f32
    %141 = vector.broadcast %cst_37 : f32 to vector<8x256xf32>
    %cst_38 = arith.constant 0.000000e+00 : f32
    %142 = vector.broadcast %cst_38 : f32 to vector<4x256xf32>
    %cst_39 = arith.constant 0.000000e+00 : f32
    %143 = vector.broadcast %cst_39 : f32 to vector<2x256xf32>
    %144 = vector.extract_strided_slice %140 {offsets = [0, 0], sizes = [4, 256], strides = [1, 1]} : vector<8x256xf32> to vector<4x256xf32>
    %145 = vector.extract_strided_slice %140 {offsets = [4, 0], sizes = [4, 256], strides = [1, 1]} : vector<8x256xf32> to vector<4x256xf32>
    %146 = tpu.concatenate %141, %143, %144, %142, %145, %143, %141 in 0 : vector<8x256xf32>, vector<2x256xf32>, vector<4x256xf32>, vector<4x256xf32>, vector<4x256xf32>, vector<2x256xf32>, vector<8x256xf32> -> vector<32x256xf32>
    %147 = vector.extract_strided_slice %146 {offsets = [0, 0], sizes = [6, 256], strides = [1, 1]} : vector<32x256xf32> to vector<6x256xf32>
    %148 = vector.extract_strided_slice %146 {offsets = [8, 0], sizes = [6, 256], strides = [1, 1]} : vector<32x256xf32> to vector<6x256xf32>
    %149 = vector.extract_strided_slice %146 {offsets = [16, 0], sizes = [6, 256], strides = [1, 1]} : vector<32x256xf32> to vector<6x256xf32>
    %150 = tpu.concatenate %147, %148, %149 in 0 : vector<6x256xf32>, vector<6x256xf32>, vector<6x256xf32> -> vector<18x256xf32>
    %151 = vector.extract_strided_slice %146 {offsets = [2, 0], sizes = [6, 256], strides = [1, 1]} : vector<32x256xf32> to vector<6x256xf32>
    %152 = vector.extract_strided_slice %146 {offsets = [10, 0], sizes = [6, 256], strides = [1, 1]} : vector<32x256xf32> to vector<6x256xf32>
    %153 = vector.extract_strided_slice %146 {offsets = [18, 0], sizes = [6, 256], strides = [1, 1]} : vector<32x256xf32> to vector<6x256xf32>
    %154 = tpu.concatenate %151, %152, %153 in 0 : vector<6x256xf32>, vector<6x256xf32>, vector<6x256xf32> -> vector<18x256xf32>
    %155 = vector.extract_strided_slice %146 {offsets = [8, 0], sizes = [6, 256], strides = [1, 1]} : vector<32x256xf32> to vector<6x256xf32>
    %156 = vector.extract_strided_slice %146 {offsets = [16, 0], sizes = [6, 256], strides = [1, 1]} : vector<32x256xf32> to vector<6x256xf32>
    %157 = vector.extract_strided_slice %146 {offsets = [24, 0], sizes = [6, 256], strides = [1, 1]} : vector<32x256xf32> to vector<6x256xf32>
    %158 = tpu.concatenate %155, %156, %157 in 0 : vector<6x256xf32>, vector<6x256xf32>, vector<6x256xf32> -> vector<18x256xf32>
    %159 = vector.extract_strided_slice %146 {offsets = [10, 0], sizes = [6, 256], strides = [1, 1]} : vector<32x256xf32> to vector<6x256xf32>
    %160 = vector.extract_strided_slice %146 {offsets = [18, 0], sizes = [6, 256], strides = [1, 1]} : vector<32x256xf32> to vector<6x256xf32>
    %161 = vector.extract_strided_slice %146 {offsets = [26, 0], sizes = [6, 256], strides = [1, 1]} : vector<32x256xf32> to vector<6x256xf32>
    %162 = tpu.concatenate %159, %160, %161 in 0 : vector<6x256xf32>, vector<6x256xf32>, vector<6x256xf32> -> vector<18x256xf32>
    %163 = tpu.concatenate %150, %154, %158, %162 in 1 : vector<18x256xf32>, vector<18x256xf32>, vector<18x256xf32>, vector<18x256xf32> -> vector<18x1024xf32>
    %164 = arith.truncf %163 : vector<18x1024xf32> to vector<18x1024xbf16>
    %c0_40 = arith.constant 0 : index
    %c0_41 = arith.constant 0 : index
    %165 = vector.load %arg9[%c0_40, %c0_41] : memref<1024x512xbf16, #tpu.memory_space<vmem>>, vector<1024x512xbf16>
    %cst_42 = arith.constant dense<0.000000e+00> : vector<18x512xf32>
    %166 = tpu.matmul %164, %165, %cst_42 {dimension_numbers = #tpu.dot_dimension_numbers<[1], [0], [0], [1], [0, 0, 1, 1], [], []>} : vector<18x1024xbf16>, vector<1024x512xbf16>, vector<18x512xf32> -> vector<18x512xf32>
    %c0_43 = arith.constant 0 : index
    %c0_44 = arith.constant 0 : index
    %167 = vector.load %arg10[%c0_43, %c0_44] : memref<1x512xf32, #tpu.memory_space<vmem>>, vector<1x512xf32>
    %168 = vector.broadcast %167 : vector<1x512xf32> to vector<18x512xf32>
    %169 = arith.addf %166, %168 : vector<18x512xf32>
    %cst_45 = arith.constant 0.000000e+00 : f32
    %170 = vector.broadcast %cst_45 : f32 to vector<18x512xf32>
    %171 = arith.cmpf ogt, %169, %170 : vector<18x512xf32>
    %cst_46 = arith.constant 0.00999999977 : f32
    %172 = vector.broadcast %cst_46 : f32 to vector<18x512xf32>
    %173 = arith.mulf %172, %169 : vector<18x512xf32>
    %174 = arith.select %171, %169, %173 : vector<18x512xi1>, vector<18x512xf32>
    %c0_47 = arith.constant 0 : index
    %c0_48 = arith.constant 0 : index
    %175 = vector.load %arg11[%c0_47, %c0_48] : memref<1x512xf32, #tpu.memory_space<vmem>>, vector<1x512xf32>
    %c0_49 = arith.constant 0 : index
    %c0_50 = arith.constant 0 : index
    %176 = vector.load %arg12[%c0_49, %c0_50] : memref<1x512xf32, #tpu.memory_space<vmem>>, vector<1x512xf32>
    %cst_51 = arith.constant dense<0.000000e+00> : vector<512xf32>
    %177 = vector.multi_reduction <add>, %174, %cst_51 [0] : vector<18x512xf32> to vector<512xf32>
    %178 = vector.shape_cast %177 : vector<512xf32> to vector<1x512xf32>
    %179 = arith.mulf %174, %174 : vector<18x512xf32>
    %cst_52 = arith.constant dense<0.000000e+00> : vector<512xf32>
    %180 = vector.multi_reduction <add>, %179, %cst_52 [0] : vector<18x512xf32> to vector<512xf32>
    %181 = vector.shape_cast %180 : vector<512xf32> to vector<1x512xf32>
    %cst_53 = arith.constant 1.800000e+01 : f32
    %182 = vector.broadcast %cst_53 : f32 to vector<1x512xf32>
    %183 = arith.divf %178, %182 : vector<1x512xf32>
    %cst_54 = arith.constant 1.800000e+01 : f32
    %184 = vector.broadcast %cst_54 : f32 to vector<1x512xf32>
    %185 = arith.divf %181, %184 : vector<1x512xf32>
    %186 = arith.mulf %183, %183 : vector<1x512xf32>
    %187 = arith.subf %185, %186 : vector<1x512xf32>
    %cst_55 = arith.constant 0.000000e+00 : f32
    %188 = vector.broadcast %cst_55 : f32 to vector<1x512xf32>
    %189 = arith.maximumf %187, %188 : vector<1x512xf32>
    %cst_56 = arith.constant 9.99999974E-6 : f32
    %190 = vector.broadcast %cst_56 : f32 to vector<1x512xf32>
    %191 = arith.addf %189, %190 : vector<1x512xf32>
    %192 = math.rsqrt %191 : vector<1x512xf32>
    %193 = arith.mulf %175, %192 : vector<1x512xf32>
    %194 = arith.mulf %183, %193 : vector<1x512xf32>
    %195 = arith.subf %176, %194 : vector<1x512xf32>
    %196 = vector.broadcast %193 : vector<1x512xf32> to vector<18x512xf32>
    %197 = arith.mulf %174, %196 : vector<18x512xf32>
    %198 = vector.broadcast %195 : vector<1x512xf32> to vector<18x512xf32>
    %199 = arith.addf %197, %198 : vector<18x512xf32>
    %200 = vector.extract_strided_slice %199 {offsets = [0, 0], sizes = [2, 512], strides = [1, 1]} : vector<18x512xf32> to vector<2x512xf32>
    %201 = vector.extract_strided_slice %199 {offsets = [2, 0], sizes = [2, 512], strides = [1, 1]} : vector<18x512xf32> to vector<2x512xf32>
    %202 = arith.maximumf %200, %201 : vector<2x512xf32>
    %203 = vector.extract_strided_slice %199 {offsets = [6, 0], sizes = [2, 512], strides = [1, 1]} : vector<18x512xf32> to vector<2x512xf32>
    %204 = arith.maximumf %202, %203 : vector<2x512xf32>
    %205 = vector.extract_strided_slice %199 {offsets = [8, 0], sizes = [2, 512], strides = [1, 1]} : vector<18x512xf32> to vector<2x512xf32>
    %206 = arith.maximumf %204, %205 : vector<2x512xf32>
    %207 = arith.truncf %206 : vector<2x512xf32> to vector<2x512xbf16>
    %c0_57 = arith.constant 0 : index
    %c0_58 = arith.constant 0 : index
    %208 = vector.load %arg13[%c0_57, %c0_58] : memref<512x128xbf16, #tpu.memory_space<vmem>>, vector<512x128xbf16>
    %cst_59 = arith.constant dense<0.000000e+00> : vector<2x128xf32>
    %209 = tpu.matmul %207, %208, %cst_59 {dimension_numbers = #tpu.dot_dimension_numbers<[1], [0], [0], [1], [0, 0, 1, 1], [], []>} : vector<2x512xbf16>, vector<512x128xbf16>, vector<2x128xf32> -> vector<2x128xf32>
    %c0_60 = arith.constant 0 : index
    %c0_61 = arith.constant 0 : index
    %210 = vector.load %arg14[%c0_60, %c0_61] : memref<1x128xf32, #tpu.memory_space<vmem>>, vector<1x128xf32>
    %211 = vector.broadcast %210 : vector<1x128xf32> to vector<2x128xf32>
    %212 = arith.addf %209, %211 : vector<2x128xf32>
    %c0_62 = arith.constant 0 : index
    %c0_63 = arith.constant 0 : index
    %213 = vector.load %arg15[%c0_62, %c0_63] : memref<2x128xf32, #tpu.memory_space<vmem>>, vector<2x128xf32>
    tpu.vector_store %arg15[%c0_62, %c0_63], %212 {strides = array<i32>} : memref<2x128xf32, #tpu.memory_space<vmem>>, vector<2x128xf32>,
    return
  }
}

</mosaic_0001>

<llo_original>
// kernel: cnn_basic_forward.1
$region0: #{cnn_basic_forward.1}
  #allocation0 [shape = 'u32[]', space=smem, size = 0x4, offset = 0x4, fixed_abs, tag = 'smem constant byte address 0x4 - core index']
  #allocation1 [shape = 'u32[144,128]{1,0:T(1,128)}', space=vmem, size = 0x12000, scoped, tag = 'internal scratch']
  %s0 = inlined_call_operand.vmem [shape: f32[128,9], index: 0, kind: input, shape index: {}]
  %s1 = inlined_call_operand.vmem [shape: f32[9,128], index: 1, kind: input, shape index: {}]
  %s2 = inlined_call_operand.vmem [shape: f32[1,128], index: 2, kind: input, shape index: {}]
  %s3 = inlined_call_operand.vmem [shape: f32[1,128], index: 3, kind: input, shape index: {}]
  %s4 = inlined_call_operand.vmem [shape: f32[1,128], index: 4, kind: input, shape index: {}]
  %s5 = inlined_call_operand.vmem [shape: bf16[512,256], index: 5, kind: input, shape index: {}]
  %s6 = inlined_call_operand.vmem [shape: f32[1,256], index: 6, kind: input, shape index: {}]
  %s7 = inlined_call_operand.vmem [shape: f32[1,256], index: 7, kind: input, shape index: {}]
  %s8 = inlined_call_operand.vmem [shape: f32[1,256], index: 8, kind: input, shape index: {}]
  %s9 = inlined_call_operand.vmem [shape: bf16[1024,512], index: 9, kind: input, shape index: {}]
  %s10 = inlined_call_operand.vmem [shape: f32[1,512], index: 10, kind: input, shape index: {}]
  %s11 = inlined_call_operand.vmem [shape: f32[1,512], index: 11, kind: input, shape index: {}]
  %s12 = inlined_call_operand.vmem [shape: f32[1,512], index: 12, kind: input, shape index: {}]
  %s13 = inlined_call_operand.vmem [shape: bf16[512,128], index: 13, kind: input, shape index: {}]
  %s14 = inlined_call_operand.vmem [shape: f32[1,128], index: 14, kind: input, shape index: {}]
  %s15 = inlined_call_operand.hbm [shape: f32[2,128], index: 15, kind: output, shape index: {}]
  %s16 = sld [smem:[#allocation0]]
  $region70: #{cnn_basic_forward.1} parent=0
    _
  %s18 = ssub.s32 1, %s16
  %s19 = scalar_select 0, %s18, %s16
  $region1: #{cnn_basic_forward.1} parent=0
    #allocation2 [shape = 'u8[1024]{0}', space=vmem, size = 0x400, scoped, tag = 'output window, operand 0, single buffered']
    #allocation3 [shape = 's32[1]{0}', space=sflag, size = 0x4, scoped, tag = 'scoped memory for cnn_basic_forward.1']
    %20 = vsyncpa [#allocation3], 0
    // Predicated region
    $region2: #{cnn_basic_forward.1} parent=1 // pred_check
      _
    $region3: #{cnn_basic_forward.1} parent=1 // pred_check_branch
      %22 = sbr.rel (0) target = $region5
    $region4: #{cnn_basic_forward.1} parent=1 // pred_region
      _
    $region5: #{cnn_basic_forward.1} parent=1 // pred_fallthru
      _
    // Predicated region
    $region6: #{cnn_basic_forward.1} parent=1 // pred_check
      _
    $region7: #{cnn_basic_forward.1} parent=1 // pred_check_branch
      %24 = sbr.rel (0) target = $region9
    $region8: #{cnn_basic_forward.1} parent=1 // pred_region
      _
    $region9: #{cnn_basic_forward.1} parent=1 // pred_fallthru
      _
    // Predicated region
    $region10: #{cnn_basic_forward.1} parent=1 // pred_check
      _
    $region11: #{cnn_basic_forward.1} parent=1 // pred_check_branch
      %26 = sbr.rel (0) target = $region13
    $region12: #{cnn_basic_forward.1} parent=1 // pred_region
      _
    $region13: #{cnn_basic_forward.1} parent=1 // pred_fallthru
      _
    // Predicated region
    $region14: #{cnn_basic_forward.1} parent=1 // pred_check
      _
    $region15: #{cnn_basic_forward.1} parent=1 // pred_check_branch
      %28 = sbr.rel (0) target = $region17
    $region16: #{cnn_basic_forward.1} parent=1 // pred_region
      _
    $region17: #{cnn_basic_forward.1} parent=1 // pred_fallthru
      _
    // Predicated region
    $region18: #{cnn_basic_forward.1} parent=1 // pred_check
      _
    $region19: #{cnn_basic_forward.1} parent=1 // pred_check_branch
      %30 = sbr.rel (0) target = $region21
    $region20: #{cnn_basic_forward.1} parent=1 // pred_region
      _
    $region21: #{cnn_basic_forward.1} parent=1 // pred_fallthru
      _
    // Predicated region
    $region22: #{cnn_basic_forward.1} parent=1 // pred_check
      _
    $region23: #{cnn_basic_forward.1} parent=1 // pred_check_branch
      %32 = sbr.rel (0) target = $region25
    $region24: #{cnn_basic_forward.1} parent=1 // pred_region
      _
    $region25: #{cnn_basic_forward.1} parent=1 // pred_fallthru
      _
    // Predicated region
    $region26: #{cnn_basic_forward.1} parent=1 // pred_check
      _
    $region27: #{cnn_basic_forward.1} parent=1 // pred_check_branch
      %34 = sbr.rel (0) target = $region29
    $region28: #{cnn_basic_forward.1} parent=1 // pred_region
      _
    $region29: #{cnn_basic_forward.1} parent=1 // pred_fallthru
      _
    // Predicated region
    $region30: #{cnn_basic_forward.1} parent=1 // pred_check
      _
    $region31: #{cnn_basic_forward.1} parent=1 // pred_check_branch
      %36 = sbr.rel (0) target = $region33
    $region32: #{cnn_basic_forward.1} parent=1 // pred_region
      _
    $region33: #{cnn_basic_forward.1} parent=1 // pred_fallthru
      _
    // Predicated region
    $region34: #{cnn_basic_forward.1} parent=1 // pred_check
      _
    $region35: #{cnn_basic_forward.1} parent=1 // pred_check_branch
      %38 = sbr.rel (0) target = $region37
    $region36: #{cnn_basic_forward.1} parent=1 // pred_region
      _
    $region37: #{cnn_basic_forward.1} parent=1 // pred_fallthru
      _
    // Predicated region
    $region38: #{cnn_basic_forward.1} parent=1 // pred_check
      _
    $region39: #{cnn_basic_forward.1} parent=1 // pred_check_branch
      %40 = sbr.rel (0) target = $region41
    $region40: #{cnn_basic_forward.1} parent=1 // pred_region
      _
    $region41: #{cnn_basic_forward.1} parent=1 // pred_fallthru
      _
    // Predicated region
    $region42: #{cnn_basic_forward.1} parent=1 // pred_check
      _
    $region43: #{cnn_basic_forward.1} parent=1 // pred_check_branch
      %42 = sbr.rel (0) target = $region45
    $region44: #{cnn_basic_forward.1} parent=1 // pred_region
      _
    $region45: #{cnn_basic_forward.1} parent=1 // pred_fallthru
      _
    // Predicated region
    $region46: #{cnn_basic_forward.1} parent=1 // pred_check
      _
    $region47: #{cnn_basic_forward.1} parent=1 // pred_check_branch
      %44 = sbr.rel (0) target = $region49
    $region48: #{cnn_basic_forward.1} parent=1 // pred_region
      _
    $region49: #{cnn_basic_forward.1} parent=1 // pred_fallthru
      _
    // Predicated region
    $region50: #{cnn_basic_forward.1} parent=1 // pred_check
      _
    $region51: #{cnn_basic_forward.1} parent=1 // pred_check_branch
      %46 = sbr.rel (0) target = $region53
    $region52: #{cnn_basic_forward.1} parent=1 // pred_region
      _
    $region53: #{cnn_basic_forward.1} parent=1 // pred_fallthru
      _
    // Predicated region
    $region54: #{cnn_basic_forward.1} parent=1 // pred_check
      _
    $region55: #{cnn_basic_forward.1} parent=1 // pred_check_branch
      %48 = sbr.rel (0) target = $region57
    $region56: #{cnn_basic_forward.1} parent=1 // pred_region
      _
    $region57: #{cnn_basic_forward.1} parent=1 // pred_fallthru
      _
    // Predicated region
    $region58: #{cnn_basic_forward.1} parent=1 // pred_check
      _
    $region59: #{cnn_basic_forward.1} parent=1 // pred_check_branch
      %50 = sbr.rel (0) target = $region61
    $region60: #{cnn_basic_forward.1} parent=1 // pred_region
      _
    $region61: #{cnn_basic_forward.1} parent=1 // pred_fallthru
      _
    %v52 = vld [vmem:[%s0] sm:$0xff]
    %v53 = vld [vmem:[%s0 + $0x8] sm:$0xff]
    %v54 = vld [vmem:[%s0 + $0x10] sm:$0xff]
    %v55 = vld [vmem:[%s0 + $0x18] sm:$0xff]
    %v56 = vld [vmem:[%s0 + $0x20] sm:$0xff]
    %v57 = vld [vmem:[%s0 + $0x28] sm:$0xff]
    %v58 = vld [vmem:[%s0 + $0x30] sm:$0xff]
    %v59 = vld [vmem:[%s0 + $0x38] sm:$0xff]
    %v60 = vld [vmem:[%s0 + $0x40] sm:$0xff]
    %v61 = vld [vmem:[%s0 + $0x48] sm:$0xff]
    %v62 = vld [vmem:[%s0 + $0x50] sm:$0xff]
    %v63 = vld [vmem:[%s0 + $0x58] sm:$0xff]
    %v64 = vld [vmem:[%s0 + $0x60] sm:$0xff]
    %v65 = vld [vmem:[%s0 + $0x68] sm:$0xff]
    %v66 = vld [vmem:[%s0 + $0x70] sm:$0xff]
    %v67 = vld [vmem:[%s0 + $0x78] sm:$0xff]
    %v68 = vld [vmem:[%s1] sm:$0xff]
    %v69 = vld [vmem:[%s1 + $0x8] sm:$0x1]
    %v70 = vld [vmem:[%s2] sm:$0x1]
    %v72 = vlaneseq
    %v73 = vshrl.u32 %v72, 7
    %v74 = vsub.s32 0, %v73
    %v75 = vrot.slane %v70, %v74
    %vm77 = vcmask 72704
    %v79 = vsel %vm77, %v52, 0
    %v82 = vsel %vm77, %v53, 0
    %v85 = vsel %vm77, %v54, 0
    %v88 = vsel %vm77, %v55, 0
    %v91 = vsel %vm77, %v56, 0
    %v94 = vsel %vm77, %v57, 0
    %v97 = vsel %vm77, %v58, 0
    %v100 = vsel %vm77, %v59, 0
    %v103 = vsel %vm77, %v60, 0
    %v106 = vsel %vm77, %v61, 0
    %v109 = vsel %vm77, %v62, 0
    %v112 = vsel %vm77, %v63, 0
    %v115 = vsel %vm77, %v64, 0
    %v118 = vsel %vm77, %v65, 0
    %v121 = vsel %vm77, %v66, 0
    %v124 = vsel %vm77, %v67, 0
    %vm126 = vcmask 1040384
    %v128 = vsel %vm126, %v69, 0
    %130 = vmatprep.subr.mxu0 0.0
    %131 = vmatpush1.msra.mxu0 %v68
    %132 = vmatprep.subr.mxu0 0.0
    %133 = vmatpush1.msra.mxu0 %v128
    %134 = vmatprep.subr.mxu0 0.0
    %135 = vmatpush1.msra.mxu0 0.0
    %136 = vmatprep.subr.mxu0 0.0
    %137 = vmatpush1.msra.mxu0 0.0
    %138 = vmatprep.subr.mxu0 0.0
    %139 = vmatpush1.msra.mxu0 0.0
    %140 = vmatprep.subr.mxu0 0.0
    %141 = vmatpush1.msra.mxu0 0.0
    %142 = vmatprep.subr.mxu0 0.0
    %143 = vmatpush1.msra.mxu0 0.0
    %144 = vmatprep.subr.mxu0 0.0
    %145 = vmatpush1.msra.mxu0 0.0
    %146 = vmatprep.subr.mxu0 0.0
    %147 = vmatpush1.msra.mxu0 0.0
    %148 = vmatprep.subr.mxu0 0.0
    %149 = vmatpush1.msra.mxu0 0.0
    %150 = vmatprep.subr.mxu0 0.0
    %151 = vmatpush1.msra.mxu0 0.0
    %152 = vmatprep.subr.mxu0 0.0
    %153 = vmatpush1.msra.mxu0 0.0
    %154 = vmatprep.subr.mxu0 0.0
    %155 = vmatpush1.msra.mxu0 0.0
    %156 = vmatprep.subr.mxu0 0.0
    %157 = vmatpush1.msra.mxu0 0.0
    %158 = vmatprep.subr.mxu0 0.0
    %159 = vmatpush1.msra.mxu0 0.0
    %160 = vmatprep.subr.mxu0 0.0
    %161 = vmatpush1.msra.mxu0 0.0
    %162 = vmatprep.subr.mxu0 0.0
    %163 = vmatpush1.msra.mxu0 0.0
    %164 = vmatprep.subr.mxu0 0.0
    %165 = vmatpush1.msra.mxu0 0.0
    %166 = vmatprep.subr.mxu0 0.0
    %167 = vmatpush1.msra.mxu0 0.0
    %168 = vmatprep.subr.mxu0 0.0
    %169 = vmatpush1.msra.mxu0 0.0
    %170 = vmatprep.subr.mxu0 0.0
    %171 = vmatpush1.msra.mxu0 0.0
    %172 = vmatprep.subr.mxu0 0.0
    %173 = vmatpush1.msra.mxu0 0.0
    %174 = vmatprep.subr.mxu0 0.0
    %175 = vmatpush1.msra.mxu0 0.0
    %176 = vmatprep.subr.mxu0 0.0
    %177 = vmatpush1.msra.mxu0 0.0
    %178 = vmatprep.subr.mxu0 0.0
    %179 = vmatpush1.msra.mxu0 0.0
    %180 = vmatprep.subr.mxu0 0.0
    %181 = vmatpush1.msra.mxu0 0.0
    %182 = vmatprep.subr.mxu0 0.0
    %183 = vmatpush1.msra.mxu0 0.0
    %184 = vmatprep.subr.mxu0 0.0
    %185 = vmatpush1.msra.mxu0 0.0
    %186 = vmatprep.subr.mxu0 0.0
    %187 = vmatpush1.msra.mxu0 0.0
    %188 = vmatprep.subr.mxu0 0.0
    %189 = vmatpush1.msra.mxu0 0.0
    %190 = vmatprep.subr.mxu0 0.0
    %191 = vmatpush1.msra.mxu0 0.0
    %192 = vmatprep.subr.mxu0 0.0
    %193 = vmatpush1.msra.mxu0 0.0
    %194 = vmatprep.mubr.f32.mxu0 0.0
    %195 = vmatmul.mubr.f32.gmra.mrb[0].mxu0 %v79
    %v196 = vpop.f32.mrb[0].mxu0
    %v197 = vadd.f32 %v75, %v196
    %v198 = vpop.f32.mrb[0].mxu0
    %199 = vmatprep.mubr.f32.mxu0 0.0
    %200 = vmatmul.mubr.f32.gmra.mrb[0].mxu0 %v82
    %v201 = vpop.f32.mrb[0].mxu0
    %v202 = vadd.f32 %v75, %v201
    %v203 = vpop.f32.mrb[0].mxu0
    %204 = vmatprep.mubr.f32.mxu0 0.0
    %205 = vmatmul.mubr.f32.gmra.mrb[0].mxu0 %v85
    %v206 = vpop.f32.mrb[0].mxu0
    %v207 = vadd.f32 %v75, %v206
    %v208 = vpop.f32.mrb[0].mxu0
    %209 = vmatprep.mubr.f32.mxu0 0.0
    %210 = vmatmul.mubr.f32.gmra.mrb[0].mxu0 %v88
    %v211 = vpop.f32.mrb[0].mxu0
    %v212 = vadd.f32 %v75, %v211
    %v213 = vpop.f32.mrb[0].mxu0
    %214 = vmatprep.mubr.f32.mxu0 0.0
    %215 = vmatmul.mubr.f32.gmra.mrb[0].mxu0 %v91
    %v216 = vpop.f32.mrb[0].mxu0
    %v217 = vadd.f32 %v75, %v216
    %v218 = vpop.f32.mrb[0].mxu0
    %219 = vmatprep.mubr.f32.mxu0 0.0
    %220 = vmatmul.mubr.f32.gmra.mrb[0].mxu0 %v94
    %v221 = vpop.f32.mrb[0].mxu0
    %v222 = vadd.f32 %v75, %v221
    %v223 = vpop.f32.mrb[0].mxu0
    %224 = vmatprep.mubr.f32.mxu0 0.0
    %225 = vmatmul.mubr.f32.gmra.mrb[0].mxu0 %v97
    %v226 = vpop.f32.mrb[0].mxu0
    %v227 = vadd.f32 %v75, %v226
    %v228 = vpop.f32.mrb[0].mxu0
    %229 = vmatprep.mubr.f32.mxu0 0.0
    %230 = vmatmul.mubr.f32.gmra.mrb[0].mxu0 %v100
    %v231 = vpop.f32.mrb[0].mxu0
    %v232 = vadd.f32 %v75, %v231
    %v233 = vpop.f32.mrb[0].mxu0
    %234 = vmatprep.mubr.f32.mxu0 0.0
    %235 = vmatmul.mubr.f32.gmra.mrb[0].mxu0 %v103
    %v236 = vpop.f32.mrb[0].mxu0
    %v237 = vadd.f32 %v75, %v236
    %v238 = vpop.f32.mrb[0].mxu0
    %239 = vmatprep.mubr.f32.mxu0 0.0
    %240 = vmatmul.mubr.f32.gmra.mrb[0].mxu0 %v106
    %v241 = vpop.f32.mrb[0].mxu0
    %v242 = vadd.f32 %v75, %v241
    %v243 = vpop.f32.mrb[0].mxu0
    %244 = vmatprep.mubr.f32.mxu0 0.0
    %245 = vmatmul.mubr.f32.gmra.mrb[0].mxu0 %v109
    %v246 = vpop.f32.mrb[0].mxu0
    %v247 = vadd.f32 %v75, %v246
    %v248 = vpop.f32.mrb[0].mxu0
    %249 = vmatprep.mubr.f32.mxu0 0.0
    %250 = vmatmul.mubr.f32.gmra.mrb[0].mxu0 %v112
    %v251 = vpop.f32.mrb[0].mxu0
    %v252 = vadd.f32 %v75, %v251
    %v253 = vpop.f32.mrb[0].mxu0
    %254 = vmatprep.mubr.f32.mxu0 0.0
    %255 = vmatmul.mubr.f32.gmra.mrb[0].mxu0 %v115
    %v256 = vpop.f32.mrb[0].mxu0
    %v257 = vadd.f32 %v75, %v256
    %v258 = vpop.f32.mrb[0].mxu0
    %259 = vmatprep.mubr.f32.mxu0 0.0
    %260 = vmatmul.mubr.f32.gmra.mrb[0].mxu0 %v118
    %v261 = vpop.f32.mrb[0].mxu0
    %v262 = vadd.f32 %v75, %v261
    %v263 = vpop.f32.mrb[0].mxu0
    %264 = vmatprep.mubr.f32.mxu0 0.0
    %265 = vmatmul.mubr.f32.gmra.mrb[0].mxu0 %v121
    %v266 = vpop.f32.mrb[0].mxu0
    %v267 = vadd.f32 %v75, %v266
    %v268 = vpop.f32.mrb[0].mxu0
    %269 = vmatprep.mubr.f32.mxu0 0.0
    %270 = vmatmul.mubr.f32.gmra.mrb[0].mxu0 %v124
    %v271 = vpop.f32.mrb[0].mxu0
    %v272 = vadd.f32 %v75, %v271
    %v273 = vpop.f32.mrb[0].mxu0
    %274 = vdwg.mxu0
    %vm275 = vcmp.gt.f32.partialorder %v197, 0.0
    %vm276 = vcmp.gt.f32.partialorder %v202, 0.0
    %vm277 = vcmp.gt.f32.partialorder %v207, 0.0
    %vm278 = vcmp.gt.f32.partialorder %v212, 0.0
    %vm279 = vcmp.gt.f32.partialorder %v217, 0.0
    %vm280 = vcmp.gt.f32.partialorder %v222, 0.0
    %vm281 = vcmp.gt.f32.partialorder %v227, 0.0
    %vm282 = vcmp.gt.f32.partialorder %v232, 0.0
    %vm283 = vcmp.gt.f32.partialorder %v237, 0.0
    %vm284 = vcmp.gt.f32.partialorder %v242, 0.0
    %vm285 = vcmp.gt.f32.partialorder %v247, 0.0
    %vm286 = vcmp.gt.f32.partialorder %v252, 0.0
    %vm287 = vcmp.gt.f32.partialorder %v257, 0.0
    %vm288 = vcmp.gt.f32.partialorder %v262, 0.0
    %vm289 = vcmp.gt.f32.partialorder %v267, 0.0
    %vm290 = vcmp.gt.f32.partialorder %v272, 0.0
    %v291 = vmul.f32 %v197, 0.01
    %v292 = vmul.f32 %v202, 0.01
    %v293 = vmul.f32 %v207, 0.01
    %v294 = vmul.f32 %v212, 0.01
    %v295 = vmul.f32 %v217, 0.01
    %v296 = vmul.f32 %v222, 0.01
    %v297 = vmul.f32 %v227, 0.01
    %v298 = vmul.f32 %v232, 0.01
    %v299 = vmul.f32 %v237, 0.01
    %v300 = vmul.f32 %v242, 0.01
    %v301 = vmul.f32 %v247, 0.01
    %v302 = vmul.f32 %v252, 0.01
    %v303 = vmul.f32 %v257, 0.01
    %v304 = vmul.f32 %v262, 0.01
    %v305 = vmul.f32 %v267, 0.01
    %v306 = vmul.f32 %v272, 0.01
    %v307 = vsel %vm275, %v197, %v291
    %v308 = vsel %vm276, %v202, %v292
    %v309 = vsel %vm277, %v207, %v293
    %v310 = vsel %vm278, %v212, %v294
    %v311 = vsel %vm279, %v217, %v295
    %v312 = vsel %vm280, %v222, %v296
    %v313 = vsel %vm281, %v227, %v297
    %v314 = vsel %vm282, %v232, %v298
    %v315 = vsel %vm283, %v237, %v299
    %v316 = vsel %vm284, %v242, %v300
    %v317 = vsel %vm285, %v247, %v301
    %v318 = vsel %vm286, %v252, %v302
    %v319 = vsel %vm287, %v257, %v303
    %v320 = vsel %vm288, %v262, %v304
    %v321 = vsel %vm289, %v267, %v305
    %v322 = vsel %vm290, %v272, %v306
    %v323 = vld [vmem:[%s3] sm:$0x1]
    %v324 = vld [vmem:[%s4] sm:$0x1]
    %v325 = vadd.f32 %v307, %v308
    %v326 = vadd.f32 %v325, %v309
    %v327 = vadd.f32 %v326, %v310
    %v328 = vadd.f32 %v327, %v311
    %v329 = vadd.f32 %v328, %v312
    %v330 = vadd.f32 %v329, %v313
    %v331 = vadd.f32 %v330, %v314
    %v332 = vadd.f32 %v331, %v315
    %v333 = vadd.f32 %v332, %v316
    %v334 = vadd.f32 %v333, %v317
    %v335 = vadd.f32 %v334, %v318
    %v336 = vadd.f32 %v335, %v319
    %v337 = vadd.f32 %v336, %v320
    %v338 = vadd.f32 %v337, %v321
    %v339 = vadd.f32 %v338, %v322
    %v340 = vrot.slane %v339, 4
    %v341 = vadd.f32 %v339, %v340
    %v342 = vrot.slane %v341, 2
    %v343 = vadd.f32 %v341, %v342
    %v344 = vrot.slane %v343, 1
    %v345 = vadd.f32 %v343, %v344
    %v346 = vmul.f32 %v307, %v307
    %v347 = vmul.f32 %v308, %v308
    %v348 = vmul.f32 %v309, %v309
    %v349 = vmul.f32 %v310, %v310
    %v350 = vmul.f32 %v311, %v311
    %v351 = vmul.f32 %v312, %v312
    %v352 = vmul.f32 %v313, %v313
    %v353 = vmul.f32 %v314, %v314
    %v354 = vmul.f32 %v315, %v315
    %v355 = vmul.f32 %v316, %v316
    %v356 = vmul.f32 %v317, %v317
    %v357 = vmul.f32 %v318, %v318
    %v358 = vmul.f32 %v319, %v319
    %v359 = vmul.f32 %v320, %v320
    %v360 = vmul.f32 %v321, %v321
    %v361 = vmul.f32 %v322, %v322
    %v362 = vadd.f32 %v346, %v347
    %v363 = vadd.f32 %v362, %v348
    %v364 = vadd.f32 %v363, %v349
    %v365 = vadd.f32 %v364, %v350
    %v366 = vadd.f32 %v365, %v351
    %v367 = vadd.f32 %v366, %v352
    %v368 = vadd.f32 %v367, %v353
    %v369 = vadd.f32 %v368, %v354
    %v370 = vadd.f32 %v369, %v355
    %v371 = vadd.f32 %v370, %v356
    %v372 = vadd.f32 %v371, %v357
    %v373 = vadd.f32 %v372, %v358
    %v374 = vadd.f32 %v373, %v359
    %v375 = vadd.f32 %v374, %v360
    %v376 = vadd.f32 %v375, %v361
    %v377 = vrot.slane %v376, 4
    %v378 = vadd.f32 %v376, %v377
    %v379 = vrot.slane %v378, 2
    %v380 = vadd.f32 %v378, %v379
    %v381 = vrot.slane %v380, 1
    %v382 = vadd.f32 %v380, %v381
    %v383 = vrcp.pop 128.0
    %v384 = vmul.f32 %v345, %v383
    %v385 = vmul.f32 %v382, %v383
    %v386 = vmul.f32 %v384, %v384
    %v387 = vsub.f32 %v385, %v386
    %v388 = vmax.f32 %v387, 0.0
    %v389 = vadd.f32 %v388, 1e-05
    %v390 = vrsqrt.pop %v389
    %v391 = vmul.f32 %v323, %v390
    %v392 = vmul.f32 %v384, %v391
    %v393 = vsub.f32 %v324, %v392
    %v395 = vlaneseq
    %v396 = vshrl.u32 %v395, 7
    %v397 = vsub.s32 0, %v396
    %v398 = vrot.slane %v391, %v397
    %v400 = vmul.f32 %v307, %v398
    %v401 = vmul.f32 %v308, %v398
    %v402 = vmul.f32 %v309, %v398
    %v403 = vmul.f32 %v310, %v398
    %v404 = vmul.f32 %v311, %v398
    %v405 = vmul.f32 %v312, %v398
    %v406 = vmul.f32 %v313, %v398
    %v407 = vmul.f32 %v314, %v398
    %v408 = vmul.f32 %v315, %v398
    %v409 = vmul.f32 %v316, %v398
    %v410 = vmul.f32 %v317, %v398
    %v411 = vmul.f32 %v318, %v398
    %v412 = vmul.f32 %v319, %v398
    %v413 = vmul.f32 %v320, %v398
    %v414 = vmul.f32 %v321, %v398
    %v415 = vmul.f32 %v322, %v398
    %v417 = vlaneseq
    %v418 = vshrl.u32 %v417, 7
    %v419 = vsub.s32 0, %v418
    %v420 = vrot.slane %v393, %v419
    %v422 = vadd.f32 %v400, %v420
    %v423 = vadd.f32 %v401, %v420
    %v424 = vadd.f32 %v402, %v420
    %v425 = vadd.f32 %v403, %v420
    %v426 = vadd.f32 %v404, %v420
    %v427 = vadd.f32 %v405, %v420
    %v428 = vadd.f32 %v406, %v420
    %v429 = vadd.f32 %v407, %v420
    %v430 = vadd.f32 %v408, %v420
    %v431 = vadd.f32 %v409, %v420
    %v432 = vadd.f32 %v410, %v420
    %v433 = vadd.f32 %v411, %v420
    %v434 = vadd.f32 %v412, %v420
    %v435 = vadd.f32 %v413, %v420
    %v436 = vadd.f32 %v414, %v420
    %v437 = vadd.f32 %v415, %v420
    %v438 = vmax.f32 %v422, %v426
    %v439 = vmax.f32 %v423, %v427
    %v440 = vmax.f32 %v424, %v428
    %v441 = vmax.f32 %v425, %v429
    %v442 = vmax.f32 %v430, %v434
    %v443 = vmax.f32 %v431, %v435
    %v444 = vmax.f32 %v432, %v436
    %v445 = vmax.f32 %v433, %v437
    %v446 = vmax.f32 %v438, %v442
    %v447 = vmax.f32 %v439, %v443
    %v448 = vmax.f32 %v440, %v444
    %v449 = vmax.f32 %v441, %v445
    %v451 = vrot.slane %v446, 2
    %v454 = vrot.slane %v447, 6
    %v457 = vrot.slane %v448, 2
    %v460 = vrot.slane %v449, 6
    %vm462 = vcmask 1045504
    %v463 = vsel %vm462, 0.0, %v451
    %v464 = vsel %vm462, %v451, 0.0
    %vm465 = vcmask 1041408
    %v466 = vsel %vm465, 0.0, %v454
    %v467 = vsel %vm465, %v454, 0.0
    %v468 = vsel %vm462, %v467, %v457
    %v469 = vsel %vm462, %v457, 0.0
    %v470 = vsel %vm465, 0.0, %v460
    %v471 = vsel %vm465, %v460, 0.0
    %vm472 = vcmask 1043456
    %v473 = vsel %vm472, %v471, 0.0
    %v476 = vrot.slane %v463, 2
    %v477 = vrot.slane %v464, 2
    %v478 = vsel %vm462, %v476, %v477
    %v483 = vrot.slane %v466, 4
    %v484 = vrot.slane %v468, 4
    %v485 = vsel %vm472, %v483, %v484
    %v489 = vrot.slane %v468, 6
    %v490 = vrot.slane %v469, 6
    %v491 = vsel %vm465, %v489, %v490
    %v494 = vsel %vm465, %v463, %v478
    %v495 = vsel %vm472, %v477, %v483
    %v496 = vsel %vm462, %v485, %v489
    %v498 = vrot.slane 0.0, 2
    %v499 = vsel %vm462, %v498, %v476
    %v502 = vrot.slane %v463, 4
    %v503 = vrot.slane %v464, 4
    %v504 = vsel %vm472, %v502, %v503
    %v507 = vrot.slane %v466, 6
    %v508 = vsel %vm465, %v507, %v489
    %v513 = vrot.slane %v470, 2
    %v514 = vrot.slane %v473, 2
    %v515 = vsel %vm462, %v513, %v514
    %v518 = vsel %vm465, %v476, %v504
    %v519 = vsel %vm472, %v503, %v507
    %v520 = vsel %vm462, %v508, %v468
    %v522 = vrot.slane %v473, 4
    %v523 = vrot.slane 0.0, 4
    %v524 = vsel %vm472, %v522, %v523
    %v527 = vsel %vm465, %v503, %v507
    %v528 = vsel %vm472, %v508, %v468
    %v529 = vsel %vm462, %v469, %v513
    %v530 = vrot.slane %v463, 6
    %v531 = vrot.slane %v464, 6
    %v532 = vsel %vm465, %v530, %v531
    %v535 = vrot.slane %v468, 2
    %v536 = vrot.slane %v469, 2
    %v537 = vsel %vm462, %v535, %v536
    %v540 = vrot.slane %v470, 4
    %v541 = vsel %vm472, %v540, %v522
    %v544 = vrot.slane %v473, 6
    %v545 = vrot.slane 0.0, 6
    %v546 = vsel %vm465, %v544, %v545
    %v549 = vsel %vm465, %v531, %v466
    %v550 = vsel %vm472, %v468, %v537
    %v551 = vsel %vm462, %v536, %v540
    %v552 = vpack.c.bf16 %v494, 0.0
    %v553 = vpack.c.bf16 %v518, %v499
    %v554 = vpack.c.bf16 %v527, %v504
    %v555 = vpack.c.bf16 %v549, %v532
    %v556 = vpack.c.bf16 %v496, %v495
    %v557 = vpack.c.bf16 %v520, %v519
    %v558 = vpack.c.bf16 %v529, %v528
    %v559 = vpack.c.bf16 %v551, %v550
    %v560 = vpack.c.bf16 %v470, %v491
    %v561 = vpack.c.bf16 %v515, %v469
    %v562 = vpack.c.bf16 %v524, %v515
    %v563 = vpack.c.bf16 %v546, %v541
    %v564 = vpack.c.bf16 %v473, %v473
    %v565 = vpack.c.bf16 %v514, %v514
    %v566 = vpack.c.bf16 %v523, %v523
    %v567 = vpack.c.bf16 %v545, %v545
    %v568 = vld [vmem:[%s5] sm:$0xff]
    %v569 = vld [vmem:[%s5 + $0x8] sm:$0xff]
    %v570 = vld [vmem:[%s5 + $0x10] sm:$0xff]
    %v571 = vld [vmem:[%s5 + $0x18] sm:$0xff]
    %v572 = vld [vmem:[%s5 + $0x20] sm:$0xff]
    %v573 = vld [vmem:[%s5 + $0x28] sm:$0xff]
    %v574 = vld [vmem:[%s5 + $0x30] sm:$0xff]
    %v575 = vld [vmem:[%s5 + $0x38] sm:$0xff]
    %v576 = vld [vmem:[%s5 + $0x40] sm:$0xff]
    %v577 = vld [vmem:[%s5 + $0x48] sm:$0xff]
    %v578 = vld [vmem:[%s5 + $0x50] sm:$0xff]
    %v579 = vld [vmem:[%s5 + $0x58] sm:$0xff]
    %v580 = vld [vmem:[%s5 + $0x60] sm:$0xff]
    %v581 = vld [vmem:[%s5 + $0x68] sm:$0xff]
    %v582 = vld [vmem:[%s5 + $0x70] sm:$0xff]
    %v583 = vld [vmem:[%s5 + $0x78] sm:$0xff]
    %v584 = vld [vmem:[%s5 + $0x80] sm:$0xff]
    %v585 = vld [vmem:[%s5 + $0x88] sm:$0xff]
    %v586 = vld [vmem:[%s5 + $0x90] sm:$0xff]
    %v587 = vld [vmem:[%s5 + $0x98] sm:$0xff]
    %v588 = vld [vmem:[%s5 + $0xa0] sm:$0xff]
    %v589 = vld [vmem:[%s5 + $0xa8] sm:$0xff]
    %v590 = vld [vmem:[%s5 + $0xb0] sm:$0xff]
    %v591 = vld [vmem:[%s5 + $0xb8] sm:$0xff]
    %v592 = vld [vmem:[%s5 + $0xc0] sm:$0xff]
    %v593 = vld [vmem:[%s5 + $0xc8] sm:$0xff]
    %v594 = vld [vmem:[%s5 + $0xd0] sm:$0xff]
    %v595 = vld [vmem:[%s5 + $0xd8] sm:$0xff]
    %v596 = vld [vmem:[%s5 + $0xe0] sm:$0xff]
    %v597 = vld [vmem:[%s5 + $0xe8] sm:$0xff]
    %v598 = vld [vmem:[%s5 + $0xf0] sm:$0xff]
    %v599 = vld [vmem:[%s5 + $0xf8] sm:$0xff]
    %v600 = vld [vmem:[%s5 + $0x100] sm:$0xff]
    %v601 = vld [vmem:[%s5 + $0x108] sm:$0xff]
    %v602 = vld [vmem:[%s5 + $0x110] sm:$0xff]
    %v603 = vld [vmem:[%s5 + $0x118] sm:$0xff]
    %v604 = vld [vmem:[%s5 + $0x120] sm:$0xff]
    %v605 = vld [vmem:[%s5 + $0x128] sm:$0xff]
    %v606 = vld [vmem:[%s5 + $0x130] sm:$0xff]
    %v607 = vld [vmem:[%s5 + $0x138] sm:$0xff]
    %v608 = vld [vmem:[%s5 + $0x140] sm:$0xff]
    %v609 = vld [vmem:[%s5 + $0x148] sm:$0xff]
    %v610 = vld [vmem:[%s5 + $0x150] sm:$0xff]
    %v611 = vld [vmem:[%s5 + $0x158] sm:$0xff]
    %v612 = vld [vmem:[%s5 + $0x160] sm:$0xff]
    %v613 = vld [vmem:[%s5 + $0x168] sm:$0xff]
    %v614 = vld [vmem:[%s5 + $0x170] sm:$0xff]
    %v615 = vld [vmem:[%s5 + $0x178] sm:$0xff]
    %v616 = vld [vmem:[%s5 + $0x180] sm:$0xff]
    %v617 = vld [vmem:[%s5 + $0x188] sm:$0xff]
    %v618 = vld [vmem:[%s5 + $0x190] sm:$0xff]
    %v619 = vld [vmem:[%s5 + $0x198] sm:$0xff]
    %v620 = vld [vmem:[%s5 + $0x1a0] sm:$0xff]
    %v621 = vld [vmem:[%s5 + $0x1a8] sm:$0xff]
    %v622 = vld [vmem:[%s5 + $0x1b0] sm:$0xff]
    %v623 = vld [vmem:[%s5 + $0x1b8] sm:$0xff]
    %v624 = vld [vmem:[%s5 + $0x1c0] sm:$0xff]
    %v625 = vld [vmem:[%s5 + $0x1c8] sm:$0xff]
    %v626 = vld [vmem:[%s5 + $0x1d0] sm:$0xff]
    %v627 = vld [vmem:[%s5 + $0x1d8] sm:$0xff]
    %v628 = vld [vmem:[%s5 + $0x1e0] sm:$0xff]
    %v629 = vld [vmem:[%s5 + $0x1e8] sm:$0xff]
    %v630 = vld [vmem:[%s5 + $0x1f0] sm:$0xff]
    %v631 = vld [vmem:[%s5 + $0x1f8] sm:$0xff]
    %v632 = vld [vmem:[%s6] sm:$0x3]
    %v634 = vlaneseq
    %v635 = vshrl.u32 %v634, 7
    %v636 = vsub.s32 0, %v635
    %v637 = vrot.slane %v632, %v636
    %v638 = vlaneseq
    %v639 = vshrl.u32 %v638, 7
    %v640 = vsub.s32 1, %v639
    %v641 = vrot.slane %v632, %v640
    %v708 = vunpack.c.l.b16 %v568
    %v709 = vunpack.c.h.b16 %v568
    %v710 = vunpack.c.l.b16 %v569
    %v711 = vunpack.c.h.b16 %v569
    %v712 = vunpack.c.l.b16 %v570
    %v713 = vunpack.c.h.b16 %v570
    %v714 = vunpack.c.l.b16 %v571
    %v715 = vunpack.c.h.b16 %v571
    %v716 = vunpack.c.l.b16 %v572
    %v717 = vunpack.c.h.b16 %v572
    %v718 = vunpack.c.l.b16 %v573
    %v719 = vunpack.c.h.b16 %v573
    %v720 = vunpack.c.l.b16 %v574
    %v721 = vunpack.c.h.b16 %v574
    %v722 = vunpack.c.l.b16 %v575
    %v723 = vunpack.c.h.b16 %v575
    %v724 = vunpack.c.l.b16 %v576
    %v725 = vunpack.c.h.b16 %v576
    %v726 = vunpack.c.l.b16 %v577
    %v727 = vunpack.c.h.b16 %v577
    %v728 = vunpack.c.l.b16 %v578
    %v729 = vunpack.c.h.b16 %v578
    %v730 = vunpack.c.l.b16 %v579
    %v731 = vunpack.c.h.b16 %v579
    %v732 = vunpack.c.l.b16 %v580
    %v733 = vunpack.c.h.b16 %v580
    %v734 = vunpack.c.l.b16 %v581
    %v735 = vunpack.c.h.b16 %v581
    %v736 = vunpack.c.l.b16 %v582
    %v737 = vunpack.c.h.b16 %v582
    %v738 = vunpack.c.l.b16 %v583
    %v739 = vunpack.c.h.b16 %v583
    %v740 = vunpack.c.l.b16 %v584
    %v741 = vunpack.c.h.b16 %v584
    %v742 = vunpack.c.l.b16 %v585
    %v743 = vunpack.c.h.b16 %v585
    %v744 = vunpack.c.l.b16 %v586
    %v745 = vunpack.c.h.b16 %v586
    %v746 = vunpack.c.l.b16 %v587
    %v747 = vunpack.c.h.b16 %v587
    %v748 = vunpack.c.l.b16 %v588
    %v749 = vunpack.c.h.b16 %v588
    %v750 = vunpack.c.l.b16 %v589
    %v751 = vunpack.c.h.b16 %v589
    %v752 = vunpack.c.l.b16 %v590
    %v753 = vunpack.c.h.b16 %v590
    %v754 = vunpack.c.l.b16 %v591
    %v755 = vunpack.c.h.b16 %v591
    %v756 = vunpack.c.l.b16 %v592
    %v757 = vunpack.c.h.b16 %v592
    %v758 = vunpack.c.l.b16 %v593
    %v759 = vunpack.c.h.b16 %v593
    %v760 = vunpack.c.l.b16 %v594
    %v761 = vunpack.c.h.b16 %v594
    %v762 = vunpack.c.l.b16 %v595
    %v763 = vunpack.c.h.b16 %v595
    %v764 = vunpack.c.l.b16 %v596
    %v765 = vunpack.c.h.b16 %v596
    %v766 = vunpack.c.l.b16 %v597
    %v767 = vunpack.c.h.b16 %v597
    %v768 = vunpack.c.l.b16 %v598
    %v769 = vunpack.c.h.b16 %v598
    %v770 = vunpack.c.l.b16 %v599
    %v771 = vunpack.c.h.b16 %v599
    %v772 = vunpack.c.l.b16 %v600
    %v773 = vunpack.c.h.b16 %v600
    %v774 = vunpack.c.l.b16 %v601
    %v775 = vunpack.c.h.b16 %v601
    %v776 = vunpack.c.l.b16 %v602
    %v777 = vunpack.c.h.b16 %v602
    %v778 = vunpack.c.l.b16 %v603
    %v779 = vunpack.c.h.b16 %v603
    %v780 = vunpack.c.l.b16 %v604
    %v781 = vunpack.c.h.b16 %v604
    %v782 = vunpack.c.l.b16 %v605
    %v783 = vunpack.c.h.b16 %v605
    %v784 = vunpack.c.l.b16 %v606
    %v785 = vunpack.c.h.b16 %v606
    %v786 = vunpack.c.l.b16 %v607
    %v787 = vunpack.c.h.b16 %v607
    %v788 = vunpack.c.l.b16 %v608
    %v789 = vunpack.c.h.b16 %v608
    %v790 = vunpack.c.l.b16 %v609
    %v791 = vunpack.c.h.b16 %v609
    %v792 = vunpack.c.l.b16 %v610
    %v793 = vunpack.c.h.b16 %v610
    %v794 = vunpack.c.l.b16 %v611
    %v795 = vunpack.c.h.b16 %v611
    %v796 = vunpack.c.l.b16 %v612
    %v797 = vunpack.c.h.b16 %v612
    %v798 = vunpack.c.l.b16 %v613
    %v799 = vunpack.c.h.b16 %v613
    %v800 = vunpack.c.l.b16 %v614
    %v801 = vunpack.c.h.b16 %v614
    %v802 = vunpack.c.l.b16 %v615
    %v803 = vunpack.c.h.b16 %v615
    %v804 = vunpack.c.l.b16 %v616
    %v805 = vunpack.c.h.b16 %v616
    %v806 = vunpack.c.l.b16 %v617
    %v807 = vunpack.c.h.b16 %v617
    %v808 = vunpack.c.l.b16 %v618
    %v809 = vunpack.c.h.b16 %v618
    %v810 = vunpack.c.l.b16 %v619
    %v811 = vunpack.c.h.b16 %v619
    %v812 = vunpack.c.l.b16 %v620
    %v813 = vunpack.c.h.b16 %v620
    %v814 = vunpack.c.l.b16 %v621
    %v815 = vunpack.c.h.b16 %v621
    %v816 = vunpack.c.l.b16 %v622
    %v817 = vunpack.c.h.b16 %v622
    %v818 = vunpack.c.l.b16 %v623
    %v819 = vunpack.c.h.b16 %v623
    %v820 = vunpack.c.l.b16 %v624
    %v821 = vunpack.c.h.b16 %v624
    %v822 = vunpack.c.l.b16 %v625
    %v823 = vunpack.c.h.b16 %v625
    %v824 = vunpack.c.l.b16 %v626
    %v825 = vunpack.c.h.b16 %v626
    %v826 = vunpack.c.l.b16 %v627
    %v827 = vunpack.c.h.b16 %v627
    %v828 = vunpack.c.l.b16 %v628
    %v829 = vunpack.c.h.b16 %v628
    %v830 = vunpack.c.l.b16 %v629
    %v831 = vunpack.c.h.b16 %v629
    %v832 = vunpack.c.l.b16 %v630
    %v833 = vunpack.c.h.b16 %v630
    %v834 = vunpack.c.l.b16 %v631
    %v835 = vunpack.c.h.b16 %v631
    %v836 = vpack.c.b16 %v710, %v708
    %v837 = vpack.c.b16 %v711, %v709
    %v838 = vpack.c.b16 %v714, %v712
    %v839 = vpack.c.b16 %v715, %v713
    %v840 = vpack.c.b16 %v718, %v716
    %v841 = vpack.c.b16 %v719, %v717
    %v842 = vpack.c.b16 %v722, %v720
    %v843 = vpack.c.b16 %v723, %v721
    %v844 = vpack.c.b16 %v726, %v724
    %v845 = vpack.c.b16 %v727, %v725
    %v846 = vpack.c.b16 %v730, %v728
    %v847 = vpack.c.b16 %v731, %v729
    %v848 = vpack.c.b16 %v734, %v732
    %v849 = vpack.c.b16 %v735, %v733
    %v850 = vpack.c.b16 %v738, %v736
    %v851 = vpack.c.b16 %v739, %v737
    %v852 = vpack.c.b16 %v742, %v740
    %v853 = vpack.c.b16 %v743, %v741
    %v854 = vpack.c.b16 %v746, %v744
    %v855 = vpack.c.b16 %v747, %v745
    %v856 = vpack.c.b16 %v750, %v748
    %v857 = vpack.c.b16 %v751, %v749
    %v858 = vpack.c.b16 %v754, %v752
    %v859 = vpack.c.b16 %v755, %v753
    %v860 = vpack.c.b16 %v758, %v756
    %v861 = vpack.c.b16 %v759, %v757
    %v862 = vpack.c.b16 %v762, %v760
    %v863 = vpack.c.b16 %v763, %v761
    %v864 = vpack.c.b16 %v766, %v764
    %v865 = vpack.c.b16 %v767, %v765
    %v866 = vpack.c.b16 %v770, %v768
    %v867 = vpack.c.b16 %v771, %v769
    %v868 = vpack.c.b16 %v774, %v772
    %v869 = vpack.c.b16 %v775, %v773
    %v870 = vpack.c.b16 %v778, %v776
    %v871 = vpack.c.b16 %v779, %v777
    %v872 = vpack.c.b16 %v782, %v780
    %v873 = vpack.c.b16 %v783, %v781
    %v874 = vpack.c.b16 %v786, %v784
    %v875 = vpack.c.b16 %v787, %v785
    %v876 = vpack.c.b16 %v790, %v788
    %v877 = vpack.c.b16 %v791, %v789
    %v878 = vpack.c.b16 %v794, %v792
    %v879 = vpack.c.b16 %v795, %v793
    %v880 = vpack.c.b16 %v798, %v796
    %v881 = vpack.c.b16 %v799, %v797
    %v882 = vpack.c.b16 %v802, %v800
    %v883 = vpack.c.b16 %v803, %v801
    %v884 = vpack.c.b16 %v806, %v804
    %v885 = vpack.c.b16 %v807, %v805
    %v886 = vpack.c.b16 %v810, %v808
    %v887 = vpack.c.b16 %v811, %v809
    %v888 = vpack.c.b16 %v814, %v812
    %v889 = vpack.c.b16 %v815, %v813
    %v890 = vpack.c.b16 %v818, %v816
    %v891 = vpack.c.b16 %v819, %v817
    %v892 = vpack.c.b16 %v822, %v820
    %v893 = vpack.c.b16 %v823, %v821
    %v894 = vpack.c.b16 %v826, %v824
    %v895 = vpack.c.b16 %v827, %v825
    %v896 = vpack.c.b16 %v830, %v828
    %v897 = vpack.c.b16 %v831, %v829
    %v898 = vpack.c.b16 %v834, %v832
    %v899 = vpack.c.b16 %v835, %v833
    %964 = vmatprep.subr.bf16.mxu0 %v837
    %965 = vmatpush1.bf16.msra.mxu0 %v836
    %966 = vmatprep.subr.bf16.mxu0 %v839
    %967 = vmatpush1.bf16.msra.mxu0 %v838
    %968 = vmatprep.subr.bf16.mxu0 %v841
    %969 = vmatpush1.bf16.msra.mxu0 %v840
    %970 = vmatprep.subr.bf16.mxu0 %v843
    %971 = vmatpush1.bf16.msra.mxu0 %v842
    %972 = vmatprep.subr.bf16.mxu0 %v845
    %973 = vmatpush1.bf16.msra.mxu0 %v844
    %974 = vmatprep.subr.bf16.mxu0 %v847
    %975 = vmatpush1.bf16.msra.mxu0 %v846
    %976 = vmatprep.subr.bf16.mxu0 %v849
    %977 = vmatpush1.bf16.msra.mxu0 %v848
    %978 = vmatprep.subr.bf16.mxu0 %v851
    %979 = vmatpush1.bf16.msra.mxu0 %v850
    %980 = vmatprep.subr.bf16.mxu0 %v853
    %981 = vmatpush1.bf16.msra.mxu0 %v852
    %982 = vmatprep.subr.bf16.mxu0 %v855
    %983 = vmatpush1.bf16.msra.mxu0 %v854
    %984 = vmatprep.subr.bf16.mxu0 %v857
    %985 = vmatpush1.bf16.msra.mxu0 %v856
    %986 = vmatprep.subr.bf16.mxu0 %v859
    %987 = vmatpush1.bf16.msra.mxu0 %v858
    %988 = vmatprep.subr.bf16.mxu0 %v861
    %989 = vmatpush1.bf16.msra.mxu0 %v860
    %990 = vmatprep.subr.bf16.mxu0 %v863
    %991 = vmatpush1.bf16.msra.mxu0 %v862
    %992 = vmatprep.subr.bf16.mxu0 %v865
    %993 = vmatpush1.bf16.msra.mxu0 %v864
    %994 = vmatprep.subr.bf16.mxu0 %v867
    %995 = vmatpush1.bf16.msra.mxu0 %v866
    %996 = vmatprep.mubr.bf16.mxu0 %v553
    %997 = vmatmul.mubr.bf16.gmra.mrb[0].mxu0 %v552
    %v998 = vpop.f32.mrb[0].mxu0
    %v999 = vadd.f32 %v637, %v998
    %v1000 = vpop.f32.mrb[0].mxu0
    %v1001 = vadd.f32 %v641, %v1000
    %v1002 = vpop.f32.mrb[0].mxu0
    %v1003 = vadd.f32 %v637, %v1002
    %v1004 = vpop.f32.mrb[0].mxu0
    %v1005 = vadd.f32 %v641, %v1004
    %1006 = vmatprep.mubr.bf16.mxu0 %v557
    %1007 = vmatmul.mubr.bf16.gmra.mrb[0].mxu0 %v556
    %v1008 = vpop.f32.mrb[0].mxu0
    %v1009 = vadd.f32 %v637, %v1008
    %v1010 = vpop.f32.mrb[0].mxu0
    %v1011 = vadd.f32 %v641, %v1010
    %v1012 = vpop.f32.mrb[0].mxu0
    %v1013 = vadd.f32 %v637, %v1012
    %v1014 = vpop.f32.mrb[0].mxu0
    %v1015 = vadd.f32 %v641, %v1014
    %1016 = vmatprep.mubr.bf16.mxu0 %v561
    %1017 = vmatmul.mubr.bf16.gmra.mrb[0].mxu0 %v560
    %v1018 = vpop.f32.mrb[0].mxu0
    %v1019 = vadd.f32 %v637, %v1018
    %v1020 = vpop.f32.mrb[0].mxu0
    %v1021 = vadd.f32 %v641, %v1020
    %v1022 = vpop.f32.mrb[0].mxu0
    %v1023 = vadd.f32 %v637, %v1022
    %v1024 = vpop.f32.mrb[0].mxu0
    %v1025 = vadd.f32 %v641, %v1024
    %1026 = vmatprep.mubr.bf16.mxu0 %v565
    %1027 = vmatmul.mubr.bf16.gmra.mrb[0].mxu0 %v564
    %v1028 = vpop.f32.mrb[0].mxu0
    %v1029 = vadd.f32 %v637, %v1028
    %v1030 = vpop.f32.mrb[0].mxu0
    %v1031 = vadd.f32 %v641, %v1030
    %v1032 = vpop.f32.mrb[0].mxu0
    %v1033 = vpop.f32.mrb[0].mxu0
    %1034 = vdwg.mxu0
    %1035 = vmatprep.subr.bf16.mxu0 %v869
    %1036 = vmatpush1.bf16.msra.mxu0 %v868
    %1037 = vmatprep.subr.bf16.mxu0 %v871
    %1038 = vmatpush1.bf16.msra.mxu0 %v870
    %1039 = vmatprep.subr.bf16.mxu0 %v873
    %1040 = vmatpush1.bf16.msra.mxu0 %v872
    %1041 = vmatprep.subr.bf16.mxu0 %v875
    %1042 = vmatpush1.bf16.msra.mxu0 %v874
    %1043 = vmatprep.subr.bf16.mxu0 %v877
    %1044 = vmatpush1.bf16.msra.mxu0 %v876
    %1045 = vmatprep.subr.bf16.mxu0 %v879
    %1046 = vmatpush1.bf16.msra.mxu0 %v878
    %1047 = vmatprep.subr.bf16.mxu0 %v881
    %1048 = vmatpush1.bf16.msra.mxu0 %v880
    %1049 = vmatprep.subr.bf16.mxu0 %v883
    %1050 = vmatpush1.bf16.msra.mxu0 %v882
    %1051 = vmatprep.subr.bf16.mxu0 %v885
    %1052 = vmatpush1.bf16.msra.mxu0 %v884
    %1053 = vmatprep.subr.bf16.mxu0 %v887
    %1054 = vmatpush1.bf16.msra.mxu0 %v886
    %1055 = vmatprep.subr.bf16.mxu0 %v889
    %1056 = vmatpush1.bf16.msra.mxu0 %v888
    %1057 = vmatprep.subr.bf16.mxu0 %v891
    %1058 = vmatpush1.bf16.msra.mxu0 %v890
    %1059 = vmatprep.subr.bf16.mxu0 %v893
    %1060 = vmatpush1.bf16.msra.mxu0 %v892
    %1061 = vmatprep.subr.bf16.mxu0 %v895
    %1062 = vmatpush1.bf16.msra.mxu0 %v894
    %1063 = vmatprep.subr.bf16.mxu0 %v897
    %1064 = vmatpush1.bf16.msra.mxu0 %v896
    %1065 = vmatprep.subr.bf16.mxu0 %v899
    %1066 = vmatpush1.bf16.msra.mxu0 %v898
    %1067 = vmatprep.mubr.bf16.mxu0 %v555
    %1068 = vmatmul.mubr.bf16.gmra.mrb[0].mxu0 %v554
    %v1069 = vpop.f32.mrb[0].mxu0
    %v1070 = vadd.f32 %v999, %v1069
    %v1071 = vpop.f32.mrb[0].mxu0
    %v1072 = vadd.f32 %v1001, %v1071
    %v1073 = vpop.f32.mrb[0].mxu0
    %v1074 = vadd.f32 %v1003, %v1073
    %v1075 = vpop.f32.mrb[0].mxu0
    %v1076 = vadd.f32 %v1005, %v1075
    %1077 = vmatprep.mubr.bf16.mxu0 %v559
    %1078 = vmatmul.mubr.bf16.gmra.mrb[0].mxu0 %v558
    %v1079 = vpop.f32.mrb[0].mxu0
    %v1080 = vadd.f32 %v1009, %v1079
    %v1081 = vpop.f32.mrb[0].mxu0
    %v1082 = vadd.f32 %v1011, %v1081
    %v1083 = vpop.f32.mrb[0].mxu0
    %v1084 = vadd.f32 %v1013, %v1083
    %v1085 = vpop.f32.mrb[0].mxu0
    %v1086 = vadd.f32 %v1015, %v1085
    %1087 = vmatprep.mubr.bf16.mxu0 %v563
    %1088 = vmatmul.mubr.bf16.gmra.mrb[0].mxu0 %v562
    %v1089 = vpop.f32.mrb[0].mxu0
    %v1090 = vadd.f32 %v1019, %v1089
    %v1091 = vpop.f32.mrb[0].mxu0
    %v1092 = vadd.f32 %v1021, %v1091
    %v1093 = vpop.f32.mrb[0].mxu0
    %v1094 = vadd.f32 %v1023, %v1093
    %v1095 = vpop.f32.mrb[0].mxu0
    %v1096 = vadd.f32 %v1025, %v1095
    %1097 = vmatprep.mubr.bf16.mxu0 %v567
    %1098 = vmatmul.mubr.bf16.gmra.mrb[0].mxu0 %v566
    %v1099 = vpop.f32.mrb[0].mxu0
    %v1100 = vadd.f32 %v1029, %v1099
    %v1101 = vpop.f32.mrb[0].mxu0
    %v1102 = vadd.f32 %v1031, %v1101
    %v1103 = vpop.f32.mrb[0].mxu0
    %v1104 = vpop.f32.mrb[0].mxu0
    %1105 = vdwg.mxu0
    %vm1106 = vcmp.gt.f32.partialorder %v1070, 0.0
    %vm1107 = vcmp.gt.f32.partialorder %v1072, 0.0
    %vm1108 = vcmp.gt.f32.partialorder %v1074, 0.0
    %vm1109 = vcmp.gt.f32.partialorder %v1076, 0.0
    %vm1110 = vcmp.gt.f32.partialorder %v1080, 0.0
    %vm1111 = vcmp.gt.f32.partialorder %v1082, 0.0
    %vm1112 = vcmp.gt.f32.partialorder %v1084, 0.0
    %vm1113 = vcmp.gt.f32.partialorder %v1086, 0.0
    %vm1114 = vcmp.gt.f32.partialorder %v1090, 0.0
    %vm1115 = vcmp.gt.f32.partialorder %v1092, 0.0
    %vm1116 = vcmp.gt.f32.partialorder %v1094, 0.0
    %vm1117 = vcmp.gt.f32.partialorder %v1096, 0.0
    %vm1118 = vcmp.gt.f32.partialorder %v1100, 0.0
    %vm1119 = vcmp.gt.f32.partialorder %v1102, 0.0
    %v1120 = vmul.f32 %v1070, 0.01
    %v1121 = vmul.f32 %v1072, 0.01
    %v1122 = vmul.f32 %v1074, 0.01
    %v1123 = vmul.f32 %v1076, 0.01
    %v1124 = vmul.f32 %v1080, 0.01
    %v1125 = vmul.f32 %v1082, 0.01
    %v1126 = vmul.f32 %v1084, 0.01
    %v1127 = vmul.f32 %v1086, 0.01
    %v1128 = vmul.f32 %v1090, 0.01
    %v1129 = vmul.f32 %v1092, 0.01
    %v1130 = vmul.f32 %v1094, 0.01
    %v1131 = vmul.f32 %v1096, 0.01
    %v1132 = vmul.f32 %v1100, 0.01
    %v1133 = vmul.f32 %v1102, 0.01
    %v1134 = vsel %vm1106, %v1070, %v1120
    %v1135 = vsel %vm1107, %v1072, %v1121
    %v1136 = vsel %vm1108, %v1074, %v1122
    %v1137 = vsel %vm1109, %v1076, %v1123
    %v1138 = vsel %vm1110, %v1080, %v1124
    %v1139 = vsel %vm1111, %v1082, %v1125
    %v1140 = vsel %vm1112, %v1084, %v1126
    %v1141 = vsel %vm1113, %v1086, %v1127
    %v1142 = vsel %vm1114, %v1090, %v1128
    %v1143 = vsel %vm1115, %v1092, %v1129
    %v1144 = vsel %vm1116, %v1094, %v1130
    %v1145 = vsel %vm1117, %v1096, %v1131
    %v1146 = vsel %vm1118, %v1100, %v1132
    %v1147 = vsel %vm1119, %v1102, %v1133
    %v1148 = vld [vmem:[%s7] sm:$0x3]
    %v1149 = vld [vmem:[%s8] sm:$0x3]
    %v1150 = vadd.f32 %v1134, %v1136
    %v1151 = vadd.f32 %v1150, %v1138
    %v1152 = vadd.f32 %v1151, %v1140
    %v1153 = vadd.f32 %v1152, %v1142
    %v1154 = vadd.f32 %v1153, %v1144
    %v1155 = vsel %vm465, %v1146, 0.0
    %v1156 = vadd.f32 %v1154, %v1155
    %v1157 = vrot.slane %v1156, 4
    %v1158 = vadd.f32 %v1156, %v1157
    %v1159 = vrot.slane %v1158, 2
    %v1160 = vadd.f32 %v1158, %v1159
    %v1161 = vrot.slane %v1160, 1
    %v1162 = vadd.f32 %v1160, %v1161
    %v1163 = vadd.f32 %v1135, %v1137
    %v1164 = vadd.f32 %v1163, %v1139
    %v1165 = vadd.f32 %v1164, %v1141
    %v1166 = vadd.f32 %v1165, %v1143
    %v1167 = vadd.f32 %v1166, %v1145
    %v1168 = vsel %vm465, %v1147, 0.0
    %v1169 = vadd.f32 %v1167, %v1168
    %v1170 = vrot.slane %v1169, 4
    %v1171 = vadd.f32 %v1169, %v1170
    %v1172 = vrot.slane %v1171, 2
    %v1173 = vadd.f32 %v1171, %v1172
    %v1174 = vrot.slane %v1173, 1
    %v1175 = vadd.f32 %v1173, %v1174
    %v1176 = vmul.f32 %v1134, %v1134
    %v1177 = vmul.f32 %v1135, %v1135
    %v1178 = vmul.f32 %v1136, %v1136
    %v1179 = vmul.f32 %v1137, %v1137
    %v1180 = vmul.f32 %v1138, %v1138
    %v1181 = vmul.f32 %v1139, %v1139
    %v1182 = vmul.f32 %v1140, %v1140
    %v1183 = vmul.f32 %v1141, %v1141
    %v1184 = vmul.f32 %v1142, %v1142
    %v1185 = vmul.f32 %v1143, %v1143
    %v1186 = vmul.f32 %v1144, %v1144
    %v1187 = vmul.f32 %v1145, %v1145
    %v1188 = vmul.f32 %v1146, %v1146
    %v1189 = vmul.f32 %v1147, %v1147
    %v1190 = vadd.f32 %v1176, %v1178
    %v1191 = vadd.f32 %v1190, %v1180
    %v1192 = vadd.f32 %v1191, %v1182
    %v1193 = vadd.f32 %v1192, %v1184
    %v1194 = vadd.f32 %v1193, %v1186
    %v1195 = vsel %vm465, %v1188, 0.0
    %v1196 = vadd.f32 %v1194, %v1195
    %v1197 = vrot.slane %v1196, 4
    %v1198 = vadd.f32 %v1196, %v1197
    %v1199 = vrot.slane %v1198, 2
    %v1200 = vadd.f32 %v1198, %v1199
    %v1201 = vrot.slane %v1200, 1
    %v1202 = vadd.f32 %v1200, %v1201
    %v1203 = vadd.f32 %v1177, %v1179
    %v1204 = vadd.f32 %v1203, %v1181
    %v1205 = vadd.f32 %v1204, %v1183
    %v1206 = vadd.f32 %v1205, %v1185
    %v1207 = vadd.f32 %v1206, %v1187
    %v1208 = vsel %vm465, %v1189, 0.0
    %v1209 = vadd.f32 %v1207, %v1208
    %v1210 = vrot.slane %v1209, 4
    %v1211 = vadd.f32 %v1209, %v1210
    %v1212 = vrot.slane %v1211, 2
    %v1213 = vadd.f32 %v1211, %v1212
    %v1214 = vrot.slane %v1213, 1
    %v1215 = vadd.f32 %v1213, %v1214
    %v1216 = vrcp.pop 50.0
    %v1217 = vmul.f32 %v1162, %v1216
    %v1218 = vmul.f32 %v1175, %v1216
    %v1219 = vmul.f32 %v1202, %v1216
    %v1220 = vmul.f32 %v1215, %v1216
    %v1221 = vmul.f32 %v1217, %v1217
    %v1222 = vmul.f32 %v1218, %v1218
    %v1223 = vsub.f32 %v1219, %v1221
    %v1224 = vsub.f32 %v1220, %v1222
    %v1225 = vmax.f32 %v1223, 0.0
    %v1226 = vmax.f32 %v1224, 0.0
    %v1227 = vadd.f32 %v1225, 1e-05
    %v1228 = vadd.f32 %v1226, 1e-05
    %v1229 = vrsqrt.pop %v1227
    %v1230 = vrsqrt.pop %v1228
    %v1233 = vcombine.low %v1229, %v1230
    %v1235 = vunpack.c.l.s4 1966171168
    %v1236 = vunpack.c.0.s8 %v1235
    %v1237 = vlaneseq
    %v1238 = vshrl.u32 %v1237, 7
    %v1239 = vsub.s32 %v1236, %v1238
    %v1240 = vrot.slane %v1233, %v1239
    %v1242 = vunpack.c.l.s4 1966171168
    %v1243 = vunpack.c.0.s8 %v1242
    %v1244 = vlaneseq
    %v1245 = vshrl.u32 %v1244, 7
    %v1246 = vsub.s32 %v1243, %v1245
    %v1247 = vrot.slane %v1240, %v1246
    %v1249 = vmul.f32 %v1148, %v1247
    %v1251 = vlaneseq
    %v1252 = vshrl.u32 %v1251, 7
    %v1253 = vsub.s32 0, %v1252
    %v1254 = vrot.slane %v1249, %v1253
    %v1255 = vlaneseq
    %v1256 = vshrl.u32 %v1255, 7
    %v1257 = vsub.s32 1, %v1256
    %v1258 = vrot.slane %v1249, %v1257
    %v1261 = vmul.f32 %v1217, %v1254
    %v1262 = vmul.f32 %v1218, %v1258
    %v1265 = vcombine.low %v1261, %v1262
    %v1267 = vunpack.c.l.s4 1966171168
    %v1268 = vunpack.c.0.s8 %v1267
    %v1269 = vlaneseq
    %v1270 = vshrl.u32 %v1269, 7
    %v1271 = vsub.s32 %v1268, %v1270
    %v1272 = vrot.slane %v1265, %v1271
    %v1274 = vunpack.c.l.s4 1966171168
    %v1275 = vunpack.c.0.s8 %v1274
    %v1276 = vlaneseq
    %v1277 = vshrl.u32 %v1276, 7
    %v1278 = vsub.s32 %v1275, %v1277
    %v1279 = vrot.slane %v1272, %v1278
    %v1281 = vsub.f32 %v1149, %v1279
    %v1282 = vmul.f32 %v1134, %v1254
    %v1283 = vmul.f32 %v1135, %v1258
    %v1284 = vmul.f32 %v1136, %v1254
    %v1285 = vmul.f32 %v1137, %v1258
    %v1286 = vmul.f32 %v1138, %v1254
    %v1287 = vmul.f32 %v1139, %v1258
    %v1288 = vmul.f32 %v1140, %v1254
    %v1289 = vmul.f32 %v1141, %v1258
    %v1290 = vmul.f32 %v1142, %v1254
    %v1291 = vmul.f32 %v1143, %v1258
    %v1293 = vlaneseq
    %v1294 = vshrl.u32 %v1293, 7
    %v1295 = vsub.s32 0, %v1294
    %v1296 = vrot.slane %v1281, %v1295
    %v1297 = vlaneseq
    %v1298 = vshrl.u32 %v1297, 7
    %v1299 = vsub.s32 1, %v1298
    %v1300 = vrot.slane %v1281, %v1299
    %v1303 = vadd.f32 %v1282, %v1296
    %v1304 = vadd.f32 %v1283, %v1300
    %v1305 = vadd.f32 %v1284, %v1296
    %v1306 = vadd.f32 %v1285, %v1300
    %v1307 = vadd.f32 %v1286, %v1296
    %v1308 = vadd.f32 %v1287, %v1300
    %v1309 = vadd.f32 %v1288, %v1296
    %v1310 = vadd.f32 %v1289, %v1300
    %v1311 = vadd.f32 %v1290, %v1296
    %v1312 = vadd.f32 %v1291, %v1300
    %v1315 = vrot.slane %v1303, 2
    %v1316 = vrot.slane %v1304, 2
    %v1319 = vmax.f32 %v1303, %v1315
    %v1320 = vmax.f32 %v1304, %v1316
    %v1323 = vrot.slane %v1305, 2
    %v1324 = vrot.slane %v1306, 2
    %v1327 = vmax.f32 %v1319, %v1323
    %v1328 = vmax.f32 %v1320, %v1324
    %v1329 = vrot.slane %v1305, 4
    %v1330 = vrot.slane %v1306, 4
    %v1333 = vmax.f32 %v1327, %v1329
    %v1334 = vmax.f32 %v1328, %v1330
    %v1337 = vrot.slane %v1307, 4
    %v1338 = vrot.slane %v1308, 4
    %v1341 = vmax.f32 %v1327, %v1337
    %v1342 = vmax.f32 %v1328, %v1338
    %v1343 = vrot.slane %v1307, 2
    %v1344 = vrot.slane %v1308, 2
    %v1347 = vmax.f32 %v1307, %v1343
    %v1348 = vmax.f32 %v1308, %v1344
    %v1351 = vrot.slane %v1309, 2
    %v1352 = vrot.slane %v1310, 2
    %v1355 = vmax.f32 %v1347, %v1351
    %v1356 = vmax.f32 %v1348, %v1352
    %v1359 = vrot.slane %v1311, 4
    %v1360 = vrot.slane %v1312, 4
    %v1363 = vmax.f32 %v1355, %v1359
    %v1364 = vmax.f32 %v1356, %v1360
    %v1365 = vmax.f32 %v1309, %v1351
    %v1366 = vmax.f32 %v1310, %v1352
    %v1367 = vrot.slane %v1311, 2
    %v1368 = vrot.slane %v1312, 2
    %v1371 = vmax.f32 %v1365, %v1367
    %v1372 = vmax.f32 %v1366, %v1368
    %v1373 = vmax.f32 %v1371, %v1359
    %v1374 = vmax.f32 %v1372, %v1360
    %v1377 = vrot.slane %v1341, 2
    %v1378 = vrot.slane %v1342, 2
    %v1383 = vrot.slane %v1373, 2
    %v1384 = vrot.slane %v1374, 2
    %v1387 = vsel %vm465, %v1333, %v1377
    %v1388 = vsel %vm465, %v1334, %v1378
    %v1389 = vsel %vm472, %v1387, %v1363
    %v1390 = vsel %vm472, %v1388, %v1364
    %v1391 = vsel %vm462, %v1389, %v1383
    %v1392 = vsel %vm462, %v1390, %v1384
    %v1395 = vrot.slane %v1391, 6
    %v1396 = vrot.slane %v1392, 6
    %v1399 = vrot.slane %v1391, 2
    %v1400 = vrot.slane %v1392, 2
    %v1403 = vsel %vm465, 0.0, %v1395
    %v1404 = vsel %vm465, 0.0, %v1396
    %v1405 = vsel %vm462, %v1403, 0.0
    %v1406 = vsel %vm462, %v1404, 0.0
    %v1407 = vsel %vm465, 0.0, %v1399
    %v1408 = vsel %vm465, 0.0, %v1400
    %v1409 = vsel %vm462, %v1407, 0.0
    %v1410 = vsel %vm462, %v1408, 0.0
    %v1413 = vrot.slane %v1405, 2
    %v1414 = vrot.slane %v1406, 2
    %v1419 = vrot.slane %v1409, 4
    %v1420 = vrot.slane %v1410, 4
    %v1423 = vsel %vm462, 0.0, %v1413
    %v1424 = vsel %vm462, 0.0, %v1414
    %v1425 = vsel %vm472, %v1413, %v1419
    %v1426 = vsel %vm472, %v1414, %v1420
    %v1428 = vrot.slane %v1405, 4
    %v1429 = vrot.slane %v1406, 4
    %v1432 = vrot.slane %v1409, 6
    %v1433 = vrot.slane %v1410, 6
    %v1436 = vsel %vm462, %v498, %v1428
    %v1437 = vsel %vm462, %v498, %v1429
    %v1438 = vsel %vm472, %v1428, %v1432
    %v1439 = vsel %vm472, %v1429, %v1433
    %v1440 = vrot.slane %v1409, 2
    %v1441 = vrot.slane %v1410, 2
    %v1444 = vsel %vm462, %v1405, %v1440
    %v1445 = vsel %vm462, %v1406, %v1441
    %v1446 = vsel %vm472, %v1440, %v523
    %v1447 = vsel %vm472, %v1441, %v523
    %v1448 = vsel %vm462, %v1413, %v1419
    %v1449 = vsel %vm462, %v1414, %v1420
    %v1450 = vsel %vm472, %v1419, %v545
    %v1451 = vsel %vm472, %v1420, %v545
    %v1452 = vpack.c.bf16 %v1425, %v1423
    %v1453 = vpack.c.bf16 %v1426, %v1424
    %v1454 = vpack.c.bf16 %v1438, %v1436
    %v1455 = vpack.c.bf16 %v1439, %v1437
    %v1456 = vpack.c.bf16 %v1446, %v1444
    %v1457 = vpack.c.bf16 %v1447, %v1445
    %v1458 = vpack.c.bf16 %v1450, %v1448
    %v1459 = vpack.c.bf16 %v1451, %v1449
    %v1460 = vpack.c.bf16 %v1419, %v1419
    %v1461 = vpack.c.bf16 %v1420, %v1420
    %v1462 = vpack.c.bf16 %v1432, %v1432
    %v1463 = vpack.c.bf16 %v1433, %v1433
    %v1464 = vld [vmem:[%s9] sm:$0xff]
    %v1465 = vld [vmem:[%s9 + $0x8] sm:$0xff]
    %v1466 = vld [vmem:[%s9 + $0x10] sm:$0xff]
    %v1467 = vld [vmem:[%s9 + $0x18] sm:$0xff]
    %v1468 = vld [vmem:[%s9 + $0x20] sm:$0xff]
    %v1469 = vld [vmem:[%s9 + $0x28] sm:$0xff]
    %v1470 = vld [vmem:[%s9 + $0x30] sm:$0xff]
    %v1471 = vld [vmem:[%s9 + $0x38] sm:$0xff]
    %v1472 = vld [vmem:[%s9 + $0x40] sm:$0xff]
    %v1473 = vld [vmem:[%s9 + $0x48] sm:$0xff]
    %v1474 = vld [vmem:[%s9 + $0x50] sm:$0xff]
    %v1475 = vld [vmem:[%s9 + $0x58] sm:$0xff]
    %v1476 = vld [vmem:[%s9 + $0x60] sm:$0xff]
    %v1477 = vld [vmem:[%s9 + $0x68] sm:$0xff]
    %v1478 = vld [vmem:[%s9 + $0x70] sm:$0xff]
    %v1479 = vld [vmem:[%s9 + $0x78] sm:$0xff]
    %v1480 = vld [vmem:[%s9 + $0x80] sm:$0xff]
    %v1481 = vld [vmem:[%s9 + $0x88] sm:$0xff]
    %v1482 = vld [vmem:[%s9 + $0x90] sm:$0xff]
    %v1483 = vld [vmem:[%s9 + $0x98] sm:$0xff]
    %v1484 = vld [vmem:[%s9 + $0xa0] sm:$0xff]
    %v1485 = vld [vmem:[%s9 + $0xa8] sm:$0xff]
    %v1486 = vld [vmem:[%s9 + $0xb0] sm:$0xff]
    %v1487 = vld [vmem:[%s9 + $0xb8] sm:$0xff]
    %v1488 = vld [vmem:[%s9 + $0xc0] sm:$0xff]
    %v1489 = vld [vmem:[%s9 + $0xc8] sm:$0xff]
    %v1490 = vld [vmem:[%s9 + $0xd0] sm:$0xff]
    %v1491 = vld [vmem:[%s9 + $0xd8] sm:$0xff]
    %v1492 = vld [vmem:[%s9 + $0xe0] sm:$0xff]
    %v1493 = vld [vmem:[%s9 + $0xe8] sm:$0xff]
    %v1494 = vld [vmem:[%s9 + $0xf0] sm:$0xff]
    %v1495 = vld [vmem:[%s9 + $0xf8] sm:$0xff]
    %v1496 = vld [vmem:[%s9 + $0x100] sm:$0xff]
    %v1497 = vld [vmem:[%s9 + $0x108] sm:$0xff]
    %v1498 = vld [vmem:[%s9 + $0x110] sm:$0xff]
    %v1499 = vld [vmem:[%s9 + $0x118] sm:$0xff]
    %v1500 = vld [vmem:[%s9 + $0x120] sm:$0xff]
    %v1501 = vld [vmem:[%s9 + $0x128] sm:$0xff]
    %v1502 = vld [vmem:[%s9 + $0x130] sm:$0xff]
    %v1503 = vld [vmem:[%s9 + $0x138] sm:$0xff]
    %v1504 = vld [vmem:[%s9 + $0x140] sm:$0xff]
    %v1505 = vld [vmem:[%s9 + $0x148] sm:$0xff]
    %v1506 = vld [vmem:[%s9 + $0x150] sm:$0xff]
    %v1507 = vld [vmem:[%s9 + $0x158] sm:$0xff]
    %v1508 = vld [vmem:[%s9 + $0x160] sm:$0xff]
    %v1509 = vld [vmem:[%s9 + $0x168] sm:$0xff]
    %v1510 = vld [vmem:[%s9 + $0x170] sm:$0xff]
    %v1511 = vld [vmem:[%s9 + $0x178] sm:$0xff]
    %v1512 = vld [vmem:[%s9 + $0x180] sm:$0xff]
    %v1513 = vld [vmem:[%s9 + $0x188] sm:$0xff]
    %v1514 = vld [vmem:[%s9 + $0x190] sm:$0xff]
    %v1515 = vld [vmem:[%s9 + $0x198] sm:$0xff]
    %v1516 = vld [vmem:[%s9 + $0x1a0] sm:$0xff]
    %v1517 = vld [vmem:[%s9 + $0x1a8] sm:$0xff]
    %v1518 = vld [vmem:[%s9 + $0x1b0] sm:$0xff]
    %v1519 = vld [vmem:[%s9 + $0x1b8] sm:$0xff]
    %v1520 = vld [vmem:[%s9 + $0x1c0] sm:$0xff]
    %v1521 = vld [vmem:[%s9 + $0x1c8] sm:$0xff]
    %v1522 = vld [vmem:[%s9 + $0x1d0] sm:$0xff]
    %v1523 = vld [vmem:[%s9 + $0x1d8] sm:$0xff]
    %v1524 = vld [vmem:[%s9 + $0x1e0] sm:$0xff]
    %v1525 = vld [vmem:[%s9 + $0x1e8] sm:$0xff]
    %v1526 = vld [vmem:[%s9 + $0x1f0] sm:$0xff]
    %v1527 = vld [vmem:[%s9 + $0x1f8] sm:$0xff]
    %v1528 = vld [vmem:[%s9 + $0x200] sm:$0xff]
    %v1529 = vld [vmem:[%s9 + $0x208] sm:$0xff]
    %v1530 = vld [vmem:[%s9 + $0x210] sm:$0xff]
    %v1531 = vld [vmem:[%s9 + $0x218] sm:$0xff]
    %v1532 = vld [vmem:[%s9 + $0x220] sm:$0xff]
    %v1533 = vld [vmem:[%s9 + $0x228] sm:$0xff]
    %v1534 = vld [vmem:[%s9 + $0x230] sm:$0xff]
    %v1535 = vld [vmem:[%s9 + $0x238] sm:$0xff]
    %v1536 = vld [vmem:[%s9 + $0x240] sm:$0xff]
    %v1537 = vld [vmem:[%s9 + $0x248] sm:$0xff]
    %v1538 = vld [vmem:[%s9 + $0x250] sm:$0xff]
    %v1539 = vld [vmem:[%s9 + $0x258] sm:$0xff]
    %v1540 = vld [vmem:[%s9 + $0x260] sm:$0xff]
    %v1541 = vld [vmem:[%s9 + $0x268] sm:$0xff]
    %v1542 = vld [vmem:[%s9 + $0x270] sm:$0xff]
    %v1543 = vld [vmem:[%s9 + $0x278] sm:$0xff]
    %v1544 = vld [vmem:[%s9 + $0x280] sm:$0xff]
    %v1545 = vld [vmem:[%s9 + $0x288] sm:$0xff]
    %v1546 = vld [vmem:[%s9 + $0x290] sm:$0xff]
    %v1547 = vld [vmem:[%s9 + $0x298] sm:$0xff]
    %v1548 = vld [vmem:[%s9 + $0x2a0] sm:$0xff]
    %v1549 = vld [vmem:[%s9 + $0x2a8] sm:$0xff]
    %v1550 = vld [vmem:[%s9 + $0x2b0] sm:$0xff]
    %v1551 = vld [vmem:[%s9 + $0x2b8] sm:$0xff]
    %v1552 = vld [vmem:[%s9 + $0x2c0] sm:$0xff]
    %v1553 = vld [vmem:[%s9 + $0x2c8] sm:$0xff]
    %v1554 = vld [vmem:[%s9 + $0x2d0] sm:$0xff]
    %v1555 = vld [vmem:[%s9 + $0x2d8] sm:$0xff]
    %v1556 = vld [vmem:[%s9 + $0x2e0] sm:$0xff]
    %v1557 = vld [vmem:[%s9 + $0x2e8] sm:$0xff]
    %v1558 = vld [vmem:[%s9 + $0x2f0] sm:$0xff]
    %v1559 = vld [vmem:[%s9 + $0x2f8] sm:$0xff]
    %v1560 = vld [vmem:[%s9 + $0x300] sm:$0xff]
    %v1561 = vld [vmem:[%s9 + $0x308] sm:$0xff]
    %v1562 = vld [vmem:[%s9 + $0x310] sm:$0xff]
    %v1563 = vld [vmem:[%s9 + $0x318] sm:$0xff]
    %v1564 = vld [vmem:[%s9 + $0x320] sm:$0xff]
    %v1565 = vld [vmem:[%s9 + $0x328] sm:$0xff]
    %v1566 = vld [vmem:[%s9 + $0x330] sm:$0xff]
    %v1567 = vld [vmem:[%s9 + $0x338] sm:$0xff]
    %v1568 = vld [vmem:[%s9 + $0x340] sm:$0xff]
    %v1569 = vld [vmem:[%s9 + $0x348] sm:$0xff]
    %v1570 = vld [vmem:[%s9 + $0x350] sm:$0xff]
    %v1571 = vld [vmem:[%s9 + $0x358] sm:$0xff]
    %v1572 = vld [vmem:[%s9 + $0x360] sm:$0xff]
    %v1573 = vld [vmem:[%s9 + $0x368] sm:$0xff]
    %v1574 = vld [vmem:[%s9 + $0x370] sm:$0xff]
    %v1575 = vld [vmem:[%s9 + $0x378] sm:$0xff]
    %v1576 = vld [vmem:[%s9 + $0x380] sm:$0xff]
    %v1577 = vld [vmem:[%s9 + $0x388] sm:$0xff]
    %v1578 = vld [vmem:[%s9 + $0x390] sm:$0xff]
    %v1579 = vld [vmem:[%s9 + $0x398] sm:$0xff]
    %v1580 = vld [vmem:[%s9 + $0x3a0] sm:$0xff]
    %v1581 = vld [vmem:[%s9 + $0x3a8] sm:$0xff]
    %v1582 = vld [vmem:[%s9 + $0x3b0] sm:$0xff]
    %v1583 = vld [vmem:[%s9 + $0x3b8] sm:$0xff]
    %v1584 = vld [vmem:[%s9 + $0x3c0] sm:$0xff]
    %v1585 = vld [vmem:[%s9 + $0x3c8] sm:$0xff]
    %v1586 = vld [vmem:[%s9 + $0x3d0] sm:$0xff]
    %v1587 = vld [vmem:[%s9 + $0x3d8] sm:$0xff]
    %v1588 = vld [vmem:[%s9 + $0x3e0] sm:$0xff]
    %v1589 = vld [vmem:[%s9 + $0x3e8] sm:$0xff]
    %v1590 = vld [vmem:[%s9 + $0x3f0] sm:$0xff]
    %v1591 = vld [vmem:[%s9 + $0x3f8] sm:$0xff]
    %v1592 = vld [vmem:[%s9 + $0x400] sm:$0xff]
    %v1593 = vld [vmem:[%s9 + $0x408] sm:$0xff]
    %v1594 = vld [vmem:[%s9 + $0x410] sm:$0xff]
    %v1595 = vld [vmem:[%s9 + $0x418] sm:$0xff]
    %v1596 = vld [vmem:[%s9 + $0x420] sm:$0xff]
    %v1597 = vld [vmem:[%s9 + $0x428] sm:$0xff]
    %v1598 = vld [vmem:[%s9 + $0x430] sm:$0xff]
    %v1599 = vld [vmem:[%s9 + $0x438] sm:$0xff]
    %v1600 = vld [vmem:[%s9 + $0x440] sm:$0xff]
    %v1601 = vld [vmem:[%s9 + $0x448] sm:$0xff]
    %v1602 = vld [vmem:[%s9 + $0x450] sm:$0xff]
    %v1603 = vld [vmem:[%s9 + $0x458] sm:$0xff]
    %v1604 = vld [vmem:[%s9 + $0x460] sm:$0xff]
    %v1605 = vld [vmem:[%s9 + $0x468] sm:$0xff]
    %v1606 = vld [vmem:[%s9 + $0x470] sm:$0xff]
    %v1607 = vld [vmem:[%s9 + $0x478] sm:$0xff]
    %v1608 = vld [vmem:[%s9 + $0x480] sm:$0xff]
    %v1609 = vld [vmem:[%s9 + $0x488] sm:$0xff]
    %v1610 = vld [vmem:[%s9 + $0x490] sm:$0xff]
    %v1611 = vld [vmem:[%s9 + $0x498] sm:$0xff]
    %v1612 = vld [vmem:[%s9 + $0x4a0] sm:$0xff]
    %v1613 = vld [vmem:[%s9 + $0x4a8] sm:$0xff]
    %v1614 = vld [vmem:[%s9 + $0x4b0] sm:$0xff]
    %v1615 = vld [vmem:[%s9 + $0x4b8] sm:$0xff]
    %v1616 = vld [vmem:[%s9 + $0x4c0] sm:$0xff]
    %v1617 = vld [vmem:[%s9 + $0x4c8] sm:$0xff]
    %v1618 = vld [vmem:[%s9 + $0x4d0] sm:$0xff]
    %v1619 = vld [vmem:[%s9 + $0x4d8] sm:$0xff]
    %v1620 = vld [vmem:[%s9 + $0x4e0] sm:$0xff]
    %v1621 = vld [vmem:[%s9 + $0x4e8] sm:$0xff]
    %v1622 = vld [vmem:[%s9 + $0x4f0] sm:$0xff]
    %v1623 = vld [vmem:[%s9 + $0x4f8] sm:$0xff]
    %v1624 = vld [vmem:[%s9 + $0x500] sm:$0xff]
    %v1625 = vld [vmem:[%s9 + $0x508] sm:$0xff]
    %v1626 = vld [vmem:[%s9 + $0x510] sm:$0xff]
    %v1627 = vld [vmem:[%s9 + $0x518] sm:$0xff]
    %v1628 = vld [vmem:[%s9 + $0x520] sm:$0xff]
    %v1629 = vld [vmem:[%s9 + $0x528] sm:$0xff]
    %v1630 = vld [vmem:[%s9 + $0x530] sm:$0xff]
    %v1631 = vld [vmem:[%s9 + $0x538] sm:$0xff]
    %v1632 = vld [vmem:[%s9 + $0x540] sm:$0xff]
    %v1633 = vld [vmem:[%s9 + $0x548] sm:$0xff]
    %v1634 = vld [vmem:[%s9 + $0x550] sm:$0xff]
    %v1635 = vld [vmem:[%s9 + $0x558] sm:$0xff]
    %v1636 = vld [vmem:[%s9 + $0x560] sm:$0xff]
    %v1637 = vld [vmem:[%s9 + $0x568] sm:$0xff]
    %v1638 = vld [vmem:[%s9 + $0x570] sm:$0xff]
    %v1639 = vld [vmem:[%s9 + $0x578] sm:$0xff]
    %v1640 = vld [vmem:[%s9 + $0x580] sm:$0xff]
    %v1641 = vld [vmem:[%s9 + $0x588] sm:$0xff]
    %v1642 = vld [vmem:[%s9 + $0x590] sm:$0xff]
    %v1643 = vld [vmem:[%s9 + $0x598] sm:$0xff]
    %v1644 = vld [vmem:[%s9 + $0x5a0] sm:$0xff]
    %v1645 = vld [vmem:[%s9 + $0x5a8] sm:$0xff]
    %v1646 = vld [vmem:[%s9 + $0x5b0] sm:$0xff]
    %v1647 = vld [vmem:[%s9 + $0x5b8] sm:$0xff]
    %v1648 = vld [vmem:[%s9 + $0x5c0] sm:$0xff]
    %v1649 = vld [vmem:[%s9 + $0x5c8] sm:$0xff]
    %v1650 = vld [vmem:[%s9 + $0x5d0] sm:$0xff]
    %v1651 = vld [vmem:[%s9 + $0x5d8] sm:$0xff]
    %v1652 = vld [vmem:[%s9 + $0x5e0] sm:$0xff]
    %v1653 = vld [vmem:[%s9 + $0x5e8] sm:$0xff]
    %v1654 = vld [vmem:[%s9 + $0x5f0] sm:$0xff]
    %v1655 = vld [vmem:[%s9 + $0x5f8] sm:$0xff]
    %v1656 = vld [vmem:[%s9 + $0x600] sm:$0xff]
    %v1657 = vld [vmem:[%s9 + $0x608] sm:$0xff]
    %v1658 = vld [vmem:[%s9 + $0x610] sm:$0xff]
    %v1659 = vld [vmem:[%s9 + $0x618] sm:$0xff]
    %v1660 = vld [vmem:[%s9 + $0x620] sm:$0xff]
    %v1661 = vld [vmem:[%s9 + $0x628] sm:$0xff]
    %v1662 = vld [vmem:[%s9 + $0x630] sm:$0xff]
    %v1663 = vld [vmem:[%s9 + $0x638] sm:$0xff]
    %v1664 = vld [vmem:[%s9 + $0x640] sm:$0xff]
    %v1665 = vld [vmem:[%s9 + $0x648] sm:$0xff]
    %v1666 = vld [vmem:[%s9 + $0x650] sm:$0xff]
    %v1667 = vld [vmem:[%s9 + $0x658] sm:$0xff]
    %v1668 = vld [vmem:[%s9 + $0x660] sm:$0xff]
    %v1669 = vld [vmem:[%s9 + $0x668] sm:$0xff]
    %v1670 = vld [vmem:[%s9 + $0x670] sm:$0xff]
    %v1671 = vld [vmem:[%s9 + $0x678] sm:$0xff]
    %v1672 = vld [vmem:[%s9 + $0x680] sm:$0xff]
    %v1673 = vld [vmem:[%s9 + $0x688] sm:$0xff]
    %v1674 = vld [vmem:[%s9 + $0x690] sm:$0xff]
    %v1675 = vld [vmem:[%s9 + $0x698] sm:$0xff]
    %v1676 = vld [vmem:[%s9 + $0x6a0] sm:$0xff]
    %v1677 = vld [vmem:[%s9 + $0x6a8] sm:$0xff]
    %v1678 = vld [vmem:[%s9 + $0x6b0] sm:$0xff]
    %v1679 = vld [vmem:[%s9 + $0x6b8] sm:$0xff]
    %v1680 = vld [vmem:[%s9 + $0x6c0] sm:$0xff]
    %v1681 = vld [vmem:[%s9 + $0x6c8] sm:$0xff]
    %v1682 = vld [vmem:[%s9 + $0x6d0] sm:$0xff]
    %v1683 = vld [vmem:[%s9 + $0x6d8] sm:$0xff]
    %v1684 = vld [vmem:[%s9 + $0x6e0] sm:$0xff]
    %v1685 = vld [vmem:[%s9 + $0x6e8] sm:$0xff]
    %v1686 = vld [vmem:[%s9 + $0x6f0] sm:$0xff]
    %v1687 = vld [vmem:[%s9 + $0x6f8] sm:$0xff]
    %v1688 = vld [vmem:[%s9 + $0x700] sm:$0xff]
    %v1689 = vld [vmem:[%s9 + $0x708] sm:$0xff]
    %v1690 = vld [vmem:[%s9 + $0x710] sm:$0xff]
    %v1691 = vld [vmem:[%s9 + $0x718] sm:$0xff]
    %v1692 = vld [vmem:[%s9 + $0x720] sm:$0xff]
    %v1693 = vld [vmem:[%s9 + $0x728] sm:$0xff]
    %v1694 = vld [vmem:[%s9 + $0x730] sm:$0xff]
    %v1695 = vld [vmem:[%s9 + $0x738] sm:$0xff]
    %v1696 = vld [vmem:[%s9 + $0x740] sm:$0xff]
    %v1697 = vld [vmem:[%s9 + $0x748] sm:$0xff]
    %v1698 = vld [vmem:[%s9 + $0x750] sm:$0xff]
    %v1699 = vld [vmem:[%s9 + $0x758] sm:$0xff]
    %v1700 = vld [vmem:[%s9 + $0x760] sm:$0xff]
    %v1701 = vld [vmem:[%s9 + $0x768] sm:$0xff]
    %v1702 = vld [vmem:[%s9 + $0x770] sm:$0xff]
    %v1703 = vld [vmem:[%s9 + $0x778] sm:$0xff]
    %v1704 = vld [vmem:[%s9 + $0x780] sm:$0xff]
    %v1705 = vld [vmem:[%s9 + $0x788] sm:$0xff]
    %v1706 = vld [vmem:[%s9 + $0x790] sm:$0xff]
    %v1707 = vld [vmem:[%s9 + $0x798] sm:$0xff]
    %v1708 = vld [vmem:[%s9 + $0x7a0] sm:$0xff]
    %v1709 = vld [vmem:[%s9 + $0x7a8] sm:$0xff]
    %v1710 = vld [vmem:[%s9 + $0x7b0] sm:$0xff]
    %v1711 = vld [vmem:[%s9 + $0x7b8] sm:$0xff]
    %v1712 = vld [vmem:[%s9 + $0x7c0] sm:$0xff]
    %v1713 = vld [vmem:[%s9 + $0x7c8] sm:$0xff]
    %v1714 = vld [vmem:[%s9 + $0x7d0] sm:$0xff]
    %v1715 = vld [vmem:[%s9 + $0x7d8] sm:$0xff]
    %v1716 = vld [vmem:[%s9 + $0x7e0] sm:$0xff]
    %v1717 = vld [vmem:[%s9 + $0x7e8] sm:$0xff]
    %v1718 = vld [vmem:[%s9 + $0x7f0] sm:$0xff]
    %v1719 = vld [vmem:[%s9 + $0x7f8] sm:$0xff]
    %v1720 = vld [vmem:[%s10] sm:$0xf]
    %v1722 = vlaneseq
    %v1723 = vshrl.u32 %v1722, 7
    %v1724 = vsub.s32 0, %v1723
    %v1725 = vrot.slane %v1720, %v1724
    %v1726 = vlaneseq
    %v1727 = vshrl.u32 %v1726, 7
    %v1728 = vsub.s32 1, %v1727
    %v1729 = vrot.slane %v1720, %v1728
    %v1730 = vlaneseq
    %v1731 = vshrl.u32 %v1730, 7
    %v1732 = vsub.s32 2, %v1731
    %v1733 = vrot.slane %v1720, %v1732
    %v1734 = vlaneseq
    %v1735 = vshrl.u32 %v1734, 7
    %v1736 = vsub.s32 3, %v1735
    %v1737 = vrot.slane %v1720, %v1736
    %v1998 = vunpack.c.l.b16 %v1464
    %v1999 = vunpack.c.h.b16 %v1464
    %v2000 = vunpack.c.l.b16 %v1465
    %v2001 = vunpack.c.h.b16 %v1465
    %v2002 = vunpack.c.l.b16 %v1466
    %v2003 = vunpack.c.h.b16 %v1466
    %v2004 = vunpack.c.l.b16 %v1467
    %v2005 = vunpack.c.h.b16 %v1467
    %v2006 = vunpack.c.l.b16 %v1468
    %v2007 = vunpack.c.h.b16 %v1468
    %v2008 = vunpack.c.l.b16 %v1469
    %v2009 = vunpack.c.h.b16 %v1469
    %v2010 = vunpack.c.l.b16 %v1470
    %v2011 = vunpack.c.h.b16 %v1470
    %v2012 = vunpack.c.l.b16 %v1471
    %v2013 = vunpack.c.h.b16 %v1471
    %v2014 = vunpack.c.l.b16 %v1472
    %v2015 = vunpack.c.h.b16 %v1472
    %v2016 = vunpack.c.l.b16 %v1473
    %v2017 = vunpack.c.h.b16 %v1473
    %v2018 = vunpack.c.l.b16 %v1474
    %v2019 = vunpack.c.h.b16 %v1474
    %v2020 = vunpack.c.l.b16 %v1475
    %v2021 = vunpack.c.h.b16 %v1475
    %v2022 = vunpack.c.l.b16 %v1476
    %v2023 = vunpack.c.h.b16 %v1476
    %v2024 = vunpack.c.l.b16 %v1477
    %v2025 = vunpack.c.h.b16 %v1477
    %v2026 = vunpack.c.l.b16 %v1478
    %v2027 = vunpack.c.h.b16 %v1478
    %v2028 = vunpack.c.l.b16 %v1479
    %v2029 = vunpack.c.h.b16 %v1479
    %v2030 = vunpack.c.l.b16 %v1480
    %v2031 = vunpack.c.h.b16 %v1480
    %v2032 = vunpack.c.l.b16 %v1481
    %v2033 = vunpack.c.h.b16 %v1481
    %v2034 = vunpack.c.l.b16 %v1482
    %v2035 = vunpack.c.h.b16 %v1482
    %v2036 = vunpack.c.l.b16 %v1483
    %v2037 = vunpack.c.h.b16 %v1483
    %v2038 = vunpack.c.l.b16 %v1484
    %v2039 = vunpack.c.h.b16 %v1484
    %v2040 = vunpack.c.l.b16 %v1485
    %v2041 = vunpack.c.h.b16 %v1485
    %v2042 = vunpack.c.l.b16 %v1486
    %v2043 = vunpack.c.h.b16 %v1486
    %v2044 = vunpack.c.l.b16 %v1487
    %v2045 = vunpack.c.h.b16 %v1487
    %v2046 = vunpack.c.l.b16 %v1488
    %v2047 = vunpack.c.h.b16 %v1488
    %v2048 = vunpack.c.l.b16 %v1489
    %v2049 = vunpack.c.h.b16 %v1489
    %v2050 = vunpack.c.l.b16 %v1490
    %v2051 = vunpack.c.h.b16 %v1490
    %v2052 = vunpack.c.l.b16 %v1491
    %v2053 = vunpack.c.h.b16 %v1491
    %v2054 = vunpack.c.l.b16 %v1492
    %v2055 = vunpack.c.h.b16 %v1492
    %v2056 = vunpack.c.l.b16 %v1493
    %v2057 = vunpack.c.h.b16 %v1493
    %v2058 = vunpack.c.l.b16 %v1494
    %v2059 = vunpack.c.h.b16 %v1494
    %v2060 = vunpack.c.l.b16 %v1495
    %v2061 = vunpack.c.h.b16 %v1495
    %v2062 = vunpack.c.l.b16 %v1496
    %v2063 = vunpack.c.h.b16 %v1496
    %v2064 = vunpack.c.l.b16 %v1497
    %v2065 = vunpack.c.h.b16 %v1497
    %v2066 = vunpack.c.l.b16 %v1498
    %v2067 = vunpack.c.h.b16 %v1498
    %v2068 = vunpack.c.l.b16 %v1499
    %v2069 = vunpack.c.h.b16 %v1499
    %v2070 = vunpack.c.l.b16 %v1500
    %v2071 = vunpack.c.h.b16 %v1500
    %v2072 = vunpack.c.l.b16 %v1501
    %v2073 = vunpack.c.h.b16 %v1501
    %v2074 = vunpack.c.l.b16 %v1502
    %v2075 = vunpack.c.h.b16 %v1502
    %v2076 = vunpack.c.l.b16 %v1503
    %v2077 = vunpack.c.h.b16 %v1503
    %v2078 = vunpack.c.l.b16 %v1504
    %v2079 = vunpack.c.h.b16 %v1504
    %v2080 = vunpack.c.l.b16 %v1505
    %v2081 = vunpack.c.h.b16 %v1505
    %v2082 = vunpack.c.l.b16 %v1506
    %v2083 = vunpack.c.h.b16 %v1506
    %v2084 = vunpack.c.l.b16 %v1507
    %v2085 = vunpack.c.h.b16 %v1507
    %v2086 = vunpack.c.l.b16 %v1508
    %v2087 = vunpack.c.h.b16 %v1508
    %v2088 = vunpack.c.l.b16 %v1509
    %v2089 = vunpack.c.h.b16 %v1509
    %v2090 = vunpack.c.l.b16 %v1510
    %v2091 = vunpack.c.h.b16 %v1510
    %v2092 = vunpack.c.l.b16 %v1511
    %v2093 = vunpack.c.h.b16 %v1511
    %v2094 = vunpack.c.l.b16 %v1512
    %v2095 = vunpack.c.h.b16 %v1512
    %v2096 = vunpack.c.l.b16 %v1513
    %v2097 = vunpack.c.h.b16 %v1513
    %v2098 = vunpack.c.l.b16 %v1514
    %v2099 = vunpack.c.h.b16 %v1514
    %v2100 = vunpack.c.l.b16 %v1515
    %v2101 = vunpack.c.h.b16 %v1515
    %v2102 = vunpack.c.l.b16 %v1516
    %v2103 = vunpack.c.h.b16 %v1516
    %v2104 = vunpack.c.l.b16 %v1517
    %v2105 = vunpack.c.h.b16 %v1517
    %v2106 = vunpack.c.l.b16 %v1518
    %v2107 = vunpack.c.h.b16 %v1518
    %v2108 = vunpack.c.l.b16 %v1519
    %v2109 = vunpack.c.h.b16 %v1519
    %v2110 = vunpack.c.l.b16 %v1520
    %v2111 = vunpack.c.h.b16 %v1520
    %v2112 = vunpack.c.l.b16 %v1521
    %v2113 = vunpack.c.h.b16 %v1521
    %v2114 = vunpack.c.l.b16 %v1522
    %v2115 = vunpack.c.h.b16 %v1522
    %v2116 = vunpack.c.l.b16 %v1523
    %v2117 = vunpack.c.h.b16 %v1523
    %v2118 = vunpack.c.l.b16 %v1524
    %v2119 = vunpack.c.h.b16 %v1524
    %v2120 = vunpack.c.l.b16 %v1525
    %v2121 = vunpack.c.h.b16 %v1525
    %v2122 = vunpack.c.l.b16 %v1526
    %v2123 = vunpack.c.h.b16 %v1526
    %v2124 = vunpack.c.l.b16 %v1527
    %v2125 = vunpack.c.h.b16 %v1527
    %v2126 = vunpack.c.l.b16 %v1528
    %v2127 = vunpack.c.h.b16 %v1528
    %v2128 = vunpack.c.l.b16 %v1529
    %v2129 = vunpack.c.h.b16 %v1529
    %v2130 = vunpack.c.l.b16 %v1530
    %v2131 = vunpack.c.h.b16 %v1530
    %v2132 = vunpack.c.l.b16 %v1531
    %v2133 = vunpack.c.h.b16 %v1531
    %v2134 = vunpack.c.l.b16 %v1532
    %v2135 = vunpack.c.h.b16 %v1532
    %v2136 = vunpack.c.l.b16 %v1533
    %v2137 = vunpack.c.h.b16 %v1533
    %v2138 = vunpack.c.l.b16 %v1534
    %v2139 = vunpack.c.h.b16 %v1534
    %v2140 = vunpack.c.l.b16 %v1535
    %v2141 = vunpack.c.h.b16 %v1535
    %v2142 = vunpack.c.l.b16 %v1536
    %v2143 = vunpack.c.h.b16 %v1536
    %v2144 = vunpack.c.l.b16 %v1537
    %v2145 = vunpack.c.h.b16 %v1537
    %v2146 = vunpack.c.l.b16 %v1538
    %v2147 = vunpack.c.h.b16 %v1538
    %v2148 = vunpack.c.l.b16 %v1539
    %v2149 = vunpack.c.h.b16 %v1539
    %v2150 = vunpack.c.l.b16 %v1540
    %v2151 = vunpack.c.h.b16 %v1540
    %v2152 = vunpack.c.l.b16 %v1541
    %v2153 = vunpack.c.h.b16 %v1541
    %v2154 = vunpack.c.l.b16 %v1542
    %v2155 = vunpack.c.h.b16 %v1542
    %v2156 = vunpack.c.l.b16 %v1543
    %v2157 = vunpack.c.h.b16 %v1543
    %v2158 = vunpack.c.l.b16 %v1544
    %v2159 = vunpack.c.h.b16 %v1544
    %v2160 = vunpack.c.l.b16 %v1545
    %v2161 = vunpack.c.h.b16 %v1545
    %v2162 = vunpack.c.l.b16 %v1546
    %v2163 = vunpack.c.h.b16 %v1546
    %v2164 = vunpack.c.l.b16 %v1547
    %v2165 = vunpack.c.h.b16 %v1547
    %v2166 = vunpack.c.l.b16 %v1548
    %v2167 = vunpack.c.h.b16 %v1548
    %v2168 = vunpack.c.l.b16 %v1549
    %v2169 = vunpack.c.h.b16 %v1549
    %v2170 = vunpack.c.l.b16 %v1550
    %v2171 = vunpack.c.h.b16 %v1550
    %v2172 = vunpack.c.l.b16 %v1551
    %v2173 = vunpack.c.h.b16 %v1551
    %v2174 = vunpack.c.l.b16 %v1552
    %v2175 = vunpack.c.h.b16 %v1552
    %v2176 = vunpack.c.l.b16 %v1553
    %v2177 = vunpack.c.h.b16 %v1553
    %v2178 = vunpack.c.l.b16 %v1554
    %v2179 = vunpack.c.h.b16 %v1554
    %v2180 = vunpack.c.l.b16 %v1555
    %v2181 = vunpack.c.h.b16 %v1555
    %v2182 = vunpack.c.l.b16 %v1556
    %v2183 = vunpack.c.h.b16 %v1556
    %v2184 = vunpack.c.l.b16 %v1557
    %v2185 = vunpack.c.h.b16 %v1557
    %v2186 = vunpack.c.l.b16 %v1558
    %v2187 = vunpack.c.h.b16 %v1558
    %v2188 = vunpack.c.l.b16 %v1559
    %v2189 = vunpack.c.h.b16 %v1559
    %v2190 = vunpack.c.l.b16 %v1560
    %v2191 = vunpack.c.h.b16 %v1560
    %v2192 = vunpack.c.l.b16 %v1561
    %v2193 = vunpack.c.h.b16 %v1561
    %v2194 = vunpack.c.l.b16 %v1562
    %v2195 = vunpack.c.h.b16 %v1562
    %v2196 = vunpack.c.l.b16 %v1563
    %v2197 = vunpack.c.h.b16 %v1563
    %v2198 = vunpack.c.l.b16 %v1564
    %v2199 = vunpack.c.h.b16 %v1564
    %v2200 = vunpack.c.l.b16 %v1565
    %v2201 = vunpack.c.h.b16 %v1565
    %v2202 = vunpack.c.l.b16 %v1566
    %v2203 = vunpack.c.h.b16 %v1566
    %v2204 = vunpack.c.l.b16 %v1567
    %v2205 = vunpack.c.h.b16 %v1567
    %v2206 = vunpack.c.l.b16 %v1568
    %v2207 = vunpack.c.h.b16 %v1568
    %v2208 = vunpack.c.l.b16 %v1569
    %v2209 = vunpack.c.h.b16 %v1569
    %v2210 = vunpack.c.l.b16 %v1570
    %v2211 = vunpack.c.h.b16 %v1570
    %v2212 = vunpack.c.l.b16 %v1571
    %v2213 = vunpack.c.h.b16 %v1571
    %v2214 = vunpack.c.l.b16 %v1572
    %v2215 = vunpack.c.h.b16 %v1572
    %v2216 = vunpack.c.l.b16 %v1573
    %v2217 = vunpack.c.h.b16 %v1573
    %v2218 = vunpack.c.l.b16 %v1574
    %v2219 = vunpack.c.h.b16 %v1574
    %v2220 = vunpack.c.l.b16 %v1575
    %v2221 = vunpack.c.h.b16 %v1575
    %v2222 = vunpack.c.l.b16 %v1576
    %v2223 = vunpack.c.h.b16 %v1576
    %v2224 = vunpack.c.l.b16 %v1577
    %v2225 = vunpack.c.h.b16 %v1577
    %v2226 = vunpack.c.l.b16 %v1578
    %v2227 = vunpack.c.h.b16 %v1578
    %v2228 = vunpack.c.l.b16 %v1579
    %v2229 = vunpack.c.h.b16 %v1579
    %v2230 = vunpack.c.l.b16 %v1580
    %v2231 = vunpack.c.h.b16 %v1580
    %v2232 = vunpack.c.l.b16 %v1581
    %v2233 = vunpack.c.h.b16 %v1581
    %v2234 = vunpack.c.l.b16 %v1582
    %v2235 = vunpack.c.h.b16 %v1582
    %v2236 = vunpack.c.l.b16 %v1583
    %v2237 = vunpack.c.h.b16 %v1583
    %v2238 = vunpack.c.l.b16 %v1584
    %v2239 = vunpack.c.h.b16 %v1584
    %v2240 = vunpack.c.l.b16 %v1585
    %v2241 = vunpack.c.h.b16 %v1585
    %v2242 = vunpack.c.l.b16 %v1586
    %v2243 = vunpack.c.h.b16 %v1586
    %v2244 = vunpack.c.l.b16 %v1587
    %v2245 = vunpack.c.h.b16 %v1587
    %v2246 = vunpack.c.l.b16 %v1588
    %v2247 = vunpack.c.h.b16 %v1588
    %v2248 = vunpack.c.l.b16 %v1589
    %v2249 = vunpack.c.h.b16 %v1589
    %v2250 = vunpack.c.l.b16 %v1590
    %v2251 = vunpack.c.h.b16 %v1590
    %v2252 = vunpack.c.l.b16 %v1591
    %v2253 = vunpack.c.h.b16 %v1591
    %v2254 = vunpack.c.l.b16 %v1592
    %v2255 = vunpack.c.h.b16 %v1592
    %v2256 = vunpack.c.l.b16 %v1593
    %v2257 = vunpack.c.h.b16 %v1593
    %v2258 = vunpack.c.l.b16 %v1594
    %v2259 = vunpack.c.h.b16 %v1594
    %v2260 = vunpack.c.l.b16 %v1595
    %v2261 = vunpack.c.h.b16 %v1595
    %v2262 = vunpack.c.l.b16 %v1596
    %v2263 = vunpack.c.h.b16 %v1596
    %v2264 = vunpack.c.l.b16 %v1597
    %v2265 = vunpack.c.h.b16 %v1597
    %v2266 = vunpack.c.l.b16 %v1598
    %v2267 = vunpack.c.h.b16 %v1598
    %v2268 = vunpack.c.l.b16 %v1599
    %v2269 = vunpack.c.h.b16 %v1599
    %v2270 = vunpack.c.l.b16 %v1600
    %v2271 = vunpack.c.h.b16 %v1600
    %v2272 = vunpack.c.l.b16 %v1601
    %v2273 = vunpack.c.h.b16 %v1601
    %v2274 = vunpack.c.l.b16 %v1602
    %v2275 = vunpack.c.h.b16 %v1602
    %v2276 = vunpack.c.l.b16 %v1603
    %v2277 = vunpack.c.h.b16 %v1603
    %v2278 = vunpack.c.l.b16 %v1604
    %v2279 = vunpack.c.h.b16 %v1604
    %v2280 = vunpack.c.l.b16 %v1605
    %v2281 = vunpack.c.h.b16 %v1605
    %v2282 = vunpack.c.l.b16 %v1606
    %v2283 = vunpack.c.h.b16 %v1606
    %v2284 = vunpack.c.l.b16 %v1607
    %v2285 = vunpack.c.h.b16 %v1607
    %v2286 = vunpack.c.l.b16 %v1608
    %v2287 = vunpack.c.h.b16 %v1608
    %v2288 = vunpack.c.l.b16 %v1609
    %v2289 = vunpack.c.h.b16 %v1609
    %v2290 = vunpack.c.l.b16 %v1610
    %v2291 = vunpack.c.h.b16 %v1610
    %v2292 = vunpack.c.l.b16 %v1611
    %v2293 = vunpack.c.h.b16 %v1611
    %v2294 = vunpack.c.l.b16 %v1612
    %v2295 = vunpack.c.h.b16 %v1612
    %v2296 = vunpack.c.l.b16 %v1613
    %v2297 = vunpack.c.h.b16 %v1613
    %v2298 = vunpack.c.l.b16 %v1614
    %v2299 = vunpack.c.h.b16 %v1614
    %v2300 = vunpack.c.l.b16 %v1615
    %v2301 = vunpack.c.h.b16 %v1615
    %v2302 = vunpack.c.l.b16 %v1616
    %v2303 = vunpack.c.h.b16 %v1616
    %v2304 = vunpack.c.l.b16 %v1617
    %v2305 = vunpack.c.h.b16 %v1617
    %v2306 = vunpack.c.l.b16 %v1618
    %v2307 = vunpack.c.h.b16 %v1618
    %v2308 = vunpack.c.l.b16 %v1619
    %v2309 = vunpack.c.h.b16 %v1619
    %v2310 = vunpack.c.l.b16 %v1620
    %v2311 = vunpack.c.h.b16 %v1620
    %v2312 = vunpack.c.l.b16 %v1621
    %v2313 = vunpack.c.h.b16 %v1621
    %v2314 = vunpack.c.l.b16 %v1622
    %v2315 = vunpack.c.h.b16 %v1622
    %v2316 = vunpack.c.l.b16 %v1623
    %v2317 = vunpack.c.h.b16 %v1623
    %v2318 = vunpack.c.l.b16 %v1624
    %v2319 = vunpack.c.h.b16 %v1624
    %v2320 = vunpack.c.l.b16 %v1625
    %v2321 = vunpack.c.h.b16 %v1625
    %v2322 = vunpack.c.l.b16 %v1626
    %v2323 = vunpack.c.h.b16 %v1626
    %v2324 = vunpack.c.l.b16 %v1627
    %v2325 = vunpack.c.h.b16 %v1627
    %v2326 = vunpack.c.l.b16 %v1628
    %v2327 = vunpack.c.h.b16 %v1628
    %v2328 = vunpack.c.l.b16 %v1629
    %v2329 = vunpack.c.h.b16 %v1629
    %v2330 = vunpack.c.l.b16 %v1630
    %v2331 = vunpack.c.h.b16 %v1630
    %v2332 = vunpack.c.l.b16 %v1631
    %v2333 = vunpack.c.h.b16 %v1631
    %v2334 = vunpack.c.l.b16 %v1632
    %v2335 = vunpack.c.h.b16 %v1632
    %v2336 = vunpack.c.l.b16 %v1633
    %v2337 = vunpack.c.h.b16 %v1633
    %v2338 = vunpack.c.l.b16 %v1634
    %v2339 = vunpack.c.h.b16 %v1634
    %v2340 = vunpack.c.l.b16 %v1635
    %v2341 = vunpack.c.h.b16 %v1635
    %v2342 = vunpack.c.l.b16 %v1636
    %v2343 = vunpack.c.h.b16 %v1636
    %v2344 = vunpack.c.l.b16 %v1637
    %v2345 = vunpack.c.h.b16 %v1637
    %v2346 = vunpack.c.l.b16 %v1638
    %v2347 = vunpack.c.h.b16 %v1638
    %v2348 = vunpack.c.l.b16 %v1639
    %v2349 = vunpack.c.h.b16 %v1639
    %v2350 = vunpack.c.l.b16 %v1640
    %v2351 = vunpack.c.h.b16 %v1640
    %v2352 = vunpack.c.l.b16 %v1641
    %v2353 = vunpack.c.h.b16 %v1641
    %v2354 = vunpack.c.l.b16 %v1642
    %v2355 = vunpack.c.h.b16 %v1642
    %v2356 = vunpack.c.l.b16 %v1643
    %v2357 = vunpack.c.h.b16 %v1643
    %v2358 = vunpack.c.l.b16 %v1644
    %v2359 = vunpack.c.h.b16 %v1644
    %v2360 = vunpack.c.l.b16 %v1645
    %v2361 = vunpack.c.h.b16 %v1645
    %v2362 = vunpack.c.l.b16 %v1646
    %v2363 = vunpack.c.h.b16 %v1646
    %v2364 = vunpack.c.l.b16 %v1647
    %v2365 = vunpack.c.h.b16 %v1647
    %v2366 = vunpack.c.l.b16 %v1648
    %v2367 = vunpack.c.h.b16 %v1648
    %v2368 = vunpack.c.l.b16 %v1649
    %v2369 = vunpack.c.h.b16 %v1649
    %v2370 = vunpack.c.l.b16 %v1650
    %v2371 = vunpack.c.h.b16 %v1650
    %v2372 = vunpack.c.l.b16 %v1651
    %v2373 = vunpack.c.h.b16 %v1651
    %v2374 = vunpack.c.l.b16 %v1652
    %v2375 = vunpack.c.h.b16 %v1652
    %v2376 = vunpack.c.l.b16 %v1653
    %v2377 = vunpack.c.h.b16 %v1653
    %v2378 = vunpack.c.l.b16 %v1654
    %v2379 = vunpack.c.h.b16 %v1654
    %v2380 = vunpack.c.l.b16 %v1655
    %v2381 = vunpack.c.h.b16 %v1655
    %v2382 = vunpack.c.l.b16 %v1656
    %v2383 = vunpack.c.h.b16 %v1656
    %v2384 = vunpack.c.l.b16 %v1657
    %v2385 = vunpack.c.h.b16 %v1657
    %v2386 = vunpack.c.l.b16 %v1658
    %v2387 = vunpack.c.h.b16 %v1658
    %v2388 = vunpack.c.l.b16 %v1659
    %v2389 = vunpack.c.h.b16 %v1659
    %v2390 = vunpack.c.l.b16 %v1660
    %v2391 = vunpack.c.h.b16 %v1660
    %v2392 = vunpack.c.l.b16 %v1661
    %v2393 = vunpack.c.h.b16 %v1661
    %v2394 = vunpack.c.l.b16 %v1662
    %v2395 = vunpack.c.h.b16 %v1662
    %v2396 = vunpack.c.l.b16 %v1663
    %v2397 = vunpack.c.h.b16 %v1663
    %v2398 = vunpack.c.l.b16 %v1664
    %v2399 = vunpack.c.h.b16 %v1664
    %v2400 = vunpack.c.l.b16 %v1665
    %v2401 = vunpack.c.h.b16 %v1665
    %v2402 = vunpack.c.l.b16 %v1666
    %v2403 = vunpack.c.h.b16 %v1666
    %v2404 = vunpack.c.l.b16 %v1667
    %v2405 = vunpack.c.h.b16 %v1667
    %v2406 = vunpack.c.l.b16 %v1668
    %v2407 = vunpack.c.h.b16 %v1668
    %v2408 = vunpack.c.l.b16 %v1669
    %v2409 = vunpack.c.h.b16 %v1669
    %v2410 = vunpack.c.l.b16 %v1670
    %v2411 = vunpack.c.h.b16 %v1670
    %v2412 = vunpack.c.l.b16 %v1671
    %v2413 = vunpack.c.h.b16 %v1671
    %v2414 = vunpack.c.l.b16 %v1672
    %v2415 = vunpack.c.h.b16 %v1672
    %v2416 = vunpack.c.l.b16 %v1673
    %v2417 = vunpack.c.h.b16 %v1673
    %v2418 = vunpack.c.l.b16 %v1674
    %v2419 = vunpack.c.h.b16 %v1674
    %v2420 = vunpack.c.l.b16 %v1675
    %v2421 = vunpack.c.h.b16 %v1675
    %v2422 = vunpack.c.l.b16 %v1676
    %v2423 = vunpack.c.h.b16 %v1676
    %v2424 = vunpack.c.l.b16 %v1677
    %v2425 = vunpack.c.h.b16 %v1677
    %v2426 = vunpack.c.l.b16 %v1678
    %v2427 = vunpack.c.h.b16 %v1678
    %v2428 = vunpack.c.l.b16 %v1679
    %v2429 = vunpack.c.h.b16 %v1679
    %v2430 = vunpack.c.l.b16 %v1680
    %v2431 = vunpack.c.h.b16 %v1680
    %v2432 = vunpack.c.l.b16 %v1681
    %v2433 = vunpack.c.h.b16 %v1681
    %v2434 = vunpack.c.l.b16 %v1682
    %v2435 = vunpack.c.h.b16 %v1682
    %v2436 = vunpack.c.l.b16 %v1683
    %v2437 = vunpack.c.h.b16 %v1683
    %v2438 = vunpack.c.l.b16 %v1684
    %v2439 = vunpack.c.h.b16 %v1684
    %v2440 = vunpack.c.l.b16 %v1685
    %v2441 = vunpack.c.h.b16 %v1685
    %v2442 = vunpack.c.l.b16 %v1686
    %v2443 = vunpack.c.h.b16 %v1686
    %v2444 = vunpack.c.l.b16 %v1687
    %v2445 = vunpack.c.h.b16 %v1687
    %v2446 = vunpack.c.l.b16 %v1688
    %v2447 = vunpack.c.h.b16 %v1688
    %v2448 = vunpack.c.l.b16 %v1689
    %v2449 = vunpack.c.h.b16 %v1689
    %v2450 = vunpack.c.l.b16 %v1690
    %v2451 = vunpack.c.h.b16 %v1690
    %v2452 = vunpack.c.l.b16 %v1691
    %v2453 = vunpack.c.h.b16 %v1691
    %v2454 = vunpack.c.l.b16 %v1692
    %v2455 = vunpack.c.h.b16 %v1692
    %v2456 = vunpack.c.l.b16 %v1693
    %v2457 = vunpack.c.h.b16 %v1693
    %v2458 = vunpack.c.l.b16 %v1694
    %v2459 = vunpack.c.h.b16 %v1694
    %v2460 = vunpack.c.l.b16 %v1695
    %v2461 = vunpack.c.h.b16 %v1695
    %v2462 = vunpack.c.l.b16 %v1696
    %v2463 = vunpack.c.h.b16 %v1696
    %v2464 = vunpack.c.l.b16 %v1697
    %v2465 = vunpack.c.h.b16 %v1697
    %v2466 = vunpack.c.l.b16 %v1698
    %v2467 = vunpack.c.h.b16 %v1698
    %v2468 = vunpack.c.l.b16 %v1699
    %v2469 = vunpack.c.h.b16 %v1699
    %v2470 = vunpack.c.l.b16 %v1700
    %v2471 = vunpack.c.h.b16 %v1700
    %v2472 = vunpack.c.l.b16 %v1701
    %v2473 = vunpack.c.h.b16 %v1701
    %v2474 = vunpack.c.l.b16 %v1702
    %v2475 = vunpack.c.h.b16 %v1702
    %v2476 = vunpack.c.l.b16 %v1703
    %v2477 = vunpack.c.h.b16 %v1703
    %v2478 = vunpack.c.l.b16 %v1704
    %v2479 = vunpack.c.h.b16 %v1704
    %v2480 = vunpack.c.l.b16 %v1705
    %v2481 = vunpack.c.h.b16 %v1705
    %v2482 = vunpack.c.l.b16 %v1706
    %v2483 = vunpack.c.h.b16 %v1706
    %v2484 = vunpack.c.l.b16 %v1707
    %v2485 = vunpack.c.h.b16 %v1707
    %v2486 = vunpack.c.l.b16 %v1708
    %v2487 = vunpack.c.h.b16 %v1708
    %v2488 = vunpack.c.l.b16 %v1709
    %v2489 = vunpack.c.h.b16 %v1709
    %v2490 = vunpack.c.l.b16 %v1710
    %v2491 = vunpack.c.h.b16 %v1710
    %v2492 = vunpack.c.l.b16 %v1711
    %v2493 = vunpack.c.h.b16 %v1711
    %v2494 = vunpack.c.l.b16 %v1712
    %v2495 = vunpack.c.h.b16 %v1712
    %v2496 = vunpack.c.l.b16 %v1713
    %v2497 = vunpack.c.h.b16 %v1713
    %v2498 = vunpack.c.l.b16 %v1714
    %v2499 = vunpack.c.h.b16 %v1714
    %v2500 = vunpack.c.l.b16 %v1715
    %v2501 = vunpack.c.h.b16 %v1715
    %v2502 = vunpack.c.l.b16 %v1716
    %v2503 = vunpack.c.h.b16 %v1716
    %v2504 = vunpack.c.l.b16 %v1717
    %v2505 = vunpack.c.h.b16 %v1717
    %v2506 = vunpack.c.l.b16 %v1718
    %v2507 = vunpack.c.h.b16 %v1718
    %v2508 = vunpack.c.l.b16 %v1719
    %v2509 = vunpack.c.h.b16 %v1719
    %v2510 = vpack.c.b16 %v2002, %v1998
    %v2511 = vpack.c.b16 %v2003, %v1999
    %v2512 = vpack.c.b16 %v2004, %v2000
    %v2513 = vpack.c.b16 %v2005, %v2001
    %v2514 = vpack.c.b16 %v2010, %v2006
    %v2515 = vpack.c.b16 %v2011, %v2007
    %v2516 = vpack.c.b16 %v2012, %v2008
    %v2517 = vpack.c.b16 %v2013, %v2009
    %v2518 = vpack.c.b16 %v2018, %v2014
    %v2519 = vpack.c.b16 %v2019, %v2015
    %v2520 = vpack.c.b16 %v2020, %v2016
    %v2521 = vpack.c.b16 %v2021, %v2017
    %v2522 = vpack.c.b16 %v2026, %v2022
    %v2523 = vpack.c.b16 %v2027, %v2023
    %v2524 = vpack.c.b16 %v2028, %v2024
    %v2525 = vpack.c.b16 %v2029, %v2025
    %v2526 = vpack.c.b16 %v2034, %v2030
    %v2527 = vpack.c.b16 %v2035, %v2031
    %v2528 = vpack.c.b16 %v2036, %v2032
    %v2529 = vpack.c.b16 %v2037, %v2033
    %v2530 = vpack.c.b16 %v2042, %v2038
    %v2531 = vpack.c.b16 %v2043, %v2039
    %v2532 = vpack.c.b16 %v2044, %v2040
    %v2533 = vpack.c.b16 %v2045, %v2041
    %v2534 = vpack.c.b16 %v2050, %v2046
    %v2535 = vpack.c.b16 %v2051, %v2047
    %v2536 = vpack.c.b16 %v2052, %v2048
    %v2537 = vpack.c.b16 %v2053, %v2049
    %v2538 = vpack.c.b16 %v2058, %v2054
    %v2539 = vpack.c.b16 %v2059, %v2055
    %v2540 = vpack.c.b16 %v2060, %v2056
    %v2541 = vpack.c.b16 %v2061, %v2057
    %v2542 = vpack.c.b16 %v2066, %v2062
    %v2543 = vpack.c.b16 %v2067, %v2063
    %v2544 = vpack.c.b16 %v2068, %v2064
    %v2545 = vpack.c.b16 %v2069, %v2065
    %v2546 = vpack.c.b16 %v2074, %v2070
    %v2547 = vpack.c.b16 %v2075, %v2071
    %v2548 = vpack.c.b16 %v2076, %v2072
    %v2549 = vpack.c.b16 %v2077, %v2073
    %v2550 = vpack.c.b16 %v2082, %v2078
    %v2551 = vpack.c.b16 %v2083, %v2079
    %v2552 = vpack.c.b16 %v2084, %v2080
    %v2553 = vpack.c.b16 %v2085, %v2081
    %v2554 = vpack.c.b16 %v2090, %v2086
    %v2555 = vpack.c.b16 %v2091, %v2087
    %v2556 = vpack.c.b16 %v2092, %v2088
    %v2557 = vpack.c.b16 %v2093, %v2089
    %v2558 = vpack.c.b16 %v2098, %v2094
    %v2559 = vpack.c.b16 %v2099, %v2095
    %v2560 = vpack.c.b16 %v2100, %v2096
    %v2561 = vpack.c.b16 %v2101, %v2097
    %v2562 = vpack.c.b16 %v2106, %v2102
    %v2563 = vpack.c.b16 %v2107, %v2103
    %v2564 = vpack.c.b16 %v2108, %v2104
    %v2565 = vpack.c.b16 %v2109, %v2105
    %v2566 = vpack.c.b16 %v2114, %v2110
    %v2567 = vpack.c.b16 %v2115, %v2111
    %v2568 = vpack.c.b16 %v2116, %v2112
    %v2569 = vpack.c.b16 %v2117, %v2113
    %v2570 = vpack.c.b16 %v2122, %v2118
    %v2571 = vpack.c.b16 %v2123, %v2119
    %v2572 = vpack.c.b16 %v2124, %v2120
    %v2573 = vpack.c.b16 %v2125, %v2121
    %v2574 = vpack.c.b16 %v2130, %v2126
    %v2575 = vpack.c.b16 %v2131, %v2127
    %v2576 = vpack.c.b16 %v2132, %v2128
    %v2577 = vpack.c.b16 %v2133, %v2129
    %v2578 = vpack.c.b16 %v2138, %v2134
    %v2579 = vpack.c.b16 %v2139, %v2135
    %v2580 = vpack.c.b16 %v2140, %v2136
    %v2581 = vpack.c.b16 %v2141, %v2137
    %v2582 = vpack.c.b16 %v2146, %v2142
    %v2583 = vpack.c.b16 %v2147, %v2143
    %v2584 = vpack.c.b16 %v2148, %v2144
    %v2585 = vpack.c.b16 %v2149, %v2145
    %v2586 = vpack.c.b16 %v2154, %v2150
    %v2587 = vpack.c.b16 %v2155, %v2151
    %v2588 = vpack.c.b16 %v2156, %v2152
    %v2589 = vpack.c.b16 %v2157, %v2153
    %v2590 = vpack.c.b16 %v2162, %v2158
    %v2591 = vpack.c.b16 %v2163, %v2159
    %v2592 = vpack.c.b16 %v2164, %v2160
    %v2593 = vpack.c.b16 %v2165, %v2161
    %v2594 = vpack.c.b16 %v2170, %v2166
    %v2595 = vpack.c.b16 %v2171, %v2167
    %v2596 = vpack.c.b16 %v2172, %v2168
    %v2597 = vpack.c.b16 %v2173, %v2169
    %v2598 = vpack.c.b16 %v2178, %v2174
    %v2599 = vpack.c.b16 %v2179, %v2175
    %v2600 = vpack.c.b16 %v2180, %v2176
    %v2601 = vpack.c.b16 %v2181, %v2177
    %v2602 = vpack.c.b16 %v2186, %v2182
    %v2603 = vpack.c.b16 %v2187, %v2183
    %v2604 = vpack.c.b16 %v2188, %v2184
    %v2605 = vpack.c.b16 %v2189, %v2185
    %v2606 = vpack.c.b16 %v2194, %v2190
    %v2607 = vpack.c.b16 %v2195, %v2191
    %v2608 = vpack.c.b16 %v2196, %v2192
    %v2609 = vpack.c.b16 %v2197, %v2193
    %v2610 = vpack.c.b16 %v2202, %v2198
    %v2611 = vpack.c.b16 %v2203, %v2199
    %v2612 = vpack.c.b16 %v2204, %v2200
    %v2613 = vpack.c.b16 %v2205, %v2201
    %v2614 = vpack.c.b16 %v2210, %v2206
    %v2615 = vpack.c.b16 %v2211, %v2207
    %v2616 = vpack.c.b16 %v2212, %v2208
    %v2617 = vpack.c.b16 %v2213, %v2209
    %v2618 = vpack.c.b16 %v2218, %v2214
    %v2619 = vpack.c.b16 %v2219, %v2215
    %v2620 = vpack.c.b16 %v2220, %v2216
    %v2621 = vpack.c.b16 %v2221, %v2217
    %v2622 = vpack.c.b16 %v2226, %v2222
    %v2623 = vpack.c.b16 %v2227, %v2223
    %v2624 = vpack.c.b16 %v2228, %v2224
    %v2625 = vpack.c.b16 %v2229, %v2225
    %v2626 = vpack.c.b16 %v2234, %v2230
    %v2627 = vpack.c.b16 %v2235, %v2231
    %v2628 = vpack.c.b16 %v2236, %v2232
    %v2629 = vpack.c.b16 %v2237, %v2233
    %v2630 = vpack.c.b16 %v2242, %v2238
    %v2631 = vpack.c.b16 %v2243, %v2239
    %v2632 = vpack.c.b16 %v2244, %v2240
    %v2633 = vpack.c.b16 %v2245, %v2241
    %v2634 = vpack.c.b16 %v2250, %v2246
    %v2635 = vpack.c.b16 %v2251, %v2247
    %v2636 = vpack.c.b16 %v2252, %v2248
    %v2637 = vpack.c.b16 %v2253, %v2249
    %v2638 = vpack.c.b16 %v2258, %v2254
    %v2639 = vpack.c.b16 %v2259, %v2255
    %v2640 = vpack.c.b16 %v2260, %v2256
    %v2641 = vpack.c.b16 %v2261, %v2257
    %v2642 = vpack.c.b16 %v2266, %v2262
    %v2643 = vpack.c.b16 %v2267, %v2263
    %v2644 = vpack.c.b16 %v2268, %v2264
    %v2645 = vpack.c.b16 %v2269, %v2265
    %v2646 = vpack.c.b16 %v2274, %v2270
    %v2647 = vpack.c.b16 %v2275, %v2271
    %v2648 = vpack.c.b16 %v2276, %v2272
    %v2649 = vpack.c.b16 %v2277, %v2273
    %v2650 = vpack.c.b16 %v2282, %v2278
    %v2651 = vpack.c.b16 %v2283, %v2279
    %v2652 = vpack.c.b16 %v2284, %v2280
    %v2653 = vpack.c.b16 %v2285, %v2281
    %v2654 = vpack.c.b16 %v2290, %v2286
    %v2655 = vpack.c.b16 %v2291, %v2287
    %v2656 = vpack.c.b16 %v2292, %v2288
    %v2657 = vpack.c.b16 %v2293, %v2289
    %v2658 = vpack.c.b16 %v2298, %v2294
    %v2659 = vpack.c.b16 %v2299, %v2295
    %v2660 = vpack.c.b16 %v2300, %v2296
    %v2661 = vpack.c.b16 %v2301, %v2297
    %v2662 = vpack.c.b16 %v2306, %v2302
    %v2663 = vpack.c.b16 %v2307, %v2303
    %v2664 = vpack.c.b16 %v2308, %v2304
    %v2665 = vpack.c.b16 %v2309, %v2305
    %v2666 = vpack.c.b16 %v2314, %v2310
    %v2667 = vpack.c.b16 %v2315, %v2311
    %v2668 = vpack.c.b16 %v2316, %v2312
    %v2669 = vpack.c.b16 %v2317, %v2313
    %v2670 = vpack.c.b16 %v2322, %v2318
    %v2671 = vpack.c.b16 %v2323, %v2319
    %v2672 = vpack.c.b16 %v2324, %v2320
    %v2673 = vpack.c.b16 %v2325, %v2321
    %v2674 = vpack.c.b16 %v2330, %v2326
    %v2675 = vpack.c.b16 %v2331, %v2327
    %v2676 = vpack.c.b16 %v2332, %v2328
    %v2677 = vpack.c.b16 %v2333, %v2329
    %v2678 = vpack.c.b16 %v2338, %v2334
    %v2679 = vpack.c.b16 %v2339, %v2335
    %v2680 = vpack.c.b16 %v2340, %v2336
    %v2681 = vpack.c.b16 %v2341, %v2337
    %v2682 = vpack.c.b16 %v2346, %v2342
    %v2683 = vpack.c.b16 %v2347, %v2343
    %v2684 = vpack.c.b16 %v2348, %v2344
    %v2685 = vpack.c.b16 %v2349, %v2345
    %v2686 = vpack.c.b16 %v2354, %v2350
    %v2687 = vpack.c.b16 %v2355, %v2351
    %v2688 = vpack.c.b16 %v2356, %v2352
    %v2689 = vpack.c.b16 %v2357, %v2353
    %v2690 = vpack.c.b16 %v2362, %v2358
    %v2691 = vpack.c.b16 %v2363, %v2359
    %v2692 = vpack.c.b16 %v2364, %v2360
    %v2693 = vpack.c.b16 %v2365, %v2361
    %v2694 = vpack.c.b16 %v2370, %v2366
    %v2695 = vpack.c.b16 %v2371, %v2367
    %v2696 = vpack.c.b16 %v2372, %v2368
    %v2697 = vpack.c.b16 %v2373, %v2369
    %v2698 = vpack.c.b16 %v2378, %v2374
    %v2699 = vpack.c.b16 %v2379, %v2375
    %v2700 = vpack.c.b16 %v2380, %v2376
    %v2701 = vpack.c.b16 %v2381, %v2377
    %v2702 = vpack.c.b16 %v2386, %v2382
    %v2703 = vpack.c.b16 %v2387, %v2383
    %v2704 = vpack.c.b16 %v2388, %v2384
    %v2705 = vpack.c.b16 %v2389, %v2385
    %v2706 = vpack.c.b16 %v2394, %v2390
    %v2707 = vpack.c.b16 %v2395, %v2391
    %v2708 = vpack.c.b16 %v2396, %v2392
    %v2709 = vpack.c.b16 %v2397, %v2393
    %v2710 = vpack.c.b16 %v2402, %v2398
    %v2711 = vpack.c.b16 %v2403, %v2399
    %v2712 = vpack.c.b16 %v2404, %v2400
    %v2713 = vpack.c.b16 %v2405, %v2401
    %v2714 = vpack.c.b16 %v2410, %v2406
    %v2715 = vpack.c.b16 %v2411, %v2407
    %v2716 = vpack.c.b16 %v2412, %v2408
    %v2717 = vpack.c.b16 %v2413, %v2409
    %v2718 = vpack.c.b16 %v2418, %v2414
    %v2719 = vpack.c.b16 %v2419, %v2415
    %v2720 = vpack.c.b16 %v2420, %v2416
    %v2721 = vpack.c.b16 %v2421, %v2417
    %v2722 = vpack.c.b16 %v2426, %v2422
    %v2723 = vpack.c.b16 %v2427, %v2423
    %v2724 = vpack.c.b16 %v2428, %v2424
    %v2725 = vpack.c.b16 %v2429, %v2425
    %v2726 = vpack.c.b16 %v2434, %v2430
    %v2727 = vpack.c.b16 %v2435, %v2431
    %v2728 = vpack.c.b16 %v2436, %v2432
    %v2729 = vpack.c.b16 %v2437, %v2433
    %v2730 = vpack.c.b16 %v2442, %v2438
    %v2731 = vpack.c.b16 %v2443, %v2439
    %v2732 = vpack.c.b16 %v2444, %v2440
    %v2733 = vpack.c.b16 %v2445, %v2441
    %v2734 = vpack.c.b16 %v2450, %v2446
    %v2735 = vpack.c.b16 %v2451, %v2447
    %v2736 = vpack.c.b16 %v2452, %v2448
    %v2737 = vpack.c.b16 %v2453, %v2449
    %v2738 = vpack.c.b16 %v2458, %v2454
    %v2739 = vpack.c.b16 %v2459, %v2455
    %v2740 = vpack.c.b16 %v2460, %v2456
    %v2741 = vpack.c.b16 %v2461, %v2457
    %v2742 = vpack.c.b16 %v2466, %v2462
    %v2743 = vpack.c.b16 %v2467, %v2463
    %v2744 = vpack.c.b16 %v2468, %v2464
    %v2745 = vpack.c.b16 %v2469, %v2465
    %v2746 = vpack.c.b16 %v2474, %v2470
    %v2747 = vpack.c.b16 %v2475, %v2471
    %v2748 = vpack.c.b16 %v2476, %v2472
    %v2749 = vpack.c.b16 %v2477, %v2473
    %v2750 = vpack.c.b16 %v2482, %v2478
    %v2751 = vpack.c.b16 %v2483, %v2479
    %v2752 = vpack.c.b16 %v2484, %v2480
    %v2753 = vpack.c.b16 %v2485, %v2481
    %v2754 = vpack.c.b16 %v2490, %v2486
    %v2755 = vpack.c.b16 %v2491, %v2487
    %v2756 = vpack.c.b16 %v2492, %v2488
    %v2757 = vpack.c.b16 %v2493, %v2489
    %v2758 = vpack.c.b16 %v2498, %v2494
    %v2759 = vpack.c.b16 %v2499, %v2495
    %v2760 = vpack.c.b16 %v2500, %v2496
    %v2761 = vpack.c.b16 %v2501, %v2497
    %v2762 = vpack.c.b16 %v2506, %v2502
    %v2763 = vpack.c.b16 %v2507, %v2503
    %v2764 = vpack.c.b16 %v2508, %v2504
    %v2765 = vpack.c.b16 %v2509, %v2505
    %3022 = vmatprep.subr.bf16.mxu0 %v2511
    %3023 = vmatpush1.bf16.msra.mxu0 %v2510
    %3024 = vmatprep.subr.bf16.mxu0 %v2515
    %3025 = vmatpush1.bf16.msra.mxu0 %v2514
    %3026 = vmatprep.subr.bf16.mxu0 %v2519
    %3027 = vmatpush1.bf16.msra.mxu0 %v2518
    %3028 = vmatprep.subr.bf16.mxu0 %v2523
    %3029 = vmatpush1.bf16.msra.mxu0 %v2522
    %3030 = vmatprep.subr.bf16.mxu0 %v2527
    %3031 = vmatpush1.bf16.msra.mxu0 %v2526
    %3032 = vmatprep.subr.bf16.mxu0 %v2531
    %3033 = vmatpush1.bf16.msra.mxu0 %v2530
    %3034 = vmatprep.subr.bf16.mxu0 %v2535
    %3035 = vmatpush1.bf16.msra.mxu0 %v2534
    %3036 = vmatprep.subr.bf16.mxu0 %v2539
    %3037 = vmatpush1.bf16.msra.mxu0 %v2538
    %3038 = vmatprep.subr.bf16.mxu0 %v2543
    %3039 = vmatpush1.bf16.msra.mxu0 %v2542
    %3040 = vmatprep.subr.bf16.mxu0 %v2547
    %3041 = vmatpush1.bf16.msra.mxu0 %v2546
    %3042 = vmatprep.subr.bf16.mxu0 %v2551
    %3043 = vmatpush1.bf16.msra.mxu0 %v2550
    %3044 = vmatprep.subr.bf16.mxu0 %v2555
    %3045 = vmatpush1.bf16.msra.mxu0 %v2554
    %3046 = vmatprep.subr.bf16.mxu0 %v2559
    %3047 = vmatpush1.bf16.msra.mxu0 %v2558
    %3048 = vmatprep.subr.bf16.mxu0 %v2563
    %3049 = vmatpush1.bf16.msra.mxu0 %v2562
    %3050 = vmatprep.subr.bf16.mxu0 %v2567
    %3051 = vmatpush1.bf16.msra.mxu0 %v2566
    %3052 = vmatprep.subr.bf16.mxu0 %v2571
    %3053 = vmatpush1.bf16.msra.mxu0 %v2570
    %3054 = vmatprep.mubr.bf16.mxu0 %v1453
    %3055 = vmatmul.mubr.bf16.gmra.mrb[0].mxu0 %v1452
    %v3056 = vpop.f32.mrb[0].mxu0
    %v3057 = vadd.f32 %v1725, %v3056
    %v3058 = vpop.f32.mrb[0].mxu0
    %v3059 = vadd.f32 %v1729, %v3058
    %v3060 = vpop.f32.mrb[0].mxu0
    %v3061 = vadd.f32 %v1725, %v3060
    %v3062 = vpop.f32.mrb[0].mxu0
    %v3063 = vadd.f32 %v1729, %v3062
    %3064 = vmatprep.mubr.bf16.mxu0 %v1461
    %3065 = vmatmul.mubr.bf16.gmra.mrb[0].mxu0 %v1460
    %v3066 = vpop.f32.mrb[0].mxu0
    %v3067 = vadd.f32 %v1725, %v3066
    %v3068 = vpop.f32.mrb[0].mxu0
    %v3069 = vadd.f32 %v1729, %v3068
    %v3070 = vpop.f32.mrb[0].mxu0
    %v3071 = vpop.f32.mrb[0].mxu0
    %3072 = vdwg.mxu0
    %3073 = vmatprep.subr.bf16.mxu0 %v2575
    %3074 = vmatpush1.bf16.msra.mxu0 %v2574
    %3075 = vmatprep.subr.bf16.mxu0 %v2579
    %3076 = vmatpush1.bf16.msra.mxu0 %v2578
    %3077 = vmatprep.subr.bf16.mxu0 %v2583
    %3078 = vmatpush1.bf16.msra.mxu0 %v2582
    %3079 = vmatprep.subr.bf16.mxu0 %v2587
    %3080 = vmatpush1.bf16.msra.mxu0 %v2586
    %3081 = vmatprep.subr.bf16.mxu0 %v2591
    %3082 = vmatpush1.bf16.msra.mxu0 %v2590
    %3083 = vmatprep.subr.bf16.mxu0 %v2595
    %3084 = vmatpush1.bf16.msra.mxu0 %v2594
    %3085 = vmatprep.subr.bf16.mxu0 %v2599
    %3086 = vmatpush1.bf16.msra.mxu0 %v2598
    %3087 = vmatprep.subr.bf16.mxu0 %v2603
    %3088 = vmatpush1.bf16.msra.mxu0 %v2602
    %3089 = vmatprep.subr.bf16.mxu0 %v2607
    %3090 = vmatpush1.bf16.msra.mxu0 %v2606
    %3091 = vmatprep.subr.bf16.mxu0 %v2611
    %3092 = vmatpush1.bf16.msra.mxu0 %v2610
    %3093 = vmatprep.subr.bf16.mxu0 %v2615
    %3094 = vmatpush1.bf16.msra.mxu0 %v2614
    %3095 = vmatprep.subr.bf16.mxu0 %v2619
    %3096 = vmatpush1.bf16.msra.mxu0 %v2618
    %3097 = vmatprep.subr.bf16.mxu0 %v2623
    %3098 = vmatpush1.bf16.msra.mxu0 %v2622
    %3099 = vmatprep.subr.bf16.mxu0 %v2627
    %3100 = vmatpush1.bf16.msra.mxu0 %v2626
    %3101 = vmatprep.subr.bf16.mxu0 %v2631
    %3102 = vmatpush1.bf16.msra.mxu0 %v2630
    %3103 = vmatprep.subr.bf16.mxu0 %v2635
    %3104 = vmatpush1.bf16.msra.mxu0 %v2634
    %3105 = vmatprep.mubr.bf16.mxu0 %v1455
    %3106 = vmatmul.mubr.bf16.gmra.mrb[0].mxu0 %v1454
    %v3107 = vpop.f32.mrb[0].mxu0
    %v3108 = vadd.f32 %v3057, %v3107
    %v3109 = vpop.f32.mrb[0].mxu0
    %v3110 = vadd.f32 %v3059, %v3109
    %v3111 = vpop.f32.mrb[0].mxu0
    %v3112 = vadd.f32 %v3061, %v3111
    %v3113 = vpop.f32.mrb[0].mxu0
    %v3114 = vadd.f32 %v3063, %v3113
    %3115 = vmatprep.mubr.bf16.mxu0 %v1463
    %3116 = vmatmul.mubr.bf16.gmra.mrb[0].mxu0 %v1462
    %v3117 = vpop.f32.mrb[0].mxu0
    %v3118 = vadd.f32 %v3067, %v3117
    %v3119 = vpop.f32.mrb[0].mxu0
    %v3120 = vadd.f32 %v3069, %v3119
    %v3121 = vpop.f32.mrb[0].mxu0
    %v3122 = vpop.f32.mrb[0].mxu0
    %3123 = vdwg.mxu0
    %3124 = vmatprep.subr.bf16.mxu0 %v2639
    %3125 = vmatpush1.bf16.msra.mxu0 %v2638
    %3126 = vmatprep.subr.bf16.mxu0 %v2643
    %3127 = vmatpush1.bf16.msra.mxu0 %v2642
    %3128 = vmatprep.subr.bf16.mxu0 %v2647
    %3129 = vmatpush1.bf16.msra.mxu0 %v2646
    %3130 = vmatprep.subr.bf16.mxu0 %v2651
    %3131 = vmatpush1.bf16.msra.mxu0 %v2650
    %3132 = vmatprep.subr.bf16.mxu0 %v2655
    %3133 = vmatpush1.bf16.msra.mxu0 %v2654
    %3134 = vmatprep.subr.bf16.mxu0 %v2659
    %3135 = vmatpush1.bf16.msra.mxu0 %v2658
    %3136 = vmatprep.subr.bf16.mxu0 %v2663
    %3137 = vmatpush1.bf16.msra.mxu0 %v2662
    %3138 = vmatprep.subr.bf16.mxu0 %v2667
    %3139 = vmatpush1.bf16.msra.mxu0 %v2666
    %3140 = vmatprep.subr.bf16.mxu0 %v2671
    %3141 = vmatpush1.bf16.msra.mxu0 %v2670
    %3142 = vmatprep.subr.bf16.mxu0 %v2675
    %3143 = vmatpush1.bf16.msra.mxu0 %v2674
    %3144 = vmatprep.subr.bf16.mxu0 %v2679
    %3145 = vmatpush1.bf16.msra.mxu0 %v2678
    %3146 = vmatprep.subr.bf16.mxu0 %v2683
    %3147 = vmatpush1.bf16.msra.mxu0 %v2682
    %3148 = vmatprep.subr.bf16.mxu0 %v2687
    %3149 = vmatpush1.bf16.msra.mxu0 %v2686
    %3150 = vmatprep.subr.bf16.mxu0 %v2691
    %3151 = vmatpush1.bf16.msra.mxu0 %v2690
    %3152 = vmatprep.subr.bf16.mxu0 %v2695
    %3153 = vmatpush1.bf16.msra.mxu0 %v2694
    %3154 = vmatprep.subr.bf16.mxu0 %v2699
    %3155 = vmatpush1.bf16.msra.mxu0 %v2698
    %3156 = vmatprep.mubr.bf16.mxu0 %v1457
    %3157 = vmatmul.mubr.bf16.gmra.mrb[0].mxu0 %v1456
    %v3158 = vpop.f32.mrb[0].mxu0
    %v3159 = vadd.f32 %v3108, %v3158
    %v3160 = vpop.f32.mrb[0].mxu0
    %v3161 = vadd.f32 %v3110, %v3160
    %v3162 = vpop.f32.mrb[0].mxu0
    %v3163 = vadd.f32 %v3112, %v3162
    %v3164 = vpop.f32.mrb[0].mxu0
    %v3165 = vadd.f32 %v3114, %v3164
    %3166 = vmatprep.mubr.bf16.mxu0 %v566
    %3167 = vmatmul.mubr.bf16.gmra.mrb[0].mxu0 %v566
    %v3168 = vpop.f32.mrb[0].mxu0
    %v3169 = vadd.f32 %v3118, %v3168
    %v3170 = vpop.f32.mrb[0].mxu0
    %v3171 = vadd.f32 %v3120, %v3170
    %v3172 = vpop.f32.mrb[0].mxu0
    %v3173 = vpop.f32.mrb[0].mxu0
    %3174 = vdwg.mxu0
    %3175 = vmatprep.subr.bf16.mxu0 %v2703
    %3176 = vmatpush1.bf16.msra.mxu0 %v2702
    %3177 = vmatprep.subr.bf16.mxu0 %v2707
    %3178 = vmatpush1.bf16.msra.mxu0 %v2706
    %3179 = vmatprep.subr.bf16.mxu0 %v2711
    %3180 = vmatpush1.bf16.msra.mxu0 %v2710
    %3181 = vmatprep.subr.bf16.mxu0 %v2715
    %3182 = vmatpush1.bf16.msra.mxu0 %v2714
    %3183 = vmatprep.subr.bf16.mxu0 %v2719
    %3184 = vmatpush1.bf16.msra.mxu0 %v2718
    %3185 = vmatprep.subr.bf16.mxu0 %v2723
    %3186 = vmatpush1.bf16.msra.mxu0 %v2722
    %3187 = vmatprep.subr.bf16.mxu0 %v2727
    %3188 = vmatpush1.bf16.msra.mxu0 %v2726
    %3189 = vmatprep.subr.bf16.mxu0 %v2731
    %3190 = vmatpush1.bf16.msra.mxu0 %v2730
    %3191 = vmatprep.subr.bf16.mxu0 %v2735
    %3192 = vmatpush1.bf16.msra.mxu0 %v2734
    %3193 = vmatprep.subr.bf16.mxu0 %v2739
    %3194 = vmatpush1.bf16.msra.mxu0 %v2738
    %3195 = vmatprep.subr.bf16.mxu0 %v2743
    %3196 = vmatpush1.bf16.msra.mxu0 %v2742
    %3197 = vmatprep.subr.bf16.mxu0 %v2747
    %3198 = vmatpush1.bf16.msra.mxu0 %v2746
    %3199 = vmatprep.subr.bf16.mxu0 %v2751
    %3200 = vmatpush1.bf16.msra.mxu0 %v2750
    %3201 = vmatprep.subr.bf16.mxu0 %v2755
    %3202 = vmatpush1.bf16.msra.mxu0 %v2754
    %3203 = vmatprep.subr.bf16.mxu0 %v2759
    %3204 = vmatpush1.bf16.msra.mxu0 %v2758
    %3205 = vmatprep.subr.bf16.mxu0 %v2763
    %3206 = vmatpush1.bf16.msra.mxu0 %v2762
    %3207 = vmatprep.mubr.bf16.mxu0 %v1459
    %3208 = vmatmul.mubr.bf16.gmra.mrb[0].mxu0 %v1458
    %v3209 = vpop.f32.mrb[0].mxu0
    %v3210 = vadd.f32 %v3159, %v3209
    %v3211 = vpop.f32.mrb[0].mxu0
    %v3212 = vadd.f32 %v3161, %v3211
    %v3213 = vpop.f32.mrb[0].mxu0
    %v3214 = vadd.f32 %v3163, %v3213
    %v3215 = vpop.f32.mrb[0].mxu0
    %v3216 = vadd.f32 %v3165, %v3215
    %3217 = vmatprep.mubr.bf16.mxu0 %v567
    %3218 = vmatmul.mubr.bf16.gmra.mrb[0].mxu0 %v567
    %v3219 = vpop.f32.mrb[0].mxu0
    %v3220 = vadd.f32 %v3169, %v3219
    %v3221 = vpop.f32.mrb[0].mxu0
    %v3222 = vadd.f32 %v3171, %v3221
    %v3223 = vpop.f32.mrb[0].mxu0
    %v3224 = vpop.f32.mrb[0].mxu0
    %3225 = vdwg.mxu0
    %3226 = vmatprep.subr.bf16.mxu0 %v2513
    %3227 = vmatpush1.bf16.msra.mxu0 %v2512
    %3228 = vmatprep.subr.bf16.mxu0 %v2517
    %3229 = vmatpush1.bf16.msra.mxu0 %v2516
    %3230 = vmatprep.subr.bf16.mxu0 %v2521
    %3231 = vmatpush1.bf16.msra.mxu0 %v2520
    %3232 = vmatprep.subr.bf16.mxu0 %v2525
    %3233 = vmatpush1.bf16.msra.mxu0 %v2524
    %3234 = vmatprep.subr.bf16.mxu0 %v2529
    %3235 = vmatpush1.bf16.msra.mxu0 %v2528
    %3236 = vmatprep.subr.bf16.mxu0 %v2533
    %3237 = vmatpush1.bf16.msra.mxu0 %v2532
    %3238 = vmatprep.subr.bf16.mxu0 %v2537
    %3239 = vmatpush1.bf16.msra.mxu0 %v2536
    %3240 = vmatprep.subr.bf16.mxu0 %v2541
    %3241 = vmatpush1.bf16.msra.mxu0 %v2540
    %3242 = vmatprep.subr.bf16.mxu0 %v2545
    %3243 = vmatpush1.bf16.msra.mxu0 %v2544
    %3244 = vmatprep.subr.bf16.mxu0 %v2549
    %3245 = vmatpush1.bf16.msra.mxu0 %v2548
    %3246 = vmatprep.subr.bf16.mxu0 %v2553
    %3247 = vmatpush1.bf16.msra.mxu0 %v2552
    %3248 = vmatprep.subr.bf16.mxu0 %v2557
    %3249 = vmatpush1.bf16.msra.mxu0 %v2556
    %3250 = vmatprep.subr.bf16.mxu0 %v2561
    %3251 = vmatpush1.bf16.msra.mxu0 %v2560
    %3252 = vmatprep.subr.bf16.mxu0 %v2565
    %3253 = vmatpush1.bf16.msra.mxu0 %v2564
    %3254 = vmatprep.subr.bf16.mxu0 %v2569
    %3255 = vmatpush1.bf16.msra.mxu0 %v2568
    %3256 = vmatprep.subr.bf16.mxu0 %v2573
    %3257 = vmatpush1.bf16.msra.mxu0 %v2572
    %3258 = vmatprep.mubr.bf16.mxu0 %v1453
    %3259 = vmatmul.mubr.bf16.gmra.mrb[0].mxu0 %v1452
    %v3260 = vpop.f32.mrb[0].mxu0
    %v3261 = vadd.f32 %v1733, %v3260
    %v3262 = vpop.f32.mrb[0].mxu0
    %v3263 = vadd.f32 %v1737, %v3262
    %v3264 = vpop.f32.mrb[0].mxu0
    %v3265 = vadd.f32 %v1733, %v3264
    %v3266 = vpop.f32.mrb[0].mxu0
    %v3267 = vadd.f32 %v1737, %v3266
    %3268 = vmatprep.mubr.bf16.mxu0 %v1461
    %3269 = vmatmul.mubr.bf16.gmra.mrb[0].mxu0 %v1460
    %v3270 = vpop.f32.mrb[0].mxu0
    %v3271 = vadd.f32 %v1733, %v3270
    %v3272 = vpop.f32.mrb[0].mxu0
    %v3273 = vadd.f32 %v1737, %v3272
    %v3274 = vpop.f32.mrb[0].mxu0
    %v3275 = vpop.f32.mrb[0].mxu0
    %3276 = vdwg.mxu0
    %3277 = vmatprep.subr.bf16.mxu0 %v2577
    %3278 = vmatpush1.bf16.msra.mxu0 %v2576
    %3279 = vmatprep.subr.bf16.mxu0 %v2581
    %3280 = vmatpush1.bf16.msra.mxu0 %v2580
    %3281 = vmatprep.subr.bf16.mxu0 %v2585
    %3282 = vmatpush1.bf16.msra.mxu0 %v2584
    %3283 = vmatprep.subr.bf16.mxu0 %v2589
    %3284 = vmatpush1.bf16.msra.mxu0 %v2588
    %3285 = vmatprep.subr.bf16.mxu0 %v2593
    %3286 = vmatpush1.bf16.msra.mxu0 %v2592
    %3287 = vmatprep.subr.bf16.mxu0 %v2597
    %3288 = vmatpush1.bf16.msra.mxu0 %v2596
    %3289 = vmatprep.subr.bf16.mxu0 %v2601
    %3290 = vmatpush1.bf16.msra.mxu0 %v2600
    %3291 = vmatprep.subr.bf16.mxu0 %v2605
    %3292 = vmatpush1.bf16.msra.mxu0 %v2604
    %3293 = vmatprep.subr.bf16.mxu0 %v2609
    %3294 = vmatpush1.bf16.msra.mxu0 %v2608
    %3295 = vmatprep.subr.bf16.mxu0 %v2613
    %3296 = vmatpush1.bf16.msra.mxu0 %v2612
    %3297 = vmatprep.subr.bf16.mxu0 %v2617
    %3298 = vmatpush1.bf16.msra.mxu0 %v2616
    %3299 = vmatprep.subr.bf16.mxu0 %v2621
    %3300 = vmatpush1.bf16.msra.mxu0 %v2620
    %3301 = vmatprep.subr.bf16.mxu0 %v2625
    %3302 = vmatpush1.bf16.msra.mxu0 %v2624
    %3303 = vmatprep.subr.bf16.mxu0 %v2629
    %3304 = vmatpush1.bf16.msra.mxu0 %v2628
    %3305 = vmatprep.subr.bf16.mxu0 %v2633
    %3306 = vmatpush1.bf16.msra.mxu0 %v2632
    %3307 = vmatprep.subr.bf16.mxu0 %v2637
    %3308 = vmatpush1.bf16.msra.mxu0 %v2636
    %3309 = vmatprep.mubr.bf16.mxu0 %v1455
    %3310 = vmatmul.mubr.bf16.gmra.mrb[0].mxu0 %v1454
    %v3311 = vpop.f32.mrb[0].mxu0
    %v3312 = vadd.f32 %v3261, %v3311
    %v3313 = vpop.f32.mrb[0].mxu0
    %v3314 = vadd.f32 %v3263, %v3313
    %v3315 = vpop.f32.mrb[0].mxu0
    %v3316 = vadd.f32 %v3265, %v3315
    %v3317 = vpop.f32.mrb[0].mxu0
    %v3318 = vadd.f32 %v3267, %v3317
    %3319 = vmatprep.mubr.bf16.mxu0 %v1463
    %3320 = vmatmul.mubr.bf16.gmra.mrb[0].mxu0 %v1462
    %v3321 = vpop.f32.mrb[0].mxu0
    %v3322 = vadd.f32 %v3271, %v3321
    %v3323 = vpop.f32.mrb[0].mxu0
    %v3324 = vadd.f32 %v3273, %v3323
    %v3325 = vpop.f32.mrb[0].mxu0
    %v3326 = vpop.f32.mrb[0].mxu0
    %3327 = vdwg.mxu0
    %3328 = vmatprep.subr.bf16.mxu0 %v2641
    %3329 = vmatpush1.bf16.msra.mxu0 %v2640
    %3330 = vmatprep.subr.bf16.mxu0 %v2645
    %3331 = vmatpush1.bf16.msra.mxu0 %v2644
    %3332 = vmatprep.subr.bf16.mxu0 %v2649
    %3333 = vmatpush1.bf16.msra.mxu0 %v2648
    %3334 = vmatprep.subr.bf16.mxu0 %v2653
    %3335 = vmatpush1.bf16.msra.mxu0 %v2652
    %3336 = vmatprep.subr.bf16.mxu0 %v2657
    %3337 = vmatpush1.bf16.msra.mxu0 %v2656
    %3338 = vmatprep.subr.bf16.mxu0 %v2661
    %3339 = vmatpush1.bf16.msra.mxu0 %v2660
    %3340 = vmatprep.subr.bf16.mxu0 %v2665
    %3341 = vmatpush1.bf16.msra.mxu0 %v2664
    %3342 = vmatprep.subr.bf16.mxu0 %v2669
    %3343 = vmatpush1.bf16.msra.mxu0 %v2668
    %3344 = vmatprep.subr.bf16.mxu0 %v2673
    %3345 = vmatpush1.bf16.msra.mxu0 %v2672
    %3346 = vmatprep.subr.bf16.mxu0 %v2677
    %3347 = vmatpush1.bf16.msra.mxu0 %v2676
    %3348 = vmatprep.subr.bf16.mxu0 %v2681
    %3349 = vmatpush1.bf16.msra.mxu0 %v2680
    %3350 = vmatprep.subr.bf16.mxu0 %v2685
    %3351 = vmatpush1.bf16.msra.mxu0 %v2684
    %3352 = vmatprep.subr.bf16.mxu0 %v2689
    %3353 = vmatpush1.bf16.msra.mxu0 %v2688
    %3354 = vmatprep.subr.bf16.mxu0 %v2693
    %3355 = vmatpush1.bf16.msra.mxu0 %v2692
    %3356 = vmatprep.subr.bf16.mxu0 %v2697
    %3357 = vmatpush1.bf16.msra.mxu0 %v2696
    %3358 = vmatprep.subr.bf16.mxu0 %v2701
    %3359 = vmatpush1.bf16.msra.mxu0 %v2700
    %3360 = vmatprep.mubr.bf16.mxu0 %v1457
    %3361 = vmatmul.mubr.bf16.gmra.mrb[0].mxu0 %v1456
    %v3362 = vpop.f32.mrb[0].mxu0
    %v3363 = vadd.f32 %v3312, %v3362
    %v3364 = vpop.f32.mrb[0].mxu0
    %v3365 = vadd.f32 %v3314, %v3364
    %v3366 = vpop.f32.mrb[0].mxu0
    %v3367 = vadd.f32 %v3316, %v3366
    %v3368 = vpop.f32.mrb[0].mxu0
    %v3369 = vadd.f32 %v3318, %v3368
    %3370 = vmatprep.mubr.bf16.mxu0 %v566
    %3371 = vmatmul.mubr.bf16.gmra.mrb[0].mxu0 %v566
    %v3372 = vpop.f32.mrb[0].mxu0
    %v3373 = vadd.f32 %v3322, %v3372
    %v3374 = vpop.f32.mrb[0].mxu0
    %v3375 = vadd.f32 %v3324, %v3374
    %v3376 = vpop.f32.mrb[0].mxu0
    %v3377 = vpop.f32.mrb[0].mxu0
    %3378 = vdwg.mxu0
    %3379 = vmatprep.subr.bf16.mxu0 %v2705
    %3380 = vmatpush1.bf16.msra.mxu0 %v2704
    %3381 = vmatprep.subr.bf16.mxu0 %v2709
    %3382 = vmatpush1.bf16.msra.mxu0 %v2708
    %3383 = vmatprep.subr.bf16.mxu0 %v2713
    %3384 = vmatpush1.bf16.msra.mxu0 %v2712
    %3385 = vmatprep.subr.bf16.mxu0 %v2717
    %3386 = vmatpush1.bf16.msra.mxu0 %v2716
    %3387 = vmatprep.subr.bf16.mxu0 %v2721
    %3388 = vmatpush1.bf16.msra.mxu0 %v2720
    %3389 = vmatprep.subr.bf16.mxu0 %v2725
    %3390 = vmatpush1.bf16.msra.mxu0 %v2724
    %3391 = vmatprep.subr.bf16.mxu0 %v2729
    %3392 = vmatpush1.bf16.msra.mxu0 %v2728
    %3393 = vmatprep.subr.bf16.mxu0 %v2733
    %3394 = vmatpush1.bf16.msra.mxu0 %v2732
    %3395 = vmatprep.subr.bf16.mxu0 %v2737
    %3396 = vmatpush1.bf16.msra.mxu0 %v2736
    %3397 = vmatprep.subr.bf16.mxu0 %v2741
    %3398 = vmatpush1.bf16.msra.mxu0 %v2740
    %3399 = vmatprep.subr.bf16.mxu0 %v2745
    %3400 = vmatpush1.bf16.msra.mxu0 %v2744
    %3401 = vmatprep.subr.bf16.mxu0 %v2749
    %3402 = vmatpush1.bf16.msra.mxu0 %v2748
    %3403 = vmatprep.subr.bf16.mxu0 %v2753
    %3404 = vmatpush1.bf16.msra.mxu0 %v2752
    %3405 = vmatprep.subr.bf16.mxu0 %v2757
    %3406 = vmatpush1.bf16.msra.mxu0 %v2756
    %3407 = vmatprep.subr.bf16.mxu0 %v2761
    %3408 = vmatpush1.bf16.msra.mxu0 %v2760
    %3409 = vmatprep.subr.bf16.mxu0 %v2765
    %3410 = vmatpush1.bf16.msra.mxu0 %v2764
    %3411 = vmatprep.mubr.bf16.mxu0 %v1459
    %3412 = vmatmul.mubr.bf16.gmra.mrb[0].mxu0 %v1458
    %v3413 = vpop.f32.mrb[0].mxu0
    %v3414 = vadd.f32 %v3363, %v3413
    %v3415 = vpop.f32.mrb[0].mxu0
    %v3416 = vadd.f32 %v3365, %v3415
    %v3417 = vpop.f32.mrb[0].mxu0
    %v3418 = vadd.f32 %v3367, %v3417
    %v3419 = vpop.f32.mrb[0].mxu0
    %v3420 = vadd.f32 %v3369, %v3419
    %3421 = vmatprep.mubr.bf16.mxu0 %v567
    %3422 = vmatmul.mubr.bf16.gmra.mrb[0].mxu0 %v567
    %v3423 = vpop.f32.mrb[0].mxu0
    %v3424 = vadd.f32 %v3373, %v3423
    %v3425 = vpop.f32.mrb[0].mxu0
    %v3426 = vadd.f32 %v3375, %v3425
    %v3427 = vpop.f32.mrb[0].mxu0
    %v3428 = vpop.f32.mrb[0].mxu0
    %3429 = vdwg.mxu0
    %vm3430 = vcmp.gt.f32.partialorder %v3210, 0.0
    %vm3431 = vcmp.gt.f32.partialorder %v3212, 0.0
    %vm3432 = vcmp.gt.f32.partialorder %v3414, 0.0
    %vm3433 = vcmp.gt.f32.partialorder %v3416, 0.0
    %vm3434 = vcmp.gt.f32.partialorder %v3214, 0.0
    %vm3435 = vcmp.gt.f32.partialorder %v3216, 0.0
    %vm3436 = vcmp.gt.f32.partialorder %v3418, 0.0
    %vm3437 = vcmp.gt.f32.partialorder %v3420, 0.0
    %vm3438 = vcmp.gt.f32.partialorder %v3220, 0.0
    %vm3439 = vcmp.gt.f32.partialorder %v3222, 0.0
    %vm3440 = vcmp.gt.f32.partialorder %v3424, 0.0
    %vm3441 = vcmp.gt.f32.partialorder %v3426, 0.0
    %v3442 = vmul.f32 %v3210, 0.01
    %v3443 = vmul.f32 %v3212, 0.01
    %v3444 = vmul.f32 %v3414, 0.01
    %v3445 = vmul.f32 %v3416, 0.01
    %v3446 = vmul.f32 %v3214, 0.01
    %v3447 = vmul.f32 %v3216, 0.01
    %v3448 = vmul.f32 %v3418, 0.01
    %v3449 = vmul.f32 %v3420, 0.01
    %v3450 = vmul.f32 %v3220, 0.01
    %v3451 = vmul.f32 %v3222, 0.01
    %v3452 = vmul.f32 %v3424, 0.01
    %v3453 = vmul.f32 %v3426, 0.01
    %v3454 = vsel %vm3430, %v3210, %v3442
    %v3455 = vsel %vm3431, %v3212, %v3443
    %v3456 = vsel %vm3432, %v3414, %v3444
    %v3457 = vsel %vm3433, %v3416, %v3445
    %v3458 = vsel %vm3434, %v3214, %v3446
    %v3459 = vsel %vm3435, %v3216, %v3447
    %v3460 = vsel %vm3436, %v3418, %v3448
    %v3461 = vsel %vm3437, %v3420, %v3449
    %v3462 = vsel %vm3438, %v3220, %v3450
    %v3463 = vsel %vm3439, %v3222, %v3451
    %v3464 = vsel %vm3440, %v3424, %v3452
    %v3465 = vsel %vm3441, %v3426, %v3453
    %v3466 = vld [vmem:[%s11] sm:$0xf]
    %v3467 = vld [vmem:[%s12] sm:$0xf]
    %v3468 = vadd.f32 %v3454, %v3458
    %v3469 = vsel %vm465, %v3462, 0.0
    %v3470 = vadd.f32 %v3468, %v3469
    %v3471 = vrot.slane %v3470, 4
    %v3472 = vadd.f32 %v3470, %v3471
    %v3473 = vrot.slane %v3472, 2
    %v3474 = vadd.f32 %v3472, %v3473
    %v3475 = vrot.slane %v3474, 1
    %v3476 = vadd.f32 %v3474, %v3475
    %v3477 = vadd.f32 %v3455, %v3459
    %v3478 = vsel %vm465, %v3463, 0.0
    %v3479 = vadd.f32 %v3477, %v3478
    %v3480 = vrot.slane %v3479, 4
    %v3481 = vadd.f32 %v3479, %v3480
    %v3482 = vrot.slane %v3481, 2
    %v3483 = vadd.f32 %v3481, %v3482
    %v3484 = vrot.slane %v3483, 1
    %v3485 = vadd.f32 %v3483, %v3484
    %v3486 = vadd.f32 %v3456, %v3460
    %v3487 = vsel %vm465, %v3464, 0.0
    %v3488 = vadd.f32 %v3486, %v3487
    %v3489 = vrot.slane %v3488, 4
    %v3490 = vadd.f32 %v3488, %v3489
    %v3491 = vrot.slane %v3490, 2
    %v3492 = vadd.f32 %v3490, %v3491
    %v3493 = vrot.slane %v3492, 1
    %v3494 = vadd.f32 %v3492, %v3493
    %v3495 = vadd.f32 %v3457, %v3461
    %v3496 = vsel %vm465, %v3465, 0.0
    %v3497 = vadd.f32 %v3495, %v3496
    %v3498 = vrot.slane %v3497, 4
    %v3499 = vadd.f32 %v3497, %v3498
    %v3500 = vrot.slane %v3499, 2
    %v3501 = vadd.f32 %v3499, %v3500
    %v3502 = vrot.slane %v3501, 1
    %v3503 = vadd.f32 %v3501, %v3502
    %v3504 = vmul.f32 %v3454, %v3454
    %v3505 = vmul.f32 %v3455, %v3455
    %v3506 = vmul.f32 %v3456, %v3456
    %v3507 = vmul.f32 %v3457, %v3457
    %v3508 = vmul.f32 %v3458, %v3458
    %v3509 = vmul.f32 %v3459, %v3459
    %v3510 = vmul.f32 %v3460, %v3460
    %v3511 = vmul.f32 %v3461, %v3461
    %v3512 = vmul.f32 %v3462, %v3462
    %v3513 = vmul.f32 %v3463, %v3463
    %v3514 = vmul.f32 %v3464, %v3464
    %v3515 = vmul.f32 %v3465, %v3465
    %v3516 = vadd.f32 %v3504, %v3508
    %v3517 = vsel %vm465, %v3512, 0.0
    %v3518 = vadd.f32 %v3516, %v3517
    %v3519 = vrot.slane %v3518, 4
    %v3520 = vadd.f32 %v3518, %v3519
    %v3521 = vrot.slane %v3520, 2
    %v3522 = vadd.f32 %v3520, %v3521
    %v3523 = vrot.slane %v3522, 1
    %v3524 = vadd.f32 %v3522, %v3523
    %v3525 = vadd.f32 %v3505, %v3509
    %v3526 = vsel %vm465, %v3513, 0.0
    %v3527 = vadd.f32 %v3525, %v3526
    %v3528 = vrot.slane %v3527, 4
    %v3529 = vadd.f32 %v3527, %v3528
    %v3530 = vrot.slane %v3529, 2
    %v3531 = vadd.f32 %v3529, %v3530
    %v3532 = vrot.slane %v3531, 1
    %v3533 = vadd.f32 %v3531, %v3532
    %v3534 = vadd.f32 %v3506, %v3510
    %v3535 = vsel %vm465, %v3514, 0.0
    %v3536 = vadd.f32 %v3534, %v3535
    %v3537 = vrot.slane %v3536, 4
    %v3538 = vadd.f32 %v3536, %v3537
    %v3539 = vrot.slane %v3538, 2
    %v3540 = vadd.f32 %v3538, %v3539
    %v3541 = vrot.slane %v3540, 1
    %v3542 = vadd.f32 %v3540, %v3541
    %v3543 = vadd.f32 %v3507, %v3511
    %v3544 = vsel %vm465, %v3515, 0.0
    %v3545 = vadd.f32 %v3543, %v3544
    %v3546 = vrot.slane %v3545, 4
    %v3547 = vadd.f32 %v3545, %v3546
    %v3548 = vrot.slane %v3547, 2
    %v3549 = vadd.f32 %v3547, %v3548
    %v3550 = vrot.slane %v3549, 1
    %v3551 = vadd.f32 %v3549, %v3550
    %v3552 = vrcp.pop 18.0
    %v3553 = vmul.f32 %v3476, %v3552
    %v3554 = vmul.f32 %v3485, %v3552
    %v3555 = vmul.f32 %v3494, %v3552
    %v3556 = vmul.f32 %v3503, %v3552
    %v3557 = vmul.f32 %v3524, %v3552
    %v3558 = vmul.f32 %v3533, %v3552
    %v3559 = vmul.f32 %v3542, %v3552
    %v3560 = vmul.f32 %v3551, %v3552
    %v3561 = vmul.f32 %v3553, %v3553
    %v3562 = vmul.f32 %v3554, %v3554
    %v3563 = vmul.f32 %v3555, %v3555
    %v3564 = vmul.f32 %v3556, %v3556
    %v3565 = vsub.f32 %v3557, %v3561
    %v3566 = vsub.f32 %v3558, %v3562
    %v3567 = vsub.f32 %v3559, %v3563
    %v3568 = vsub.f32 %v3560, %v3564
    %v3569 = vmax.f32 %v3565, 0.0
    %v3570 = vmax.f32 %v3566, 0.0
    %v3571 = vmax.f32 %v3567, 0.0
    %v3572 = vmax.f32 %v3568, 0.0
    %v3573 = vadd.f32 %v3569, 1e-05
    %v3574 = vadd.f32 %v3570, 1e-05
    %v3575 = vadd.f32 %v3571, 1e-05
    %v3576 = vadd.f32 %v3572, 1e-05
    %v3577 = vrsqrt.pop %v3573
    %v3578 = vrsqrt.pop %v3574
    %v3579 = vrsqrt.pop %v3575
    %v3580 = vrsqrt.pop %v3576
    %v3585 = vcombine.low %v3577, %v3578
    %v3586 = vcombine.low %v3579, %v3580
    %v3588 = vunpack.c.l.s4 1966171168
    %v3589 = vunpack.c.0.s8 %v3588
    %v3590 = vlaneseq
    %v3591 = vshrl.u32 %v3590, 7
    %v3592 = vsub.s32 %v3589, %v3591
    %v3593 = vrot.slane %v3585, %v3592
    %v3595 = vunpack.c.l.s4 1966171168
    %v3596 = vunpack.c.0.s8 %v3595
    %v3597 = vlaneseq
    %v3598 = vshrl.u32 %v3597, 7
    %v3599 = vsub.s32 %v3596, %v3598
    %v3600 = vrot.slane %v3586, %v3599
    %v3601 = vcombine.low %v3593, %v3600
    %v3603 = vunpack.c.l.s4 1966171168
    %v3604 = vunpack.c.0.s8 %v3603
    %v3605 = vlaneseq
    %v3606 = vshrl.u32 %v3605, 7
    %v3607 = vsub.s32 %v3604, %v3606
    %v3608 = vrot.slane %v3601, %v3607
    %v3610 = vmul.f32 %v3466, %v3608
    %v3612 = vlaneseq
    %v3613 = vshrl.u32 %v3612, 7
    %v3614 = vsub.s32 0, %v3613
    %v3615 = vrot.slane %v3610, %v3614
    %v3616 = vlaneseq
    %v3617 = vshrl.u32 %v3616, 7
    %v3618 = vsub.s32 1, %v3617
    %v3619 = vrot.slane %v3610, %v3618
    %v3620 = vlaneseq
    %v3621 = vshrl.u32 %v3620, 7
    %v3622 = vsub.s32 2, %v3621
    %v3623 = vrot.slane %v3610, %v3622
    %v3624 = vlaneseq
    %v3625 = vshrl.u32 %v3624, 7
    %v3626 = vsub.s32 3, %v3625
    %v3627 = vrot.slane %v3610, %v3626
    %v3632 = vmul.f32 %v3553, %v3615
    %v3633 = vmul.f32 %v3554, %v3619
    %v3634 = vmul.f32 %v3555, %v3623
    %v3635 = vmul.f32 %v3556, %v3627
    %v3640 = vcombine.low %v3632, %v3633
    %v3641 = vcombine.low %v3634, %v3635
    %v3643 = vunpack.c.l.s4 1966171168
    %v3644 = vunpack.c.0.s8 %v3643
    %v3645 = vlaneseq
    %v3646 = vshrl.u32 %v3645, 7
    %v3647 = vsub.s32 %v3644, %v3646
    %v3648 = vrot.slane %v3640, %v3647
    %v3650 = vunpack.c.l.s4 1966171168
    %v3651 = vunpack.c.0.s8 %v3650
    %v3652 = vlaneseq
    %v3653 = vshrl.u32 %v3652, 7
    %v3654 = vsub.s32 %v3651, %v3653
    %v3655 = vrot.slane %v3641, %v3654
    %v3656 = vcombine.low %v3648, %v3655
    %v3658 = vunpack.c.l.s4 1966171168
    %v3659 = vunpack.c.0.s8 %v3658
    %v3660 = vlaneseq
    %v3661 = vshrl.u32 %v3660, 7
    %v3662 = vsub.s32 %v3659, %v3661
    %v3663 = vrot.slane %v3656, %v3662
    %v3665 = vsub.f32 %v3467, %v3663
    %v3666 = vmul.f32 %v3454, %v3615
    %v3667 = vmul.f32 %v3455, %v3619
    %v3668 = vmul.f32 %v3456, %v3623
    %v3669 = vmul.f32 %v3457, %v3627
    %v3670 = vmul.f32 %v3458, %v3615
    %v3671 = vmul.f32 %v3459, %v3619
    %v3672 = vmul.f32 %v3460, %v3623
    %v3673 = vmul.f32 %v3461, %v3627
    %v3675 = vlaneseq
    %v3676 = vshrl.u32 %v3675, 7
    %v3677 = vsub.s32 0, %v3676
    %v3678 = vrot.slane %v3665, %v3677
    %v3679 = vlaneseq
    %v3680 = vshrl.u32 %v3679, 7
    %v3681 = vsub.s32 1, %v3680
    %v3682 = vrot.slane %v3665, %v3681
    %v3683 = vlaneseq
    %v3684 = vshrl.u32 %v3683, 7
    %v3685 = vsub.s32 2, %v3684
    %v3686 = vrot.slane %v3665, %v3685
    %v3687 = vlaneseq
    %v3688 = vshrl.u32 %v3687, 7
    %v3689 = vsub.s32 3, %v3688
    %v3690 = vrot.slane %v3665, %v3689
    %v3695 = vadd.f32 %v3666, %v3678
    %v3696 = vadd.f32 %v3667, %v3682
    %v3697 = vadd.f32 %v3668, %v3686
    %v3698 = vadd.f32 %v3669, %v3690
    %v3699 = vadd.f32 %v3670, %v3678
    %v3700 = vadd.f32 %v3671, %v3682
    %v3701 = vadd.f32 %v3672, %v3686
    %v3702 = vadd.f32 %v3673, %v3690
    %v3707 = vrot.slane %v3695, 2
    %v3708 = vrot.slane %v3696, 2
    %v3709 = vrot.slane %v3697, 2
    %v3710 = vrot.slane %v3698, 2
    %v3715 = vmax.f32 %v3695, %v3707
    %v3716 = vmax.f32 %v3696, %v3708
    %v3717 = vmax.f32 %v3697, %v3709
    %v3718 = vmax.f32 %v3698, %v3710
    %v3719 = vrot.slane %v3695, 6
    %v3720 = vrot.slane %v3696, 6
    %v3721 = vrot.slane %v3697, 6
    %v3722 = vrot.slane %v3698, 6
    %v3727 = vmax.f32 %v3715, %v3719
    %v3728 = vmax.f32 %v3716, %v3720
    %v3729 = vmax.f32 %v3717, %v3721
    %v3730 = vmax.f32 %v3718, %v3722
    %v3731 = vmax.f32 %v3727, %v3699
    %v3732 = vmax.f32 %v3728, %v3700
    %v3733 = vmax.f32 %v3729, %v3701
    %v3734 = vmax.f32 %v3730, %v3702
    %v3735 = vpack.c.bf16 %v3731, %v3731
    %v3736 = vpack.c.bf16 %v3732, %v3732
    %v3737 = vpack.c.bf16 %v3733, %v3733
    %v3738 = vpack.c.bf16 %v3734, %v3734
    %v3739 = vld [vmem:[%s13] sm:$0xf]
    %v3740 = vld [vmem:[%s13 + $0x4] sm:$0xf]
    %v3741 = vld [vmem:[%s13 + $0x8] sm:$0xf]
    %v3742 = vld [vmem:[%s13 + $0xc] sm:$0xf]
    %v3743 = vld [vmem:[%s13 + $0x10] sm:$0xf]
    %v3744 = vld [vmem:[%s13 + $0x14] sm:$0xf]
    %v3745 = vld [vmem:[%s13 + $0x18] sm:$0xf]
    %v3746 = vld [vmem:[%s13 + $0x1c] sm:$0xf]
    %v3747 = vld [vmem:[%s13 + $0x20] sm:$0xf]
    %v3748 = vld [vmem:[%s13 + $0x24] sm:$0xf]
    %v3749 = vld [vmem:[%s13 + $0x28] sm:$0xf]
    %v3750 = vld [vmem:[%s13 + $0x2c] sm:$0xf]
    %v3751 = vld [vmem:[%s13 + $0x30] sm:$0xf]
    %v3752 = vld [vmem:[%s13 + $0x34] sm:$0xf]
    %v3753 = vld [vmem:[%s13 + $0x38] sm:$0xf]
    %v3754 = vld [vmem:[%s13 + $0x3c] sm:$0xf]
    %v3755 = vld [vmem:[%s13 + $0x40] sm:$0xf]
    %v3756 = vld [vmem:[%s13 + $0x44] sm:$0xf]
    %v3757 = vld [vmem:[%s13 + $0x48] sm:$0xf]
    %v3758 = vld [vmem:[%s13 + $0x4c] sm:$0xf]
    %v3759 = vld [vmem:[%s13 + $0x50] sm:$0xf]
    %v3760 = vld [vmem:[%s13 + $0x54] sm:$0xf]
    %v3761 = vld [vmem:[%s13 + $0x58] sm:$0xf]
    %v3762 = vld [vmem:[%s13 + $0x5c] sm:$0xf]
    %v3763 = vld [vmem:[%s13 + $0x60] sm:$0xf]
    %v3764 = vld [vmem:[%s13 + $0x64] sm:$0xf]
    %v3765 = vld [vmem:[%s13 + $0x68] sm:$0xf]
    %v3766 = vld [vmem:[%s13 + $0x6c] sm:$0xf]
    %v3767 = vld [vmem:[%s13 + $0x70] sm:$0xf]
    %v3768 = vld [vmem:[%s13 + $0x74] sm:$0xf]
    %v3769 = vld [vmem:[%s13 + $0x78] sm:$0xf]
    %v3770 = vld [vmem:[%s13 + $0x7c] sm:$0xf]
    %v3771 = vld [vmem:[%s13 + $0x80] sm:$0xf]
    %v3772 = vld [vmem:[%s13 + $0x84] sm:$0xf]
    %v3773 = vld [vmem:[%s13 + $0x88] sm:$0xf]
    %v3774 = vld [vmem:[%s13 + $0x8c] sm:$0xf]
    %v3775 = vld [vmem:[%s13 + $0x90] sm:$0xf]
    %v3776 = vld [vmem:[%s13 + $0x94] sm:$0xf]
    %v3777 = vld [vmem:[%s13 + $0x98] sm:$0xf]
    %v3778 = vld [vmem:[%s13 + $0x9c] sm:$0xf]
    %v3779 = vld [vmem:[%s13 + $0xa0] sm:$0xf]
    %v3780 = vld [vmem:[%s13 + $0xa4] sm:$0xf]
    %v3781 = vld [vmem:[%s13 + $0xa8] sm:$0xf]
    %v3782 = vld [vmem:[%s13 + $0xac] sm:$0xf]
    %v3783 = vld [vmem:[%s13 + $0xb0] sm:$0xf]
    %v3784 = vld [vmem:[%s13 + $0xb4] sm:$0xf]
    %v3785 = vld [vmem:[%s13 + $0xb8] sm:$0xf]
    %v3786 = vld [vmem:[%s13 + $0xbc] sm:$0xf]
    %v3787 = vld [vmem:[%s13 + $0xc0] sm:$0xf]
    %v3788 = vld [vmem:[%s13 + $0xc4] sm:$0xf]
    %v3789 = vld [vmem:[%s13 + $0xc8] sm:$0xf]
    %v3790 = vld [vmem:[%s13 + $0xcc] sm:$0xf]
    %v3791 = vld [vmem:[%s13 + $0xd0] sm:$0xf]
    %v3792 = vld [vmem:[%s13 + $0xd4] sm:$0xf]
    %v3793 = vld [vmem:[%s13 + $0xd8] sm:$0xf]
    %v3794 = vld [vmem:[%s13 + $0xdc] sm:$0xf]
    %v3795 = vld [vmem:[%s13 + $0xe0] sm:$0xf]
    %v3796 = vld [vmem:[%s13 + $0xe4] sm:$0xf]
    %v3797 = vld [vmem:[%s13 + $0xe8] sm:$0xf]
    %v3798 = vld [vmem:[%s13 + $0xec] sm:$0xf]
    %v3799 = vld [vmem:[%s13 + $0xf0] sm:$0xf]
    %v3800 = vld [vmem:[%s13 + $0xf4] sm:$0xf]
    %v3801 = vld [vmem:[%s13 + $0xf8] sm:$0xf]
    %v3802 = vld [vmem:[%s13 + $0xfc] sm:$0xf]
    %v3803 = vld [vmem:[%s14] sm:$0x1]
    %v3805 = vlaneseq
    %v3806 = vshrl.u32 %v3805, 7
    %v3807 = vsub.s32 0, %v3806
    %v3808 = vrot.slane %v3803, %v3807
    %v3874 = vunpack.c.l.b16 %v3739
    %v3875 = vunpack.c.l.b16 %v3740
    %v3876 = vunpack.c.l.b16 %v3741
    %v3877 = vunpack.c.l.b16 %v3742
    %v3878 = vunpack.c.l.b16 %v3743
    %v3879 = vunpack.c.l.b16 %v3744
    %v3880 = vunpack.c.l.b16 %v3745
    %v3881 = vunpack.c.l.b16 %v3746
    %v3882 = vunpack.c.l.b16 %v3747
    %v3883 = vunpack.c.l.b16 %v3748
    %v3884 = vunpack.c.l.b16 %v3749
    %v3885 = vunpack.c.l.b16 %v3750
    %v3886 = vunpack.c.l.b16 %v3751
    %v3887 = vunpack.c.l.b16 %v3752
    %v3888 = vunpack.c.l.b16 %v3753
    %v3889 = vunpack.c.l.b16 %v3754
    %v3890 = vunpack.c.l.b16 %v3755
    %v3891 = vunpack.c.l.b16 %v3756
    %v3892 = vunpack.c.l.b16 %v3757
    %v3893 = vunpack.c.l.b16 %v3758
    %v3894 = vunpack.c.l.b16 %v3759
    %v3895 = vunpack.c.l.b16 %v3760
    %v3896 = vunpack.c.l.b16 %v3761
    %v3897 = vunpack.c.l.b16 %v3762
    %v3898 = vunpack.c.l.b16 %v3763
    %v3899 = vunpack.c.l.b16 %v3764
    %v3900 = vunpack.c.l.b16 %v3765
    %v3901 = vunpack.c.l.b16 %v3766
    %v3902 = vunpack.c.l.b16 %v3767
    %v3903 = vunpack.c.l.b16 %v3768
    %v3904 = vunpack.c.l.b16 %v3769
    %v3905 = vunpack.c.l.b16 %v3770
    %v3906 = vunpack.c.l.b16 %v3771
    %v3907 = vunpack.c.l.b16 %v3772
    %v3908 = vunpack.c.l.b16 %v3773
    %v3909 = vunpack.c.l.b16 %v3774
    %v3910 = vunpack.c.l.b16 %v3775
    %v3911 = vunpack.c.l.b16 %v3776
    %v3912 = vunpack.c.l.b16 %v3777
    %v3913 = vunpack.c.l.b16 %v3778
    %v3914 = vunpack.c.l.b16 %v3779
    %v3915 = vunpack.c.l.b16 %v3780
    %v3916 = vunpack.c.l.b16 %v3781
    %v3917 = vunpack.c.l.b16 %v3782
    %v3918 = vunpack.c.l.b16 %v3783
    %v3919 = vunpack.c.l.b16 %v3784
    %v3920 = vunpack.c.l.b16 %v3785
    %v3921 = vunpack.c.l.b16 %v3786
    %v3922 = vunpack.c.l.b16 %v3787
    %v3923 = vunpack.c.l.b16 %v3788
    %v3924 = vunpack.c.l.b16 %v3789
    %v3925 = vunpack.c.l.b16 %v3790
    %v3926 = vunpack.c.l.b16 %v3791
    %v3927 = vunpack.c.l.b16 %v3792
    %v3928 = vunpack.c.l.b16 %v3793
    %v3929 = vunpack.c.l.b16 %v3794
    %v3930 = vunpack.c.l.b16 %v3795
    %v3931 = vunpack.c.l.b16 %v3796
    %v3932 = vunpack.c.l.b16 %v3797
    %v3933 = vunpack.c.l.b16 %v3798
    %v3934 = vunpack.c.l.b16 %v3799
    %v3935 = vunpack.c.l.b16 %v3800
    %v3936 = vunpack.c.l.b16 %v3801
    %v3937 = vunpack.c.l.b16 %v3802
    %v3938 = vpack.c.b16 %v3875, %v3874
    %v3939 = vpack.c.b16 %v3877, %v3876
    %v3940 = vpack.c.b16 %v3879, %v3878
    %v3941 = vpack.c.b16 %v3881, %v3880
    %v3942 = vpack.c.b16 %v3883, %v3882
    %v3943 = vpack.c.b16 %v3885, %v3884
    %v3944 = vpack.c.b16 %v3887, %v3886
    %v3945 = vpack.c.b16 %v3889, %v3888
    %v3946 = vpack.c.b16 %v3891, %v3890
    %v3947 = vpack.c.b16 %v3893, %v3892
    %v3948 = vpack.c.b16 %v3895, %v3894
    %v3949 = vpack.c.b16 %v3897, %v3896
    %v3950 = vpack.c.b16 %v3899, %v3898
    %v3951 = vpack.c.b16 %v3901, %v3900
    %v3952 = vpack.c.b16 %v3903, %v3902
    %v3953 = vpack.c.b16 %v3905, %v3904
    %v3954 = vpack.c.b16 %v3907, %v3906
    %v3955 = vpack.c.b16 %v3909, %v3908
    %v3956 = vpack.c.b16 %v3911, %v3910
    %v3957 = vpack.c.b16 %v3913, %v3912
    %v3958 = vpack.c.b16 %v3915, %v3914
    %v3959 = vpack.c.b16 %v3917, %v3916
    %v3960 = vpack.c.b16 %v3919, %v3918
    %v3961 = vpack.c.b16 %v3921, %v3920
    %v3962 = vpack.c.b16 %v3923, %v3922
    %v3963 = vpack.c.b16 %v3925, %v3924
    %v3964 = vpack.c.b16 %v3927, %v3926
    %v3965 = vpack.c.b16 %v3929, %v3928
    %v3966 = vpack.c.b16 %v3931, %v3930
    %v3967 = vpack.c.b16 %v3933, %v3932
    %v3968 = vpack.c.b16 %v3935, %v3934
    %v3969 = vpack.c.b16 %v3937, %v3936
    %4002 = vmatprep.subr.bf16.mxu0 0
    %4003 = vmatpush1.bf16.msra.mxu0 %v3938
    %4004 = vmatprep.subr.bf16.mxu0 0
    %4005 = vmatpush1.bf16.msra.mxu0 %v3939
    %4006 = vmatprep.subr.bf16.mxu0 0
    %4007 = vmatpush1.bf16.msra.mxu0 %v3940
    %4008 = vmatprep.subr.bf16.mxu0 0
    %4009 = vmatpush1.bf16.msra.mxu0 %v3941
    %4010 = vmatprep.subr.bf16.mxu0 0
    %4011 = vmatpush1.bf16.msra.mxu0 %v3942
    %4012 = vmatprep.subr.bf16.mxu0 0
    %4013 = vmatpush1.bf16.msra.mxu0 %v3943
    %4014 = vmatprep.subr.bf16.mxu0 0
    %4015 = vmatpush1.bf16.msra.mxu0 %v3944
    %4016 = vmatprep.subr.bf16.mxu0 0
    %4017 = vmatpush1.bf16.msra.mxu0 %v3945
    %4018 = vmatprep.subr.bf16.mxu0 0
    %4019 = vmatpush1.bf16.msra.mxu0 %v3946
    %4020 = vmatprep.subr.bf16.mxu0 0
    %4021 = vmatpush1.bf16.msra.mxu0 %v3947
    %4022 = vmatprep.subr.bf16.mxu0 0
    %4023 = vmatpush1.bf16.msra.mxu0 %v3948
    %4024 = vmatprep.subr.bf16.mxu0 0
    %4025 = vmatpush1.bf16.msra.mxu0 %v3949
    %4026 = vmatprep.subr.bf16.mxu0 0
    %4027 = vmatpush1.bf16.msra.mxu0 %v3950
    %4028 = vmatprep.subr.bf16.mxu0 0
    %4029 = vmatpush1.bf16.msra.mxu0 %v3951
    %4030 = vmatprep.subr.bf16.mxu0 0
    %4031 = vmatpush1.bf16.msra.mxu0 %v3952
    %4032 = vmatprep.subr.bf16.mxu0 0
    %4033 = vmatpush1.bf16.msra.mxu0 %v3953
    %4034 = vmatprep.mubr.bf16.mxu0 %v3736
    %4035 = vmatmul.mubr.bf16.gmra.mrb[0].mxu0 %v3735
    %v4036 = vpop.f32.mrb[0].mxu0
    %v4037 = vadd.f32 %v3808, %v4036
    %v4038 = vpop.f32.mrb[0].mxu0
    %v4039 = vpop.f32.mrb[0].mxu0
    %v4040 = vpop.f32.mrb[0].mxu0
    %4041 = vdwg.mxu0
    %4042 = vmatprep.subr.bf16.mxu0 0
    %4043 = vmatpush1.bf16.msra.mxu0 %v3954
    %4044 = vmatprep.subr.bf16.mxu0 0
    %4045 = vmatpush1.bf16.msra.mxu0 %v3955
    %4046 = vmatprep.subr.bf16.mxu0 0
    %4047 = vmatpush1.bf16.msra.mxu0 %v3956
    %4048 = vmatprep.subr.bf16.mxu0 0
    %4049 = vmatpush1.bf16.msra.mxu0 %v3957
    %4050 = vmatprep.subr.bf16.mxu0 0
    %4051 = vmatpush1.bf16.msra.mxu0 %v3958
    %4052 = vmatprep.subr.bf16.mxu0 0
    %4053 = vmatpush1.bf16.msra.mxu0 %v3959
    %4054 = vmatprep.subr.bf16.mxu0 0
    %4055 = vmatpush1.bf16.msra.mxu0 %v3960
    %4056 = vmatprep.subr.bf16.mxu0 0
    %4057 = vmatpush1.bf16.msra.mxu0 %v3961
    %4058 = vmatprep.subr.bf16.mxu0 0
    %4059 = vmatpush1.bf16.msra.mxu0 %v3962
    %4060 = vmatprep.subr.bf16.mxu0 0
    %4061 = vmatpush1.bf16.msra.mxu0 %v3963
    %4062 = vmatprep.subr.bf16.mxu0 0
    %4063 = vmatpush1.bf16.msra.mxu0 %v3964
    %4064 = vmatprep.subr.bf16.mxu0 0
    %4065 = vmatpush1.bf16.msra.mxu0 %v3965
    %4066 = vmatprep.subr.bf16.mxu0 0
    %4067 = vmatpush1.bf16.msra.mxu0 %v3966
    %4068 = vmatprep.subr.bf16.mxu0 0
    %4069 = vmatpush1.bf16.msra.mxu0 %v3967
    %4070 = vmatprep.subr.bf16.mxu0 0
    %4071 = vmatpush1.bf16.msra.mxu0 %v3968
    %4072 = vmatprep.subr.bf16.mxu0 0
    %4073 = vmatpush1.bf16.msra.mxu0 %v3969
    %4074 = vmatprep.mubr.bf16.mxu0 %v3738
    %4075 = vmatmul.mubr.bf16.gmra.mrb[0].mxu0 %v3737
    %v4076 = vpop.f32.mrb[0].mxu0
    %v4077 = vadd.f32 %v4037, %v4076
    %v4078 = vpop.f32.mrb[0].mxu0
    %v4079 = vpop.f32.mrb[0].mxu0
    %v4080 = vpop.f32.mrb[0].mxu0
    %4081 = vdwg.mxu0
    %4082 = vst [vmem:[#allocation2] sm:$0x3] %v4077
    // Predicated region
    $region62: #{cnn_basic_forward.1} parent=1 // pred_check
      _
    $region63: #{cnn_basic_forward.1} parent=1 // pred_check_branch
      %4084 = sbr.rel (0) target = $region65
    $region64: #{cnn_basic_forward.1} parent=1 // pred_region
      %s4086 = ssub.s32 32, 32
      %4087 = vsyncadd [#allocation3], %s4086
      %s4089 = sshll.u32 [#allocation2], 4
      %s4090 = int_to_ptr.vmem [resolvable:$true] %s4089
      %4092 = dma.vmem_to_hbm [thread:$0]  %s4090, 32, %s15, [#allocation3]
    $region65: #{cnn_basic_forward.1} parent=1 // pred_fallthru
      _
    // Predicated region
    $region66: #{cnn_basic_forward.1} parent=1 // pred_check
      _
    $region67: #{cnn_basic_forward.1} parent=1 // pred_check_branch
      %4094 = sbr.rel (0) target = $region69
    $region68: #{cnn_basic_forward.1} parent=1 // pred_region
      %4095 = dma.done [#allocation3], 32
    $region69: #{cnn_basic_forward.1} parent=1 // pred_fallthru
      _
    %4096 = vsyncpa [#allocation3], 1

</llo_original>
